<compile_context>
chip_gen: v6e
topology: v6e:2x2x1
jax: 0.10.0
libtpu: 0.0.40
codegen_flags: <defaults>
</compile_context>

<pallas_src>
import functools

import numpy as np
import jax
import jax.numpy as jnp
from jax.experimental import pallas as pl
from jax.experimental.pallas import tpu as pltpu

OFF = 128  # lane-aligned offset of the real feature data inside the padded plane


# ----------------------------------------------------------------------------
# Fused Pallas kernel: conv1 -> conv2 -> conv3 -> policy/value heads (per batch)
# ----------------------------------------------------------------------------
def fused_cnn_kernel(pos_ref, x_ref, w_ref, b_ref, mask_ref, hw_ref, hb_ref,
                     out_ref, plane_ref, xstk_ref, *, H, W, hidden, cin):
    HW = H * W

    # Zero the padded plane every grid step (safe under megacore "parallel"
    # sharding and across batch iterations).  The zero halos provide the
    # vertical conv padding; the zero rows [cin:hidden] of the center provide
    # the channel padding for layer 1.
    plane_ref[...] = jnp.zeros_like(plane_ref)
    # Layer-1 input: raw observation channels; remaining rows stay zero.
    plane_ref[pl.ds(0, cin), pl.ds(OFF, HW)] = x_ref[0]

    cur = None
    for layer in range(3):                             # unrolled: 3 conv layers
        if layer > 0:
            # Place this layer's input in the middle of the plane (aligned store).
            plane_ref[:, pl.ds(OFF, HW)] = cur

        # Stage the 9 shifted copies into the stacked-K operand (aligned stores).
        for k in range(9):                             # unrolled: 3x3 taps
            dy, dx = divmod(k, 3)
            start = OFF + (dy - 1) * W + (dx - 1)
            xk = plane_ref[:, pl.ds(start, HW)]        # shifted view; OOB rows -> 0
            if dx == 0:                                # left tap: col 0 has no left nbr
                xk = xk * mask_ref[0]
            elif dx == 2:                              # right tap: col W-1 has no right nbr
                xk = xk * mask_ref[1]
            xstk_ref[pl.ds(k * hidden, hidden), :] = xk

        # ONE fused matmul per layer: (hidden, 9*hidden) @ (9*hidden, HW).
        acc = jnp.dot(w_ref[layer], xstk_ref[...],
                      preferred_element_type=jnp.float32)
        cur = jnp.maximum(acc + b_ref[layer], 0.0)     # bias + ReLU, stays in VMEM/regs

    # Heads: fused (policy | value) matmul + one-hot select of the agent column.
    idx = pos_ref[0] * W + pos_ref[1]                  # scalars from SMEM
    col_ids = jax.lax.broadcasted_iota(jnp.int32, (1, HW), 1)
    onehot = (col_ids == idx).astype(jnp.float32)                          # (1, HW)
    hvals = jnp.dot(hw_ref[...], cur, preferred_element_type=jnp.float32)  # (8, HW)
    out_ref[0] = jnp.sum(hvals * onehot, axis=1, keepdims=True) + hb_ref[...]


# ----------------------------------------------------------------------------
# Wrappers
# ----------------------------------------------------------------------------
def pack_params(params):
    """One-time repack of PyTorch-layout params into kernel-friendly arrays."""
    hidden = params["conv1_w"].shape[0]

    def prep_conv_w(w):                                # (Cout, Cin, 3, 3)
        cout, cin, kh, kw = w.shape
        wk = jnp.transpose(w, (2, 3, 0, 1)).reshape(kh * kw, cout, cin)  # (9, Cout, Cin)
        wk = jnp.pad(wk, ((0, 0), (0, 0), (0, hidden - cin)))            # pad Cin -> hidden
        # Stacked-K layout: column block k holds tap k's (Cout, hidden) weights.
        return jnp.transpose(wk, (1, 0, 2)).reshape(cout, kh * kw * hidden)

    w_all = jnp.stack([prep_conv_w(params["conv1_w"]),
                       prep_conv_w(params["conv2_w"]),
                       prep_conv_w(params["conv3_w"])])          # (3, hidden, 9*hidden)
    b_all = jnp.stack([params["conv1_b"], params["conv2_b"],
                       params["conv3_b"]])[..., None]            # (3, hidden, 1)

    head_w = (jnp.zeros((8, hidden), jnp.float32)
              .at[:4].set(params["policy_w"])                    # rows 0..3: policy
              .at[4].set(params["value_w"][0]))                  # row 4   : value
    head_b = (jnp.zeros((8, 1), jnp.float32)
              .at[:4, 0].set(params["policy_b"])
              .at[4, 0].set(params["value_b"][0]))
    return {"w_all": w_all, "b_all": b_all, "head_w": head_w, "head_b": head_b}


@jax.jit
def cnn_solver_policy_forward(packed, x_nchw, agent_pos):
    """Mirrors CNNSolverPolicy.forward (head uses batch index 0, as in torch)."""
    B, cin, H, W = x_nchw.shape
    HW = H * W
    hidden = packed["w_all"].shape[1]
    assert W + 1 <= OFF and hidden % 8 == 0

    # Raw channel-major, spatially flattened input (channel padding done in-kernel).
    x_cm = x_nchw.reshape(B, cin, HW).astype(jnp.float32)

    # Column-edge masks for the horizontal taps (compile-time constants).
    col = np.arange(HW) % W
    masks = jnp.asarray(np.stack([(col > 0), (col < W - 1)])
                        .astype(np.float32).reshape(2, 1, HW))

    out = pl.pallas_call(
        functools.partial(fused_cnn_kernel, H=H, W=W, hidden=hidden, cin=cin),
        grid=(B,),
        out_shape=jax.ShapeDtypeStruct((B, 8, 1), jnp.float32),
        in_specs=[
            pl.BlockSpec(memory_space=pltpu.MemorySpace.SMEM),            # agent_pos (2,)
            pl.BlockSpec((1, cin, HW), lambda b: (b, 0, 0)),              # x block per batch
            pl.BlockSpec(memory_space=pltpu.MemorySpace.VMEM),            # conv weights (stacked-K)
            pl.BlockSpec(memory_space=pltpu.MemorySpace.VMEM),            # conv biases
            pl.BlockSpec(memory_space=pltpu.MemorySpace.VMEM),            # edge masks
            pl.BlockSpec(memory_space=pltpu.MemorySpace.VMEM),            # head weights
            pl.BlockSpec(memory_space=pltpu.MemorySpace.VMEM),            # head biases
        ],
        out_specs=pl.BlockSpec((1, 8, 1), lambda b: (b, 0, 0)),
        scratch_shapes=[
            pltpu.VMEM((hidden, 2 * OFF + HW), jnp.float32),              # zero-haloed plane
            pltpu.VMEM((9 * hidden, HW), jnp.float32),                    # stacked-K operand
        ],
        compiler_params=pltpu.CompilerParams(
            dimension_semantics=("parallel",)),                           # 2 TCs on v7x
    )(agent_pos.astype(jnp.int32), x_cm, packed["w_all"], packed["b_all"],
      masks, packed["head_w"], packed["head_b"])

    # torch semantics: agent feature comes from batch 0 only.
    # logits: (4,)  (torch .squeeze(0) is a no-op on (4,));  value: () scalar.
    return out[0, :4, 0], out[0, 4, 0]


# ----------------------------------------------------------------------------
# Deterministic parameter init (synthetic, PyTorch-like uniform fan-in init)
# ----------------------------------------------------------------------------
def init_params(key, input_dim=4, hidden_dim=32):
    keys = jax.random.split(key, 10)

    def u(k, shape, fan_in):
        bound = 1.0 / float(fan_in) ** 0.5
        return jax.random.uniform(k, shape, jnp.float32, -bound, bound)

    return {
        "conv1_w": u(keys[0], (hidden_dim, input_dim, 3, 3), input_dim * 9),
        "conv1_b": u(keys[1], (hidden_dim,), input_dim * 9),
        "conv2_w": u(keys[2], (hidden_dim, hidden_dim, 3, 3), hidden_dim * 9),
        "conv2_b": u(keys[3], (hidden_dim,), hidden_dim * 9),
        "conv3_w": u(keys[4], (hidden_dim, hidden_dim, 3, 3), hidden_dim * 9),
        "conv3_b": u(keys[5], (hidden_dim,), hidden_dim * 9),
        "policy_w": u(keys[6], (4, hidden_dim), hidden_dim),
        "policy_b": u(keys[7], (4,), hidden_dim),
        "value_w": u(keys[8], (1, hidden_dim), hidden_dim),
        "value_b": u(keys[9], (1,), hidden_dim),
    }


# ----------------------------------------------------------------------------
# Pure-JAX reference (independent of the Pallas path) for a correctness check
# ----------------------------------------------------------------------------
def reference_forward(params, x_nchw, agent_pos):
    h = x_nchw.astype(jnp.float32)
    for i in (1, 2, 3):
        h = jax.lax.conv_general_dilated(
            h, params[f"conv{i}_w"], window_strides=(1, 1),
            padding=((1, 1), (1, 1)),
            dimension_numbers=("NCHW", "OIHW", "NCHW"))
        h = jax.nn.relu(h + params[f"conv{i}_b"][None, :, None, None])
    r, c = int(agent_pos[0]), int(agent_pos[1])
    feat = h[0, :, r, c]                                   # (hidden,)
    logits = params["policy_w"] @ feat + params["policy_b"]
    value = params["value_w"][0] @ feat + params["value_b"][0]
    return logits, value


# ----------------------------------------------------------------------------
if __name__ == "__main__":
    key = jax.random.PRNGKey(0)
    k_params, k_x = jax.random.split(key)

    batch, input_dim, hidden_dim, H, W = 2, 4, 32, 16, 16
    params = init_params(k_params, input_dim=input_dim, hidden_dim=hidden_dim)
    packed = pack_params(params)

    x = jax.random.normal(k_x, (batch, input_dim, H, W), dtype=jnp.float32)  # NCHW
    agent_pos = jnp.array([3, 5], dtype=jnp.int32)                           # (r, c)

    logits, value = cnn_solver_policy_forward(packed, x, agent_pos)
    logits, value = jax.block_until_ready((logits, value))

    ref_logits, ref_value = reference_forward(params, x, agent_pos)
    assert logits.shape == (4,) and value.shape == ()
    assert jnp.allclose(logits, ref_logits, rtol=1e-4, atol=1e-4)
    assert jnp.allclose(value, ref_value, rtol=1e-4, atol=1e-4)

    print("KERNEL_OK")
</pallas_src>

<mosaic_0001>
module attributes {stable_mosaic.version = 11 : i64} {
  func.func @fused_cnn_kernel(%arg0: i32, %arg1: memref<2xi32, #tpu.memory_space<smem>>, %arg2: memref<1x4x256xf32, #tpu.memory_space<vmem>>, %arg3: memref<3x32x288xf32, #tpu.memory_space<vmem>>, %arg4: memref<3x32x1xf32, #tpu.memory_space<vmem>>, %arg5: memref<2x1x256xf32, #tpu.memory_space<vmem>>, %arg6: memref<8x32xf32, #tpu.memory_space<vmem>>, %arg7: memref<8x1xf32, #tpu.memory_space<vmem>>, %arg8: memref<1x8x1xf32, #tpu.memory_space<vmem>>, %arg9: memref<32x512xf32, #tpu.memory_space<vmem>>, %arg10: memref<288x256xf32, #tpu.memory_space<vmem>>) attributes {dimension_semantics = [#tpu.dimension_semantics<parallel>], iteration_bounds = array<i64: 2>, scalar_prefetch = 0 : i64, scratch_operands = 2 : i64, tpu.core_type = #tpu.core_type<tc>, window_params = [{transform_indices = @transform_0, window_bounds = array<i64: 2>}, {transform_indices = @transform_1, window_bounds = array<i64: 1, 4, 256>}, {pipeline_mode = #tpu.pipeline_mode<synchronous>, transform_indices = @transform_2, window_bounds = array<i64: 3, 32, 288>}, {pipeline_mode = #tpu.pipeline_mode<synchronous>, transform_indices = @transform_3, window_bounds = array<i64: 3, 32, 1>}, {pipeline_mode = #tpu.pipeline_mode<synchronous>, transform_indices = @transform_4, window_bounds = array<i64: 2, 1, 256>}, {pipeline_mode = #tpu.pipeline_mode<synchronous>, transform_indices = @transform_5, window_bounds = array<i64: 8, 32>}, {pipeline_mode = #tpu.pipeline_mode<synchronous>, transform_indices = @transform_6, window_bounds = array<i64: 8, 1>}, {transform_indices = @transform_7, window_bounds = array<i64: 1, 8, 1>}]} {
    %cst = arith.constant 0.000000e+00 : f32
    %0 = vector.broadcast %cst : f32 to vector<32x512xf32>
    %c0 = arith.constant 0 : index
    %c0_0 = arith.constant 0 : index
    %1 = vector.load %arg9[%c0, %c0_0] : memref<32x512xf32, #tpu.memory_space<vmem>>, vector<32x512xf32>
    tpu.vector_store %arg9[%c0, %c0_0], %0 {strides = array<i32>} : memref<32x512xf32, #tpu.memory_space<vmem>>, vector<32x512xf32>,
    %c0_1 = arith.constant 0 : index
    %c0_2 = arith.constant 0 : index
    %c0_3 = arith.constant 0 : index
    %2 = vector.load %arg2[%c0_1, %c0_2, %c0_3] : memref<1x4x256xf32, #tpu.memory_space<vmem>>, vector<1x4x256xf32>
    %3 = vector.shape_cast %2 : vector<1x4x256xf32> to vector<4x256xf32>
    %c0_4 = arith.constant 0 : index
    %c128 = arith.constant 128 : index
    %4 = vector.load %arg9[%c0_4, %c128] : memref<32x512xf32, #tpu.memory_space<vmem>>, vector<4x256xf32>
    tpu.vector_store %arg9[%c0_4, %c128], %3 {strides = array<i32>} : memref<32x512xf32, #tpu.memory_space<vmem>>, vector<4x256xf32>,
    %c0_5 = arith.constant 0 : index
    %c111 = arith.constant 111 : index
    %5 = vector.load %arg9[%c0_5, %c111] : memref<32x512xf32, #tpu.memory_space<vmem>>, vector<32x256xf32>
    %c0_6 = arith.constant 0 : index
    %c0_7 = arith.constant 0 : index
    %c0_8 = arith.constant 0 : index
    %6 = vector.load %arg5[%c0_6, %c0_7, %c0_8] : memref<2x1x256xf32, #tpu.memory_space<vmem>>, vector<1x1x256xf32>
    %7 = vector.shape_cast %6 : vector<1x1x256xf32> to vector<1x256xf32>
    %8 = vector.broadcast %7 : vector<1x256xf32> to vector<32x256xf32>
    %9 = arith.mulf %5, %8 : vector<32x256xf32>
    %c0_9 = arith.constant 0 : index
    %c0_10 = arith.constant 0 : index
    %10 = vector.load %arg10[%c0_9, %c0_10] : memref<288x256xf32, #tpu.memory_space<vmem>>, vector<32x256xf32>
    tpu.vector_store %arg10[%c0_9, %c0_10], %9 {strides = array<i32>} : memref<288x256xf32, #tpu.memory_space<vmem>>, vector<32x256xf32>,
    %c0_11 = arith.constant 0 : index
    %c112 = arith.constant 112 : index
    %11 = vector.load %arg9[%c0_11, %c112] : memref<32x512xf32, #tpu.memory_space<vmem>>, vector<32x256xf32>
    %c32 = arith.constant 32 : index
    %c0_12 = arith.constant 0 : index
    %12 = vector.load %arg10[%c32, %c0_12] : memref<288x256xf32, #tpu.memory_space<vmem>>, vector<32x256xf32>
    tpu.vector_store %arg10[%c32, %c0_12], %11 {strides = array<i32>} : memref<288x256xf32, #tpu.memory_space<vmem>>, vector<32x256xf32>,
    %c0_13 = arith.constant 0 : index
    %c113 = arith.constant 113 : index
    %13 = vector.load %arg9[%c0_13, %c113] : memref<32x512xf32, #tpu.memory_space<vmem>>, vector<32x256xf32>
    %c1 = arith.constant 1 : index
    %c0_14 = arith.constant 0 : index
    %c0_15 = arith.constant 0 : index
    %14 = vector.load %arg5[%c1, %c0_14, %c0_15] : memref<2x1x256xf32, #tpu.memory_space<vmem>>, vector<1x1x256xf32>
    %15 = vector.shape_cast %14 : vector<1x1x256xf32> to vector<1x256xf32>
    %16 = vector.broadcast %15 : vector<1x256xf32> to vector<32x256xf32>
    %17 = arith.mulf %13, %16 : vector<32x256xf32>
    %c64 = arith.constant 64 : index
    %c0_16 = arith.constant 0 : index
    %18 = vector.load %arg10[%c64, %c0_16] : memref<288x256xf32, #tpu.memory_space<vmem>>, vector<32x256xf32>
    tpu.vector_store %arg10[%c64, %c0_16], %17 {strides = array<i32>} : memref<288x256xf32, #tpu.memory_space<vmem>>, vector<32x256xf32>,
    %c0_17 = arith.constant 0 : index
    %c127 = arith.constant 127 : index
    %19 = vector.load %arg9[%c0_17, %c127] : memref<32x512xf32, #tpu.memory_space<vmem>>, vector<32x256xf32>
    %c0_18 = arith.constant 0 : index
    %c0_19 = arith.constant 0 : index
    %c0_20 = arith.constant 0 : index
    %20 = vector.load %arg5[%c0_18, %c0_19, %c0_20] : memref<2x1x256xf32, #tpu.memory_space<vmem>>, vector<1x1x256xf32>
    %21 = vector.shape_cast %20 : vector<1x1x256xf32> to vector<1x256xf32>
    %22 = vector.broadcast %21 : vector<1x256xf32> to vector<32x256xf32>
    %23 = arith.mulf %19, %22 : vector<32x256xf32>
    %c96 = arith.constant 96 : index
    %c0_21 = arith.constant 0 : index
    %24 = vector.load %arg10[%c96, %c0_21] : memref<288x256xf32, #tpu.memory_space<vmem>>, vector<32x256xf32>
    tpu.vector_store %arg10[%c96, %c0_21], %23 {strides = array<i32>} : memref<288x256xf32, #tpu.memory_space<vmem>>, vector<32x256xf32>,
    %c0_22 = arith.constant 0 : index
    %c128_23 = arith.constant 128 : index
    %25 = vector.load %arg9[%c0_22, %c128_23] : memref<32x512xf32, #tpu.memory_space<vmem>>, vector<32x256xf32>
    %c128_24 = arith.constant 128 : index
    %c0_25 = arith.constant 0 : index
    %26 = vector.load %arg10[%c128_24, %c0_25] : memref<288x256xf32, #tpu.memory_space<vmem>>, vector<32x256xf32>
    tpu.vector_store %arg10[%c128_24, %c0_25], %25 {strides = array<i32>} : memref<288x256xf32, #tpu.memory_space<vmem>>, vector<32x256xf32>,
    %c0_26 = arith.constant 0 : index
    %c129 = arith.constant 129 : index
    %27 = vector.load %arg9[%c0_26, %c129] : memref<32x512xf32, #tpu.memory_space<vmem>>, vector<32x256xf32>
    %c1_27 = arith.constant 1 : index
    %c0_28 = arith.constant 0 : index
    %c0_29 = arith.constant 0 : index
    %28 = vector.load %arg5[%c1_27, %c0_28, %c0_29] : memref<2x1x256xf32, #tpu.memory_space<vmem>>, vector<1x1x256xf32>
    %29 = vector.shape_cast %28 : vector<1x1x256xf32> to vector<1x256xf32>
    %30 = vector.broadcast %29 : vector<1x256xf32> to vector<32x256xf32>
    %31 = arith.mulf %27, %30 : vector<32x256xf32>
    %c160 = arith.constant 160 : index
    %c0_30 = arith.constant 0 : index
    %32 = vector.load %arg10[%c160, %c0_30] : memref<288x256xf32, #tpu.memory_space<vmem>>, vector<32x256xf32>
    tpu.vector_store %arg10[%c160, %c0_30], %31 {strides = array<i32>} : memref<288x256xf32, #tpu.memory_space<vmem>>, vector<32x256xf32>,
    %c0_31 = arith.constant 0 : index
    %c143 = arith.constant 143 : index
    %33 = vector.load %arg9[%c0_31, %c143] : memref<32x512xf32, #tpu.memory_space<vmem>>, vector<32x256xf32>
    %c0_32 = arith.constant 0 : index
    %c0_33 = arith.constant 0 : index
    %c0_34 = arith.constant 0 : index
    %34 = vector.load %arg5[%c0_32, %c0_33, %c0_34] : memref<2x1x256xf32, #tpu.memory_space<vmem>>, vector<1x1x256xf32>
    %35 = vector.shape_cast %34 : vector<1x1x256xf32> to vector<1x256xf32>
    %36 = vector.broadcast %35 : vector<1x256xf32> to vector<32x256xf32>
    %37 = arith.mulf %33, %36 : vector<32x256xf32>
    %c192 = arith.constant 192 : index
    %c0_35 = arith.constant 0 : index
    %38 = vector.load %arg10[%c192, %c0_35] : memref<288x256xf32, #tpu.memory_space<vmem>>, vector<32x256xf32>
    tpu.vector_store %arg10[%c192, %c0_35], %37 {strides = array<i32>} : memref<288x256xf32, #tpu.memory_space<vmem>>, vector<32x256xf32>,
    %c0_36 = arith.constant 0 : index
    %c144 = arith.constant 144 : index
    %39 = vector.load %arg9[%c0_36, %c144] : memref<32x512xf32, #tpu.memory_space<vmem>>, vector<32x256xf32>
    %c224 = arith.constant 224 : index
    %c0_37 = arith.constant 0 : index
    %40 = vector.load %arg10[%c224, %c0_37] : memref<288x256xf32, #tpu.memory_space<vmem>>, vector<32x256xf32>
    tpu.vector_store %arg10[%c224, %c0_37], %39 {strides = array<i32>} : memref<288x256xf32, #tpu.memory_space<vmem>>, vector<32x256xf32>,
    %c0_38 = arith.constant 0 : index
    %c145 = arith.constant 145 : index
    %41 = vector.load %arg9[%c0_38, %c145] : memref<32x512xf32, #tpu.memory_space<vmem>>, vector<32x256xf32>
    %c1_39 = arith.constant 1 : index
    %c0_40 = arith.constant 0 : index
    %c0_41 = arith.constant 0 : index
    %42 = vector.load %arg5[%c1_39, %c0_40, %c0_41] : memref<2x1x256xf32, #tpu.memory_space<vmem>>, vector<1x1x256xf32>
    %43 = vector.shape_cast %42 : vector<1x1x256xf32> to vector<1x256xf32>
    %44 = vector.broadcast %43 : vector<1x256xf32> to vector<32x256xf32>
    %45 = arith.mulf %41, %44 : vector<32x256xf32>
    %c256 = arith.constant 256 : index
    %c0_42 = arith.constant 0 : index
    %46 = vector.load %arg10[%c256, %c0_42] : memref<288x256xf32, #tpu.memory_space<vmem>>, vector<32x256xf32>
    tpu.vector_store %arg10[%c256, %c0_42], %45 {strides = array<i32>} : memref<288x256xf32, #tpu.memory_space<vmem>>, vector<32x256xf32>,
    %c0_43 = arith.constant 0 : index
    %c0_44 = arith.constant 0 : index
    %c0_45 = arith.constant 0 : index
    %47 = vector.load %arg3[%c0_43, %c0_44, %c0_45] : memref<3x32x288xf32, #tpu.memory_space<vmem>>, vector<1x32x288xf32>
    %48 = vector.shape_cast %47 : vector<1x32x288xf32> to vector<32x288xf32>
    %c0_46 = arith.constant 0 : index
    %c0_47 = arith.constant 0 : index
    %49 = vector.load %arg10[%c0_46, %c0_47] : memref<288x256xf32, #tpu.memory_space<vmem>>, vector<288x256xf32>
    %cst_48 = arith.constant dense<0.000000e+00> : vector<32x256xf32>
    %50 = tpu.matmul %48, %49, %cst_48 {dimension_numbers = #tpu.dot_dimension_numbers<[1], [0], [0], [1], [0, 0, 1, 1], [], []>} : vector<32x288xf32>, vector<288x256xf32>, vector<32x256xf32> -> vector<32x256xf32>
    %c0_49 = arith.constant 0 : index
    %c0_50 = arith.constant 0 : index
    %c0_51 = arith.constant 0 : index
    %51 = vector.load %arg4[%c0_49, %c0_50, %c0_51] : memref<3x32x1xf32, #tpu.memory_space<vmem>>, vector<1x32x1xf32>
    %52 = vector.shape_cast %51 : vector<1x32x1xf32> to vector<32x1xf32>
    %53 = vector.broadcast %52 : vector<32x1xf32> to vector<32x256xf32>
    %54 = arith.addf %50, %53 : vector<32x256xf32>
    %cst_52 = arith.constant 0.000000e+00 : f32
    %55 = vector.broadcast %cst_52 : f32 to vector<32x256xf32>
    %56 = arith.maximumf %54, %55 : vector<32x256xf32>
    %c0_53 = arith.constant 0 : index
    %c128_54 = arith.constant 128 : index
    %57 = vector.load %arg9[%c0_53, %c128_54] : memref<32x512xf32, #tpu.memory_space<vmem>>, vector<32x256xf32>
    tpu.vector_store %arg9[%c0_53, %c128_54], %56 {strides = array<i32>} : memref<32x512xf32, #tpu.memory_space<vmem>>, vector<32x256xf32>,
    %c0_55 = arith.constant 0 : index
    %c111_56 = arith.constant 111 : index
    %58 = vector.load %arg9[%c0_55, %c111_56] : memref<32x512xf32, #tpu.memory_space<vmem>>, vector<32x256xf32>
    %c0_57 = arith.constant 0 : index
    %c0_58 = arith.constant 0 : index
    %c0_59 = arith.constant 0 : index
    %59 = vector.load %arg5[%c0_57, %c0_58, %c0_59] : memref<2x1x256xf32, #tpu.memory_space<vmem>>, vector<1x1x256xf32>
    %60 = vector.shape_cast %59 : vector<1x1x256xf32> to vector<1x256xf32>
    %61 = vector.broadcast %60 : vector<1x256xf32> to vector<32x256xf32>
    %62 = arith.mulf %58, %61 : vector<32x256xf32>
    %c0_60 = arith.constant 0 : index
    %c0_61 = arith.constant 0 : index
    %63 = vector.load %arg10[%c0_60, %c0_61] : memref<288x256xf32, #tpu.memory_space<vmem>>, vector<32x256xf32>
    tpu.vector_store %arg10[%c0_60, %c0_61], %62 {strides = array<i32>} : memref<288x256xf32, #tpu.memory_space<vmem>>, vector<32x256xf32>,
    %c0_62 = arith.constant 0 : index
    %c112_63 = arith.constant 112 : index
    %64 = vector.load %arg9[%c0_62, %c112_63] : memref<32x512xf32, #tpu.memory_space<vmem>>, vector<32x256xf32>
    %c32_64 = arith.constant 32 : index
    %c0_65 = arith.constant 0 : index
    %65 = vector.load %arg10[%c32_64, %c0_65] : memref<288x256xf32, #tpu.memory_space<vmem>>, vector<32x256xf32>
    tpu.vector_store %arg10[%c32_64, %c0_65], %64 {strides = array<i32>} : memref<288x256xf32, #tpu.memory_space<vmem>>, vector<32x256xf32>,
    %c0_66 = arith.constant 0 : index
    %c113_67 = arith.constant 113 : index
    %66 = vector.load %arg9[%c0_66, %c113_67] : memref<32x512xf32, #tpu.memory_space<vmem>>, vector<32x256xf32>
    %c1_68 = arith.constant 1 : index
    %c0_69 = arith.constant 0 : index
    %c0_70 = arith.constant 0 : index
    %67 = vector.load %arg5[%c1_68, %c0_69, %c0_70] : memref<2x1x256xf32, #tpu.memory_space<vmem>>, vector<1x1x256xf32>
    %68 = vector.shape_cast %67 : vector<1x1x256xf32> to vector<1x256xf32>
    %69 = vector.broadcast %68 : vector<1x256xf32> to vector<32x256xf32>
    %70 = arith.mulf %66, %69 : vector<32x256xf32>
    %c64_71 = arith.constant 64 : index
    %c0_72 = arith.constant 0 : index
    %71 = vector.load %arg10[%c64_71, %c0_72] : memref<288x256xf32, #tpu.memory_space<vmem>>, vector<32x256xf32>
    tpu.vector_store %arg10[%c64_71, %c0_72], %70 {strides = array<i32>} : memref<288x256xf32, #tpu.memory_space<vmem>>, vector<32x256xf32>,
    %c0_73 = arith.constant 0 : index
    %c127_74 = arith.constant 127 : index
    %72 = vector.load %arg9[%c0_73, %c127_74] : memref<32x512xf32, #tpu.memory_space<vmem>>, vector<32x256xf32>
    %c0_75 = arith.constant 0 : index
    %c0_76 = arith.constant 0 : index
    %c0_77 = arith.constant 0 : index
    %73 = vector.load %arg5[%c0_75, %c0_76, %c0_77] : memref<2x1x256xf32, #tpu.memory_space<vmem>>, vector<1x1x256xf32>
    %74 = vector.shape_cast %73 : vector<1x1x256xf32> to vector<1x256xf32>
    %75 = vector.broadcast %74 : vector<1x256xf32> to vector<32x256xf32>
    %76 = arith.mulf %72, %75 : vector<32x256xf32>
    %c96_78 = arith.constant 96 : index
    %c0_79 = arith.constant 0 : index
    %77 = vector.load %arg10[%c96_78, %c0_79] : memref<288x256xf32, #tpu.memory_space<vmem>>, vector<32x256xf32>
    tpu.vector_store %arg10[%c96_78, %c0_79], %76 {strides = array<i32>} : memref<288x256xf32, #tpu.memory_space<vmem>>, vector<32x256xf32>,
    %c0_80 = arith.constant 0 : index
    %c128_81 = arith.constant 128 : index
    %78 = vector.load %arg9[%c0_80, %c128_81] : memref<32x512xf32, #tpu.memory_space<vmem>>, vector<32x256xf32>
    %c128_82 = arith.constant 128 : index
    %c0_83 = arith.constant 0 : index
    %79 = vector.load %arg10[%c128_82, %c0_83] : memref<288x256xf32, #tpu.memory_space<vmem>>, vector<32x256xf32>
    tpu.vector_store %arg10[%c128_82, %c0_83], %78 {strides = array<i32>} : memref<288x256xf32, #tpu.memory_space<vmem>>, vector<32x256xf32>,
    %c0_84 = arith.constant 0 : index
    %c129_85 = arith.constant 129 : index
    %80 = vector.load %arg9[%c0_84, %c129_85] : memref<32x512xf32, #tpu.memory_space<vmem>>, vector<32x256xf32>
    %c1_86 = arith.constant 1 : index
    %c0_87 = arith.constant 0 : index
    %c0_88 = arith.constant 0 : index
    %81 = vector.load %arg5[%c1_86, %c0_87, %c0_88] : memref<2x1x256xf32, #tpu.memory_space<vmem>>, vector<1x1x256xf32>
    %82 = vector.shape_cast %81 : vector<1x1x256xf32> to vector<1x256xf32>
    %83 = vector.broadcast %82 : vector<1x256xf32> to vector<32x256xf32>
    %84 = arith.mulf %80, %83 : vector<32x256xf32>
    %c160_89 = arith.constant 160 : index
    %c0_90 = arith.constant 0 : index
    %85 = vector.load %arg10[%c160_89, %c0_90] : memref<288x256xf32, #tpu.memory_space<vmem>>, vector<32x256xf32>
    tpu.vector_store %arg10[%c160_89, %c0_90], %84 {strides = array<i32>} : memref<288x256xf32, #tpu.memory_space<vmem>>, vector<32x256xf32>,
    %c0_91 = arith.constant 0 : index
    %c143_92 = arith.constant 143 : index
    %86 = vector.load %arg9[%c0_91, %c143_92] : memref<32x512xf32, #tpu.memory_space<vmem>>, vector<32x256xf32>
    %c0_93 = arith.constant 0 : index
    %c0_94 = arith.constant 0 : index
    %c0_95 = arith.constant 0 : index
    %87 = vector.load %arg5[%c0_93, %c0_94, %c0_95] : memref<2x1x256xf32, #tpu.memory_space<vmem>>, vector<1x1x256xf32>
    %88 = vector.shape_cast %87 : vector<1x1x256xf32> to vector<1x256xf32>
    %89 = vector.broadcast %88 : vector<1x256xf32> to vector<32x256xf32>
    %90 = arith.mulf %86, %89 : vector<32x256xf32>
    %c192_96 = arith.constant 192 : index
    %c0_97 = arith.constant 0 : index
    %91 = vector.load %arg10[%c192_96, %c0_97] : memref<288x256xf32, #tpu.memory_space<vmem>>, vector<32x256xf32>
    tpu.vector_store %arg10[%c192_96, %c0_97], %90 {strides = array<i32>} : memref<288x256xf32, #tpu.memory_space<vmem>>, vector<32x256xf32>,
    %c0_98 = arith.constant 0 : index
    %c144_99 = arith.constant 144 : index
    %92 = vector.load %arg9[%c0_98, %c144_99] : memref<32x512xf32, #tpu.memory_space<vmem>>, vector<32x256xf32>
    %c224_100 = arith.constant 224 : index
    %c0_101 = arith.constant 0 : index
    %93 = vector.load %arg10[%c224_100, %c0_101] : memref<288x256xf32, #tpu.memory_space<vmem>>, vector<32x256xf32>
    tpu.vector_store %arg10[%c224_100, %c0_101], %92 {strides = array<i32>} : memref<288x256xf32, #tpu.memory_space<vmem>>, vector<32x256xf32>,
    %c0_102 = arith.constant 0 : index
    %c145_103 = arith.constant 145 : index
    %94 = vector.load %arg9[%c0_102, %c145_103] : memref<32x512xf32, #tpu.memory_space<vmem>>, vector<32x256xf32>
    %c1_104 = arith.constant 1 : index
    %c0_105 = arith.constant 0 : index
    %c0_106 = arith.constant 0 : index
    %95 = vector.load %arg5[%c1_104, %c0_105, %c0_106] : memref<2x1x256xf32, #tpu.memory_space<vmem>>, vector<1x1x256xf32>
    %96 = vector.shape_cast %95 : vector<1x1x256xf32> to vector<1x256xf32>
    %97 = vector.broadcast %96 : vector<1x256xf32> to vector<32x256xf32>
    %98 = arith.mulf %94, %97 : vector<32x256xf32>
    %c256_107 = arith.constant 256 : index
    %c0_108 = arith.constant 0 : index
    %99 = vector.load %arg10[%c256_107, %c0_108] : memref<288x256xf32, #tpu.memory_space<vmem>>, vector<32x256xf32>
    tpu.vector_store %arg10[%c256_107, %c0_108], %98 {strides = array<i32>} : memref<288x256xf32, #tpu.memory_space<vmem>>, vector<32x256xf32>,
    %c1_109 = arith.constant 1 : index
    %c0_110 = arith.constant 0 : index
    %c0_111 = arith.constant 0 : index
    %100 = vector.load %arg3[%c1_109, %c0_110, %c0_111] : memref<3x32x288xf32, #tpu.memory_space<vmem>>, vector<1x32x288xf32>
    %101 = vector.shape_cast %100 : vector<1x32x288xf32> to vector<32x288xf32>
    %c0_112 = arith.constant 0 : index
    %c0_113 = arith.constant 0 : index
    %102 = vector.load %arg10[%c0_112, %c0_113] : memref<288x256xf32, #tpu.memory_space<vmem>>, vector<288x256xf32>
    %cst_114 = arith.constant dense<0.000000e+00> : vector<32x256xf32>
    %103 = tpu.matmul %101, %102, %cst_114 {dimension_numbers = #tpu.dot_dimension_numbers<[1], [0], [0], [1], [0, 0, 1, 1], [], []>} : vector<32x288xf32>, vector<288x256xf32>, vector<32x256xf32> -> vector<32x256xf32>
    %c1_115 = arith.constant 1 : index
    %c0_116 = arith.constant 0 : index
    %c0_117 = arith.constant 0 : index
    %104 = vector.load %arg4[%c1_115, %c0_116, %c0_117] : memref<3x32x1xf32, #tpu.memory_space<vmem>>, vector<1x32x1xf32>
    %105 = vector.shape_cast %104 : vector<1x32x1xf32> to vector<32x1xf32>
    %106 = vector.broadcast %105 : vector<32x1xf32> to vector<32x256xf32>
    %107 = arith.addf %103, %106 : vector<32x256xf32>
    %cst_118 = arith.constant 0.000000e+00 : f32
    %108 = vector.broadcast %cst_118 : f32 to vector<32x256xf32>
    %109 = arith.maximumf %107, %108 : vector<32x256xf32>
    %c0_119 = arith.constant 0 : index
    %c128_120 = arith.constant 128 : index
    %110 = vector.load %arg9[%c0_119, %c128_120] : memref<32x512xf32, #tpu.memory_space<vmem>>, vector<32x256xf32>
    tpu.vector_store %arg9[%c0_119, %c128_120], %109 {strides = array<i32>} : memref<32x512xf32, #tpu.memory_space<vmem>>, vector<32x256xf32>,
    %c0_121 = arith.constant 0 : index
    %c111_122 = arith.constant 111 : index
    %111 = vector.load %arg9[%c0_121, %c111_122] : memref<32x512xf32, #tpu.memory_space<vmem>>, vector<32x256xf32>
    %c0_123 = arith.constant 0 : index
    %c0_124 = arith.constant 0 : index
    %c0_125 = arith.constant 0 : index
    %112 = vector.load %arg5[%c0_123, %c0_124, %c0_125] : memref<2x1x256xf32, #tpu.memory_space<vmem>>, vector<1x1x256xf32>
    %113 = vector.shape_cast %112 : vector<1x1x256xf32> to vector<1x256xf32>
    %114 = vector.broadcast %113 : vector<1x256xf32> to vector<32x256xf32>
    %115 = arith.mulf %111, %114 : vector<32x256xf32>
    %c0_126 = arith.constant 0 : index
    %c0_127 = arith.constant 0 : index
    %116 = vector.load %arg10[%c0_126, %c0_127] : memref<288x256xf32, #tpu.memory_space<vmem>>, vector<32x256xf32>
    tpu.vector_store %arg10[%c0_126, %c0_127], %115 {strides = array<i32>} : memref<288x256xf32, #tpu.memory_space<vmem>>, vector<32x256xf32>,
    %c0_128 = arith.constant 0 : index
    %c112_129 = arith.constant 112 : index
    %117 = vector.load %arg9[%c0_128, %c112_129] : memref<32x512xf32, #tpu.memory_space<vmem>>, vector<32x256xf32>
    %c32_130 = arith.constant 32 : index
    %c0_131 = arith.constant 0 : index
    %118 = vector.load %arg10[%c32_130, %c0_131] : memref<288x256xf32, #tpu.memory_space<vmem>>, vector<32x256xf32>
    tpu.vector_store %arg10[%c32_130, %c0_131], %117 {strides = array<i32>} : memref<288x256xf32, #tpu.memory_space<vmem>>, vector<32x256xf32>,
    %c0_132 = arith.constant 0 : index
    %c113_133 = arith.constant 113 : index
    %119 = vector.load %arg9[%c0_132, %c113_133] : memref<32x512xf32, #tpu.memory_space<vmem>>, vector<32x256xf32>
    %c1_134 = arith.constant 1 : index
    %c0_135 = arith.constant 0 : index
    %c0_136 = arith.constant 0 : index
    %120 = vector.load %arg5[%c1_134, %c0_135, %c0_136] : memref<2x1x256xf32, #tpu.memory_space<vmem>>, vector<1x1x256xf32>
    %121 = vector.shape_cast %120 : vector<1x1x256xf32> to vector<1x256xf32>
    %122 = vector.broadcast %121 : vector<1x256xf32> to vector<32x256xf32>
    %123 = arith.mulf %119, %122 : vector<32x256xf32>
    %c64_137 = arith.constant 64 : index
    %c0_138 = arith.constant 0 : index
    %124 = vector.load %arg10[%c64_137, %c0_138] : memref<288x256xf32, #tpu.memory_space<vmem>>, vector<32x256xf32>
    tpu.vector_store %arg10[%c64_137, %c0_138], %123 {strides = array<i32>} : memref<288x256xf32, #tpu.memory_space<vmem>>, vector<32x256xf32>,
    %c0_139 = arith.constant 0 : index
    %c127_140 = arith.constant 127 : index
    %125 = vector.load %arg9[%c0_139, %c127_140] : memref<32x512xf32, #tpu.memory_space<vmem>>, vector<32x256xf32>
    %c0_141 = arith.constant 0 : index
    %c0_142 = arith.constant 0 : index
    %c0_143 = arith.constant 0 : index
    %126 = vector.load %arg5[%c0_141, %c0_142, %c0_143] : memref<2x1x256xf32, #tpu.memory_space<vmem>>, vector<1x1x256xf32>
    %127 = vector.shape_cast %126 : vector<1x1x256xf32> to vector<1x256xf32>
    %128 = vector.broadcast %127 : vector<1x256xf32> to vector<32x256xf32>
    %129 = arith.mulf %125, %128 : vector<32x256xf32>
    %c96_144 = arith.constant 96 : index
    %c0_145 = arith.constant 0 : index
    %130 = vector.load %arg10[%c96_144, %c0_145] : memref<288x256xf32, #tpu.memory_space<vmem>>, vector<32x256xf32>
    tpu.vector_store %arg10[%c96_144, %c0_145], %129 {strides = array<i32>} : memref<288x256xf32, #tpu.memory_space<vmem>>, vector<32x256xf32>,
    %c0_146 = arith.constant 0 : index
    %c128_147 = arith.constant 128 : index
    %131 = vector.load %arg9[%c0_146, %c128_147] : memref<32x512xf32, #tpu.memory_space<vmem>>, vector<32x256xf32>
    %c128_148 = arith.constant 128 : index
    %c0_149 = arith.constant 0 : index
    %132 = vector.load %arg10[%c128_148, %c0_149] : memref<288x256xf32, #tpu.memory_space<vmem>>, vector<32x256xf32>
    tpu.vector_store %arg10[%c128_148, %c0_149], %131 {strides = array<i32>} : memref<288x256xf32, #tpu.memory_space<vmem>>, vector<32x256xf32>,
    %c0_150 = arith.constant 0 : index
    %c129_151 = arith.constant 129 : index
    %133 = vector.load %arg9[%c0_150, %c129_151] : memref<32x512xf32, #tpu.memory_space<vmem>>, vector<32x256xf32>
    %c1_152 = arith.constant 1 : index
    %c0_153 = arith.constant 0 : index
    %c0_154 = arith.constant 0 : index
    %134 = vector.load %arg5[%c1_152, %c0_153, %c0_154] : memref<2x1x256xf32, #tpu.memory_space<vmem>>, vector<1x1x256xf32>
    %135 = vector.shape_cast %134 : vector<1x1x256xf32> to vector<1x256xf32>
    %136 = vector.broadcast %135 : vector<1x256xf32> to vector<32x256xf32>
    %137 = arith.mulf %133, %136 : vector<32x256xf32>
    %c160_155 = arith.constant 160 : index
    %c0_156 = arith.constant 0 : index
    %138 = vector.load %arg10[%c160_155, %c0_156] : memref<288x256xf32, #tpu.memory_space<vmem>>, vector<32x256xf32>
    tpu.vector_store %arg10[%c160_155, %c0_156], %137 {strides = array<i32>} : memref<288x256xf32, #tpu.memory_space<vmem>>, vector<32x256xf32>,
    %c0_157 = arith.constant 0 : index
    %c143_158 = arith.constant 143 : index
    %139 = vector.load %arg9[%c0_157, %c143_158] : memref<32x512xf32, #tpu.memory_space<vmem>>, vector<32x256xf32>
    %c0_159 = arith.constant 0 : index
    %c0_160 = arith.constant 0 : index
    %c0_161 = arith.constant 0 : index
    %140 = vector.load %arg5[%c0_159, %c0_160, %c0_161] : memref<2x1x256xf32, #tpu.memory_space<vmem>>, vector<1x1x256xf32>
    %141 = vector.shape_cast %140 : vector<1x1x256xf32> to vector<1x256xf32>
    %142 = vector.broadcast %141 : vector<1x256xf32> to vector<32x256xf32>
    %143 = arith.mulf %139, %142 : vector<32x256xf32>
    %c192_162 = arith.constant 192 : index
    %c0_163 = arith.constant 0 : index
    %144 = vector.load %arg10[%c192_162, %c0_163] : memref<288x256xf32, #tpu.memory_space<vmem>>, vector<32x256xf32>
    tpu.vector_store %arg10[%c192_162, %c0_163], %143 {strides = array<i32>} : memref<288x256xf32, #tpu.memory_space<vmem>>, vector<32x256xf32>,
    %c0_164 = arith.constant 0 : index
    %c144_165 = arith.constant 144 : index
    %145 = vector.load %arg9[%c0_164, %c144_165] : memref<32x512xf32, #tpu.memory_space<vmem>>, vector<32x256xf32>
    %c224_166 = arith.constant 224 : index
    %c0_167 = arith.constant 0 : index
    %146 = vector.load %arg10[%c224_166, %c0_167] : memref<288x256xf32, #tpu.memory_space<vmem>>, vector<32x256xf32>
    tpu.vector_store %arg10[%c224_166, %c0_167], %145 {strides = array<i32>} : memref<288x256xf32, #tpu.memory_space<vmem>>, vector<32x256xf32>,
    %c0_168 = arith.constant 0 : index
    %c145_169 = arith.constant 145 : index
    %147 = vector.load %arg9[%c0_168, %c145_169] : memref<32x512xf32, #tpu.memory_space<vmem>>, vector<32x256xf32>
    %c1_170 = arith.constant 1 : index
    %c0_171 = arith.constant 0 : index
    %c0_172 = arith.constant 0 : index
    %148 = vector.load %arg5[%c1_170, %c0_171, %c0_172] : memref<2x1x256xf32, #tpu.memory_space<vmem>>, vector<1x1x256xf32>
    %149 = vector.shape_cast %148 : vector<1x1x256xf32> to vector<1x256xf32>
    %150 = vector.broadcast %149 : vector<1x256xf32> to vector<32x256xf32>
    %151 = arith.mulf %147, %150 : vector<32x256xf32>
    %c256_173 = arith.constant 256 : index
    %c0_174 = arith.constant 0 : index
    %152 = vector.load %arg10[%c256_173, %c0_174] : memref<288x256xf32, #tpu.memory_space<vmem>>, vector<32x256xf32>
    tpu.vector_store %arg10[%c256_173, %c0_174], %151 {strides = array<i32>} : memref<288x256xf32, #tpu.memory_space<vmem>>, vector<32x256xf32>,
    %c2 = arith.constant 2 : index
    %c0_175 = arith.constant 0 : index
    %c0_176 = arith.constant 0 : index
    %153 = vector.load %arg3[%c2, %c0_175, %c0_176] : memref<3x32x288xf32, #tpu.memory_space<vmem>>, vector<1x32x288xf32>
    %154 = vector.shape_cast %153 : vector<1x32x288xf32> to vector<32x288xf32>
    %c0_177 = arith.constant 0 : index
    %c0_178 = arith.constant 0 : index
    %155 = vector.load %arg10[%c0_177, %c0_178] : memref<288x256xf32, #tpu.memory_space<vmem>>, vector<288x256xf32>
    %cst_179 = arith.constant dense<0.000000e+00> : vector<32x256xf32>
    %156 = tpu.matmul %154, %155, %cst_179 {dimension_numbers = #tpu.dot_dimension_numbers<[1], [0], [0], [1], [0, 0, 1, 1], [], []>} : vector<32x288xf32>, vector<288x256xf32>, vector<32x256xf32> -> vector<32x256xf32>
    %c2_180 = arith.constant 2 : index
    %c0_181 = arith.constant 0 : index
    %c0_182 = arith.constant 0 : index
    %157 = vector.load %arg4[%c2_180, %c0_181, %c0_182] : memref<3x32x1xf32, #tpu.memory_space<vmem>>, vector<1x32x1xf32>
    %158 = vector.shape_cast %157 : vector<1x32x1xf32> to vector<32x1xf32>
    %159 = vector.broadcast %158 : vector<32x1xf32> to vector<32x256xf32>
    %160 = arith.addf %156, %159 : vector<32x256xf32>
    %cst_183 = arith.constant 0.000000e+00 : f32
    %161 = vector.broadcast %cst_183 : f32 to vector<32x256xf32>
    %162 = arith.maximumf %160, %161 : vector<32x256xf32>
    %c0_184 = arith.constant 0 : index
    %163 = memref.load %arg1[%c0_184] : memref<2xi32, #tpu.memory_space<smem>>
    %c16_i32 = arith.constant 16 : i32
    %164 = arith.muli %163, %c16_i32 : i32
    %c1_185 = arith.constant 1 : index
    %165 = memref.load %arg1[%c1_185] : memref<2xi32, #tpu.memory_space<smem>>
    %166 = arith.addi %164, %165 : i32
    %167 = tpu.iota {dimensions = array<i32: 1>} : vector<1x256xi32>
    %168 = vector.broadcast %166 : i32 to vector<1x256xi32>
    %169 = arith.cmpi eq, %167, %168 : vector<1x256xi32>
    %170 = arith.extui %169 : vector<1x256xi1> to vector<1x256xi32>
    %171 = arith.sitofp %170 : vector<1x256xi32> to vector<1x256xf32>
    %c0_186 = arith.constant 0 : index
    %c0_187 = arith.constant 0 : index
    %172 = vector.load %arg6[%c0_186, %c0_187] : memref<8x32xf32, #tpu.memory_space<vmem>>, vector<8x32xf32>
    %cst_188 = arith.constant dense<0.000000e+00> : vector<8x256xf32>
    %173 = tpu.matmul %172, %162, %cst_188 {dimension_numbers = #tpu.dot_dimension_numbers<[1], [0], [0], [1], [0, 0, 1, 1], [], []>} : vector<8x32xf32>, vector<32x256xf32>, vector<8x256xf32> -> vector<8x256xf32>
    %174 = vector.broadcast %171 : vector<1x256xf32> to vector<8x256xf32>
    %175 = arith.mulf %173, %174 : vector<8x256xf32>
    %cst_189 = arith.constant dense<0.000000e+00> : vector<8xf32>
    %176 = vector.multi_reduction <add>, %175, %cst_189 [1] : vector<8x256xf32> to vector<8xf32>
    %177 = vector.shape_cast %176 : vector<8xf32> to vector<8x1xf32>
    %c0_190 = arith.constant 0 : index
    %c0_191 = arith.constant 0 : index
    %178 = vector.load %arg7[%c0_190, %c0_191] : memref<8x1xf32, #tpu.memory_space<vmem>>, vector<8x1xf32>
    %179 = arith.addf %177, %178 : vector<8x1xf32>
    %c0_192 = arith.constant 0 : index
    %c0_193 = arith.constant 0 : index
    %c0_194 = arith.constant 0 : index
    %180 = vector.load %arg8[%c0_192, %c0_193, %c0_194] : memref<1x8x1xf32, #tpu.memory_space<vmem>>, vector<1x8x1xf32>
    %181 = vector.shape_cast %180 : vector<1x8x1xf32> to vector<8x1xf32>
    %182 = vector.shape_cast %179 : vector<8x1xf32> to vector<1x8x1xf32>
    tpu.vector_store %arg8[%c0_192, %c0_193, %c0_194], %182 {strides = array<i32>} : memref<1x8x1xf32, #tpu.memory_space<vmem>>, vector<1x8x1xf32>,
    return
  }
  func.func @transform_0(%arg0: i32) -> i32 {
    %c0_i32 = arith.constant 0 : i32
    %c0_i32_0 = arith.constant 0 : i32
    return %c0_i32 : i32
  }
  func.func @transform_1(%arg0: i32) -> (i32, i32, i32) {
    %c0_i32 = arith.constant 0 : i32
    %c0_i32_0 = arith.constant 0 : i32
    %c0_i32_1 = arith.constant 0 : i32
    return %arg0, %c0_i32, %c0_i32_0 : i32, i32, i32
  }
  func.func @transform_2(%arg0: i32) -> (i32, i32, i32) {
    %c0_i32 = arith.constant 0 : i32
    %c0_i32_0 = arith.constant 0 : i32
    %c0_i32_1 = arith.constant 0 : i32
    %c0_i32_2 = arith.constant 0 : i32
    return %c0_i32, %c0_i32_0, %c0_i32_1 : i32, i32, i32
  }
  func.func @transform_3(%arg0: i32) -> (i32, i32, i32) {
    %c0_i32 = arith.constant 0 : i32
    %c0_i32_0 = arith.constant 0 : i32
    %c0_i32_1 = arith.constant 0 : i32
    %c0_i32_2 = arith.constant 0 : i32
    return %c0_i32, %c0_i32_0, %c0_i32_1 : i32, i32, i32
  }
  func.func @transform_4(%arg0: i32) -> (i32, i32, i32) {
    %c0_i32 = arith.constant 0 : i32
    %c0_i32_0 = arith.constant 0 : i32
    %c0_i32_1 = arith.constant 0 : i32
    %c0_i32_2 = arith.constant 0 : i32
    return %c0_i32, %c0_i32_0, %c0_i32_1 : i32, i32, i32
  }
  func.func @transform_5(%arg0: i32) -> (i32, i32) {
    %c0_i32 = arith.constant 0 : i32
    %c0_i32_0 = arith.constant 0 : i32
    %c0_i32_1 = arith.constant 0 : i32
    return %c0_i32, %c0_i32_0 : i32, i32
  }
  func.func @transform_6(%arg0: i32) -> (i32, i32) {
    %c0_i32 = arith.constant 0 : i32
    %c0_i32_0 = arith.constant 0 : i32
    %c0_i32_1 = arith.constant 0 : i32
    return %c0_i32, %c0_i32_0 : i32, i32
  }
  func.func @transform_7(%arg0: i32) -> (i32, i32, i32) {
    %c0_i32 = arith.constant 0 : i32
    %c0_i32_0 = arith.constant 0 : i32
    %c0_i32_1 = arith.constant 0 : i32
    return %arg0, %c0_i32, %c0_i32_0 : i32, i32, i32
  }
}

</mosaic_0001>

<llo_original>
// kernel: cnn_solver_policy_forward.1
$region0: #{cnn_solver_policy_forward.1}
  #allocation0 [shape = 'u32[]', space=smem, size = 0x4, offset = 0x4, fixed_abs, tag = 'smem constant byte address 0x4 - core index']
  #allocation1 [shape = 'u32[144,128]{1,0:T(1,128)}', space=vmem, size = 0x12000, scoped, tag = 'internal scratch']
  #allocation2 [shape = 'f32[32,512]{1,0:T(8,128)}', space=vmem, size = 0x10000, scoped, tag = 'scratch operand']
  #allocation3 [shape = 'f32[288,256]{1,0:T(8,128)}', space=vmem, size = 0x48000, scoped, tag = 'scratch operand']
  %s0 = inlined_call_operand.vmem [shape: s32[2], index: 0, kind: input, shape index: {}]
  %s1 = inlined_call_operand.vmem [shape: f32[2,4,256], index: 1, kind: input, shape index: {}]
  %s2 = inlined_call_operand.hbm [shape: f32[3,32,288], index: 2, kind: input, shape index: {}]
  %s3 = inlined_call_operand.vmem [shape: f32[3,32,1], index: 3, kind: input, shape index: {}]
  %s4 = inlined_call_operand.vmem [shape: f32[2,1,256], index: 4, kind: input, shape index: {}]
  %s5 = inlined_call_operand.vmem [shape: f32[8,32], index: 5, kind: input, shape index: {}]
  %s6 = inlined_call_operand.vmem [shape: f32[8,1], index: 6, kind: input, shape index: {}]
  %s7 = inlined_call_operand.vmem [shape: f32[2,8,1], index: 7, kind: output, shape index: {}]
  %s8 = sld [smem:[#allocation0]]
  $region69: #{cnn_solver_policy_forward.1} parent=0
    _
  %s10 = ssub.s32 1, %s8
  %s11 = scalar_select 0, %s10, %s8
  $region1: #{cnn_solver_policy_forward.1} parent=0
    #allocation4 [shape = 'u8[512]{0}', space=smem, size = 0x200, scoped, tag = 'input window, operand 0, single buffered']
    #allocation5 [shape = 's32[2]{0}', space=sflag, size = 0x8, scoped, tag = 'scoped memory for cnn_solver_policy_forward.1']
    #allocation6 [shape = 's32[2]{0}', space=sflag, size = 0x8, scoped, tag = 'scoped memory for cnn_solver_policy_forward.1']
    #allocation7 [shape = 'u8[147456]{0}', space=vmem, size = 0x24000, scoped, tag = 'input window, operand 2, single buffered']
    %12 = vsyncpa [#allocation6], 0
    %13 = vsyncpa [#allocation5], 0
    loop: start=0, step=1, limit=4
    $region2: #{cnn_solver_policy_forward.1} parent=1 // loop_pre_header
      _
    $region3: #{cnn_solver_policy_forward.1} parent=1 // loop_header
      %s15 = sphi 0, %s19
      %p16 = scmp.ge.s32.totalorder %s15, 4
      %s23 = sphi 0, %s23
      %s25 = sphi 0, %s23
      %s26 = sphi 0, %s25
      %s40 = sphi 0, %s26
      %s46 = sphi 0, %s48
      %s49 = sphi 0, %s46
      %s50 = sphi 0, %s49
      %s66 = sphi 0, %s50
      %s70 = sphi 0, %s70
      %s72 = sphi 0, %s70
      %s73 = sphi 0, %s72
      %s87 = sphi 0, %s73
      %s91 = sphi 0, %s91
      %s93 = sphi 0, %s91
      %s94 = sphi 0, %s93
      %s108 = sphi 0, %s94
      %s112 = sphi 0, %s112
      %s114 = sphi 0, %s112
      %s115 = sphi 0, %s114
      %s129 = sphi 0, %s115
      %s133 = sphi 0, %s133
      %s135 = sphi 0, %s133
      %s136 = sphi 0, %s135
      %s150 = sphi 0, %s136
      %s154 = sphi 0, %s154
      %s156 = sphi 0, %s154
      %s157 = sphi 0, %s156
      %s171 = sphi 0, %s157
      %s177 = sphi 0, %s179
      %s180 = sphi 0, %s177
      %s181 = sphi 0, %s180
      %s197 = sphi 0, %s181
    $region4: #{cnn_solver_policy_forward.1} parent=1 // loop_header_branch
      %18 = sbr.rel (%p16) target = $region8
    $region5: #{cnn_solver_policy_forward.1} parent=1 // loop_body
      %s20 = ssub.s32 %s15, 1
      %s21 = ssub.s32 %s15, 2
      %s22 = sadd.s32 %s15, 1
      %s24 = sadd.s32 %s23, 1
      %p27 = scmp.eq.s32.totalorder %s15, 1
      %p28 = scmp.ne.s32.totalorder %s23, %s25
      %p29 = scmp.eq.s32.totalorder %s15, 0
      %p30 = por %p28, %p29
      %p31 = scmp.ne.s32.totalorder %s23, %s25
      %p32 = scmp.eq.s32.totalorder %s20, 1
      %p33 = por %p31, %p32
      %p34 = scmp.ne.s32.totalorder %s25, %s26
      %p35 = scmp.eq.s32.totalorder %s20, 0
      %p36 = por %p34, %p35
      %p37 = scmp.ne.s32.totalorder %s25, %s26
      %p38 = scmp.eq.s32.totalorder %s21, 1
      %p39 = por %p37, %p38
      %p41 = scmp.ne.s32.totalorder %s26, %s40
      %p42 = scmp.eq.s32.totalorder %s21, 0
      %p43 = por %p41, %p42
      %s44 = ssub.s32 %s15, %s22
      %p45 = scmp.eq.s32.totalorder %s44, 0
      %s47 = sadd.s32 %s46, 1
      %s48 = scalar_select %p45, %s46, %s47
      %p51 = pneg %p45
      %p52 = scmp.eq.s32.totalorder %s15, 1
      %p53 = por %p51, %p52
      %p54 = scmp.ne.s32.totalorder %s46, %s49
      %p55 = scmp.eq.s32.totalorder %s15, 0
      %p56 = por %p54, %p55
      %p57 = scmp.ne.s32.totalorder %s46, %s49
      %p58 = scmp.eq.s32.totalorder %s20, 1
      %p59 = por %p57, %p58
      %p60 = scmp.ne.s32.totalorder %s49, %s50
      %p61 = scmp.eq.s32.totalorder %s20, 0
      %p62 = por %p60, %p61
      %p63 = scmp.ne.s32.totalorder %s49, %s50
      %p64 = scmp.eq.s32.totalorder %s21, 1
      %p65 = por %p63, %p64
      %p67 = scmp.ne.s32.totalorder %s50, %s66
      %p68 = scmp.eq.s32.totalorder %s21, 0
      %p69 = por %p67, %p68
      %s71 = sadd.s32 %s70, 1
      %p74 = scmp.eq.s32.totalorder %s15, 1
      %p75 = scmp.ne.s32.totalorder %s70, %s72
      %p76 = scmp.eq.s32.totalorder %s15, 0
      %p77 = por %p75, %p76
      %p78 = scmp.ne.s32.totalorder %s70, %s72
      %p79 = scmp.eq.s32.totalorder %s20, 1
      %p80 = por %p78, %p79
      %p81 = scmp.ne.s32.totalorder %s72, %s73
      %p82 = scmp.eq.s32.totalorder %s20, 0
      %p83 = por %p81, %p82
      %p84 = scmp.ne.s32.totalorder %s72, %s73
      %p85 = scmp.eq.s32.totalorder %s21, 1
      %p86 = por %p84, %p85
      %p88 = scmp.ne.s32.totalorder %s73, %s87
      %p89 = scmp.eq.s32.totalorder %s21, 0
      %p90 = por %p88, %p89
      %s92 = sadd.s32 %s91, 1
      %p95 = scmp.eq.s32.totalorder %s15, 1
      %p96 = scmp.ne.s32.totalorder %s91, %s93
      %p97 = scmp.eq.s32.totalorder %s15, 0
      %p98 = por %p96, %p97
      %p99 = scmp.ne.s32.totalorder %s91, %s93
      %p100 = scmp.eq.s32.totalorder %s20, 1
      %p101 = por %p99, %p100
      %p102 = scmp.ne.s32.totalorder %s93, %s94
      %p103 = scmp.eq.s32.totalorder %s20, 0
      %p104 = por %p102, %p103
      %p105 = scmp.ne.s32.totalorder %s93, %s94
      %p106 = scmp.eq.s32.totalorder %s21, 1
      %p107 = por %p105, %p106
      %p109 = scmp.ne.s32.totalorder %s94, %s108
      %p110 = scmp.eq.s32.totalorder %s21, 0
      %p111 = por %p109, %p110
      %s113 = sadd.s32 %s112, 1
      %p116 = scmp.eq.s32.totalorder %s15, 1
      %p117 = scmp.ne.s32.totalorder %s112, %s114
      %p118 = scmp.eq.s32.totalorder %s15, 0
      %p119 = por %p117, %p118
      %p120 = scmp.ne.s32.totalorder %s112, %s114
      %p121 = scmp.eq.s32.totalorder %s20, 1
      %p122 = por %p120, %p121
      %p123 = scmp.ne.s32.totalorder %s114, %s115
      %p124 = scmp.eq.s32.totalorder %s20, 0
      %p125 = por %p123, %p124
      %p126 = scmp.ne.s32.totalorder %s114, %s115
      %p127 = scmp.eq.s32.totalorder %s21, 1
      %p128 = por %p126, %p127
      %p130 = scmp.ne.s32.totalorder %s115, %s129
      %p131 = scmp.eq.s32.totalorder %s21, 0
      %p132 = por %p130, %p131
      %s134 = sadd.s32 %s133, 1
      %p137 = scmp.eq.s32.totalorder %s15, 1
      %p138 = scmp.ne.s32.totalorder %s133, %s135
      %p139 = scmp.eq.s32.totalorder %s15, 0
      %p140 = por %p138, %p139
      %p141 = scmp.ne.s32.totalorder %s133, %s135
      %p142 = scmp.eq.s32.totalorder %s20, 1
      %p143 = por %p141, %p142
      %p144 = scmp.ne.s32.totalorder %s135, %s136
      %p145 = scmp.eq.s32.totalorder %s20, 0
      %p146 = por %p144, %p145
      %p147 = scmp.ne.s32.totalorder %s135, %s136
      %p148 = scmp.eq.s32.totalorder %s21, 1
      %p149 = por %p147, %p148
      %p151 = scmp.ne.s32.totalorder %s136, %s150
      %p152 = scmp.eq.s32.totalorder %s21, 0
      %p153 = por %p151, %p152
      %s155 = sadd.s32 %s154, 1
      %p158 = scmp.eq.s32.totalorder %s15, 1
      %p159 = scmp.ne.s32.totalorder %s154, %s156
      %p160 = scmp.eq.s32.totalorder %s15, 0
      %p161 = por %p159, %p160
      %p162 = scmp.ne.s32.totalorder %s154, %s156
      %p163 = scmp.eq.s32.totalorder %s20, 1
      %p164 = por %p162, %p163
      %p165 = scmp.ne.s32.totalorder %s156, %s157
      %p166 = scmp.eq.s32.totalorder %s20, 0
      %p167 = por %p165, %p166
      %p168 = scmp.ne.s32.totalorder %s156, %s157
      %p169 = scmp.eq.s32.totalorder %s21, 1
      %p170 = por %p168, %p169
      %p172 = scmp.ne.s32.totalorder %s157, %s171
      %p173 = scmp.eq.s32.totalorder %s21, 0
      %p174 = por %p172, %p173
      %s175 = ssub.s32 %s15, %s22
      %p176 = scmp.eq.s32.totalorder %s175, 0
      %s178 = sadd.s32 %s177, 1
      %s179 = scalar_select %p176, %s177, %s178
      %p182 = pneg %p176
      %p183 = scmp.eq.s32.totalorder %s15, 1
      %p184 = por %p182, %p183
      %p185 = scmp.ne.s32.totalorder %s177, %s180
      %p186 = scmp.eq.s32.totalorder %s15, 0
      %p187 = por %p185, %p186
      %p188 = scmp.ne.s32.totalorder %s177, %s180
      %p189 = scmp.eq.s32.totalorder %s20, 1
      %p190 = por %p188, %p189
      %p191 = scmp.ne.s32.totalorder %s180, %s181
      %p192 = scmp.eq.s32.totalorder %s20, 0
      %p193 = por %p191, %p192
      %p194 = scmp.ne.s32.totalorder %s180, %s181
      %p195 = scmp.eq.s32.totalorder %s21, 1
      %p196 = por %p194, %p195
      %p198 = scmp.ne.s32.totalorder %s181, %s197
      %p199 = scmp.eq.s32.totalorder %s21, 0
      %p200 = por %p198, %p199
      %p201 = scmp.le.s32.totalorder 1, %s15
      %p202 = scmp.lt.s32.totalorder %s15, 3
      %p203 = pnand %p201, %p202
      %p204 = pneg %p203
      // Predicated region
      $region9: #{cnn_solver_policy_forward.1} parent=5 // pred_check
        _
      $region10: #{cnn_solver_policy_forward.1} parent=5 // pred_check_branch
        %206 = sbr.rel (%p203) target = $region12
      $region11: #{cnn_solver_policy_forward.1} parent=5 // pred_region
        %s207 = ssub.s32 %s15, 1
        // Predicated region
        $region13: #{cnn_solver_policy_forward.1} parent=11 // pred_check
          %p208 = pneg %p36
        $region14: #{cnn_solver_policy_forward.1} parent=11 // pred_check_branch
          %210 = sbr.rel (%p208) target = $region16
        $region15: #{cnn_solver_policy_forward.1} parent=11 // pred_region
          %s212 = ssub.s32 16, 16
          %213 = vsyncadd [#allocation6], %s212
          %s215 = sshll.u32 %s0, 4
          %s216 = int_to_ptr.vmem [resolvable:$true] %s215
          %218 = dma.vmem_to_smem %s216, 16, [#allocation4], [#allocation6]
        $region16: #{cnn_solver_policy_forward.1} parent=11 // pred_fallthru
          _
        // Predicated region
        $region17: #{cnn_solver_policy_forward.1} parent=11 // pred_check
          %p219 = pneg %p83
        $region18: #{cnn_solver_policy_forward.1} parent=11 // pred_check_branch
          %221 = sbr.rel (%p219) target = $region20
        $region19: #{cnn_solver_policy_forward.1} parent=11 // pred_region
          %s223 = ssub.s32 4608, 4608
          %224 = vsyncadd [#allocation5], %s223
          %s225 = sshll.u32 [#allocation7], 4
          %s226 = int_to_ptr.vmem [resolvable:$true] %s225
          %231 = dma.hbm_to_vmem [thread:$0]  %s2, 4608, %s226, [#allocation5], 384, 384, 24
        $region20: #{cnn_solver_policy_forward.1} parent=11 // pred_fallthru
          _
        // Predicated region
        $region21: #{cnn_solver_policy_forward.1} parent=11 // pred_check
          %p232 = pneg %p104
        $region22: #{cnn_solver_policy_forward.1} parent=11 // pred_check_branch
          %234 = sbr.rel (%p232) target = $region24
        $region23: #{cnn_solver_policy_forward.1} parent=11 // pred_region
          _
        $region24: #{cnn_solver_policy_forward.1} parent=11 // pred_fallthru
          _
        // Predicated region
        $region25: #{cnn_solver_policy_forward.1} parent=11 // pred_check
          %p235 = pneg %p125
        $region26: #{cnn_solver_policy_forward.1} parent=11 // pred_check_branch
          %237 = sbr.rel (%p235) target = $region28
        $region27: #{cnn_solver_policy_forward.1} parent=11 // pred_region
          _
        $region28: #{cnn_solver_policy_forward.1} parent=11 // pred_fallthru
          _
        // Predicated region
        $region29: #{cnn_solver_policy_forward.1} parent=11 // pred_check
          %p238 = pneg %p146
        $region30: #{cnn_solver_policy_forward.1} parent=11 // pred_check_branch
          %240 = sbr.rel (%p238) target = $region32
        $region31: #{cnn_solver_policy_forward.1} parent=11 // pred_region
          _
        $region32: #{cnn_solver_policy_forward.1} parent=11 // pred_fallthru
          _
        // Predicated region
        $region33: #{cnn_solver_policy_forward.1} parent=11 // pred_check
          %p241 = pneg %p167
        $region34: #{cnn_solver_policy_forward.1} parent=11 // pred_check_branch
          %243 = sbr.rel (%p241) target = $region36
        $region35: #{cnn_solver_policy_forward.1} parent=11 // pred_region
          _
        $region36: #{cnn_solver_policy_forward.1} parent=11 // pred_fallthru
          _
      $region12: #{cnn_solver_policy_forward.1} parent=5 // pred_fallthru
        _
      %p244 = scmp.lt.s32.totalorder %s15, 2
      // Predicated region
      $region37: #{cnn_solver_policy_forward.1} parent=5 // pred_check
        %p245 = pneg %p244
      $region38: #{cnn_solver_policy_forward.1} parent=5 // pred_check_branch
        %247 = sbr.rel (%p245) target = $region40
      $region39: #{cnn_solver_policy_forward.1} parent=5 // pred_region
        // Predicated region
        $region41: #{cnn_solver_policy_forward.1} parent=39 // pred_check
          %p248 = pneg %p56
        $region42: #{cnn_solver_policy_forward.1} parent=39 // pred_check_branch
          %250 = sbr.rel (%p248) target = $region44
        $region43: #{cnn_solver_policy_forward.1} parent=39 // pred_region
          %p251 = scmp.lt.s32.totalorder %s15, 1
          %s252 = scalar_select %p251, %s15, 1
          %s253 = smul.addr %s252, 2
          %s254 = smul.addr %s253, 4
          %s255 = scalar_lea.vmem %s1, %s254
        $region44: #{cnn_solver_policy_forward.1} parent=39 // pred_fallthru
          _
      $region40: #{cnn_solver_policy_forward.1} parent=5 // pred_fallthru
        _
      %p256 = scmp.le.s32.totalorder 1, %s15
      %p257 = scmp.lt.s32.totalorder %s15, 3
      %p258 = pnand %p256, %p257
      %p259 = pneg %p258
      // Predicated region
      $region45: #{cnn_solver_policy_forward.1} parent=5 // pred_check
        _
      $region46: #{cnn_solver_policy_forward.1} parent=5 // pred_check_branch
        %261 = sbr.rel (%p258) target = $region48
      $region47: #{cnn_solver_policy_forward.1} parent=5 // pred_region
        %s262 = ssub.s32 %s15, 1
        // Predicated region
        $region49: #{cnn_solver_policy_forward.1} parent=47 // pred_check
          %p263 = pneg %p36
        $region50: #{cnn_solver_policy_forward.1} parent=47 // pred_check_branch
          %265 = sbr.rel (%p263) target = $region52
        $region51: #{cnn_solver_policy_forward.1} parent=47 // pred_region
          %266 = dma.done [#allocation6], 16
        $region52: #{cnn_solver_policy_forward.1} parent=47 // pred_fallthru
          _
        // Predicated region
        $region53: #{cnn_solver_policy_forward.1} parent=47 // pred_check
          %p267 = pneg %p83
        $region54: #{cnn_solver_policy_forward.1} parent=47 // pred_check_branch
          %269 = sbr.rel (%p267) target = $region56
        $region55: #{cnn_solver_policy_forward.1} parent=47 // pred_region
          %270 = dma.done [#allocation5], 4608
        $region56: #{cnn_solver_policy_forward.1} parent=47 // pred_fallthru
          _
        %271 = sfence
        %p272 = pneg %p36
        %p273 = pneg %p33
        %p274 = scmp.lt.s32.totalorder %s20, 1
        %s275 = scalar_select %p274, %s20, 1
        %s276 = smul.addr %s275, 2
        %s277 = smul.addr %s276, 4
        %s278 = scalar_lea.vmem %s1, %s277
        %p279 = pneg %p62
        %p280 = pneg %p59
        %p281 = pneg %p83
        %p282 = pneg %p80
        %p283 = pneg %p104
        %p284 = pneg %p101
        %p285 = pneg %p125
        %p286 = pneg %p122
        %p287 = pneg %p146
        %p288 = pneg %p143
        %p289 = pneg %p167
        %p290 = pneg %p164
        %p291 = pneg %p193
        %p292 = pneg %p190
        %p293 = scmp.lt.s32.totalorder %s20, 1
        %s294 = scalar_select %p293, %s20, 1
        %s295 = smul.addr %s294, 8
        %s296 = scalar_lea.vmem %s7, %s295
        %p297 = scmp.lt.s32.totalorder %s20, 1
        %s298 = scalar_select %p297, %s20, 1
        %s299 = smul.addr %s298, 2
        %s300 = smul.addr %s299, 4
        %s301 = scalar_lea.vmem %s1, %s300
        %p302 = scmp.lt.s32.totalorder %s20, 1
        %s303 = scalar_select %p302, %s20, 1
        %s304 = smul.addr %s303, 8
        %s305 = scalar_lea.vmem %s7, %s304
        %306 = vst [vmem:[#allocation2] sm:$0xff] 0.0
        %307 = vst [vmem:[#allocation2 + $0x8] sm:$0xff] 0.0
        %308 = vst [vmem:[#allocation2 + $0x10] sm:$0xff] 0.0
        %309 = vst [vmem:[#allocation2 + $0x18] sm:$0xff] 0.0
        %310 = vst [vmem:[#allocation2 + $0x20] sm:$0xff] 0.0
        %311 = vst [vmem:[#allocation2 + $0x28] sm:$0xff] 0.0
        %312 = vst [vmem:[#allocation2 + $0x30] sm:$0xff] 0.0
        %313 = vst [vmem:[#allocation2 + $0x38] sm:$0xff] 0.0
        %314 = vst [vmem:[#allocation2 + $0x40] sm:$0xff] 0.0
        %315 = vst [vmem:[#allocation2 + $0x48] sm:$0xff] 0.0
        %316 = vst [vmem:[#allocation2 + $0x50] sm:$0xff] 0.0
        %317 = vst [vmem:[#allocation2 + $0x58] sm:$0xff] 0.0
        %318 = vst [vmem:[#allocation2 + $0x60] sm:$0xff] 0.0
        %319 = vst [vmem:[#allocation2 + $0x68] sm:$0xff] 0.0
        %320 = vst [vmem:[#allocation2 + $0x70] sm:$0xff] 0.0
        %321 = vst [vmem:[#allocation2 + $0x78] sm:$0xff] 0.0
        %v322 = vld [vmem:[%s301] sm:$0xff]
        %v324 = vcombine.high %v322, %v322
        %326 = vst [vmem:[#allocation2 + $0x8] sm:$0xf] %v322
        %327 = vst [vmem:[#allocation2 + $0x10] sm:$0xf] %v324
        %v328 = vld [vmem:[#allocation2] sm:$0xff]
        %v329 = vld [vmem:[#allocation2 + $0x8] sm:$0xff]
        %v330 = vld [vmem:[#allocation2 + $0x10] sm:$0xff]
        %v331 = vld [vmem:[#allocation2 + $0x20] sm:$0xff]
        %v332 = vld [vmem:[#allocation2 + $0x28] sm:$0xff]
        %v333 = vld [vmem:[#allocation2 + $0x30] sm:$0xff]
        %v334 = vld [vmem:[#allocation2 + $0x40] sm:$0xff]
        %v335 = vld [vmem:[#allocation2 + $0x48] sm:$0xff]
        %v336 = vld [vmem:[#allocation2 + $0x50] sm:$0xff]
        %v337 = vld [vmem:[#allocation2 + $0x60] sm:$0xff]
        %v338 = vld [vmem:[#allocation2 + $0x68] sm:$0xff]
        %v339 = vld [vmem:[#allocation2 + $0x70] sm:$0xff]
        %v340 = vld [vmem:[%s4] sm:$0x3]
        %v342 = vlaneseq
        %v343 = vshrl.u32 %v342, 7
        %v344 = vsub.s32 0, %v343
        %v345 = vrot.slane %v340, %v344
        %v346 = vlaneseq
        %v347 = vshrl.u32 %v346, 7
        %v348 = vsub.s32 1, %v347
        %v349 = vrot.slane %v340, %v348
        %350 = vrot.lane.b32.xlu0 %v345, 111
        %v351 = vpop.permute.xlu0 %350
        %352 = vrot.lane.b32.xlu0 %v349, 111
        %v353 = vpop.permute.xlu0 %352
        %vm354 = vcmask 908288
        %v355 = vsel %vm354, %v351, %v353
        %v359 = vmul.f32 %v328, %v351
        %v360 = vmul.f32 %v329, %v355
        %v361 = vmul.f32 %v330, %v353
        %v362 = vmul.f32 %v331, %v351
        %v363 = vmul.f32 %v332, %v355
        %v364 = vmul.f32 %v333, %v353
        %v365 = vmul.f32 %v334, %v351
        %v366 = vmul.f32 %v335, %v355
        %v367 = vmul.f32 %v336, %v353
        %v368 = vmul.f32 %v337, %v351
        %v369 = vmul.f32 %v338, %v355
        %v370 = vmul.f32 %v339, %v353
        %383 = vrot.lane.b32.xlu0 %v359, 17
        %v384 = vpop.permute.xlu0 %383
        %385 = vrot.lane.b32.xlu0 %v360, 17
        %v386 = vpop.permute.xlu0 %385
        %387 = vrot.lane.b32.xlu0 %v361, 17
        %v388 = vpop.permute.xlu0 %387
        %389 = vrot.lane.b32.xlu0 %v362, 17
        %v390 = vpop.permute.xlu0 %389
        %391 = vrot.lane.b32.xlu0 %v363, 17
        %v392 = vpop.permute.xlu0 %391
        %393 = vrot.lane.b32.xlu0 %v364, 17
        %v394 = vpop.permute.xlu0 %393
        %395 = vrot.lane.b32.xlu0 %v365, 17
        %v396 = vpop.permute.xlu0 %395
        %397 = vrot.lane.b32.xlu0 %v366, 17
        %v398 = vpop.permute.xlu0 %397
        %399 = vrot.lane.b32.xlu0 %v367, 17
        %v400 = vpop.permute.xlu0 %399
        %401 = vrot.lane.b32.xlu0 %v368, 17
        %v402 = vpop.permute.xlu0 %401
        %403 = vrot.lane.b32.xlu0 %v369, 17
        %v404 = vpop.permute.xlu0 %403
        %405 = vrot.lane.b32.xlu0 %v370, 17
        %v406 = vpop.permute.xlu0 %405
        %vm407 = vcmask 138240
        %v408 = vsel %vm407, %v384, %v386
        %v409 = vsel %vm407, %v386, %v388
        %v410 = vsel %vm407, %v390, %v392
        %v411 = vsel %vm407, %v392, %v394
        %v412 = vsel %vm407, %v396, %v398
        %v413 = vsel %vm407, %v398, %v400
        %v414 = vsel %vm407, %v402, %v404
        %v415 = vsel %vm407, %v404, %v406
        %424 = vst [vmem:[#allocation3] sm:$0xff] %v408
        %425 = vst [vmem:[#allocation3 + $0x8] sm:$0xff] %v409
        %426 = vst [vmem:[#allocation3 + $0x10] sm:$0xff] %v410
        %427 = vst [vmem:[#allocation3 + $0x18] sm:$0xff] %v411
        %428 = vst [vmem:[#allocation3 + $0x20] sm:$0xff] %v412
        %429 = vst [vmem:[#allocation3 + $0x28] sm:$0xff] %v413
        %430 = vst [vmem:[#allocation3 + $0x30] sm:$0xff] %v414
        %431 = vst [vmem:[#allocation3 + $0x38] sm:$0xff] %v415
        %v432 = vld [vmem:[#allocation2] sm:$0xff]
        %v433 = vld [vmem:[#allocation2 + $0x8] sm:$0xff]
        %v434 = vld [vmem:[#allocation2 + $0x10] sm:$0xff]
        %v435 = vld [vmem:[#allocation2 + $0x20] sm:$0xff]
        %v436 = vld [vmem:[#allocation2 + $0x28] sm:$0xff]
        %v437 = vld [vmem:[#allocation2 + $0x30] sm:$0xff]
        %v438 = vld [vmem:[#allocation2 + $0x40] sm:$0xff]
        %v439 = vld [vmem:[#allocation2 + $0x48] sm:$0xff]
        %v440 = vld [vmem:[#allocation2 + $0x50] sm:$0xff]
        %v441 = vld [vmem:[#allocation2 + $0x60] sm:$0xff]
        %v442 = vld [vmem:[#allocation2 + $0x68] sm:$0xff]
        %v443 = vld [vmem:[#allocation2 + $0x70] sm:$0xff]
        %456 = vrot.lane.b32.xlu0 %v432, 16
        %v457 = vpop.permute.xlu0 %456
        %458 = vrot.lane.b32.xlu0 %v433, 16
        %v459 = vpop.permute.xlu0 %458
        %460 = vrot.lane.b32.xlu0 %v434, 16
        %v461 = vpop.permute.xlu0 %460
        %462 = vrot.lane.b32.xlu0 %v435, 16
        %v463 = vpop.permute.xlu0 %462
        %464 = vrot.lane.b32.xlu0 %v436, 16
        %v465 = vpop.permute.xlu0 %464
        %466 = vrot.lane.b32.xlu0 %v437, 16
        %v467 = vpop.permute.xlu0 %466
        %468 = vrot.lane.b32.xlu0 %v438, 16
        %v469 = vpop.permute.xlu0 %468
        %470 = vrot.lane.b32.xlu0 %v439, 16
        %v471 = vpop.permute.xlu0 %470
        %472 = vrot.lane.b32.xlu0 %v440, 16
        %v473 = vpop.permute.xlu0 %472
        %474 = vrot.lane.b32.xlu0 %v441, 16
        %v475 = vpop.permute.xlu0 %474
        %476 = vrot.lane.b32.xlu0 %v442, 16
        %v477 = vpop.permute.xlu0 %476
        %478 = vrot.lane.b32.xlu0 %v443, 16
        %v479 = vpop.permute.xlu0 %478
        %vm480 = vcmask 130048
        %v481 = vsel %vm480, %v457, %v459
        %v482 = vsel %vm480, %v459, %v461
        %v483 = vsel %vm480, %v463, %v465
        %v484 = vsel %vm480, %v465, %v467
        %v485 = vsel %vm480, %v469, %v471
        %v486 = vsel %vm480, %v471, %v473
        %v487 = vsel %vm480, %v475, %v477
        %v488 = vsel %vm480, %v477, %v479
        %497 = vst [vmem:[#allocation3 + $0x40] sm:$0xff] %v481
        %498 = vst [vmem:[#allocation3 + $0x48] sm:$0xff] %v482
        %499 = vst [vmem:[#allocation3 + $0x50] sm:$0xff] %v483
        %500 = vst [vmem:[#allocation3 + $0x58] sm:$0xff] %v484
        %501 = vst [vmem:[#allocation3 + $0x60] sm:$0xff] %v485
        %502 = vst [vmem:[#allocation3 + $0x68] sm:$0xff] %v486
        %503 = vst [vmem:[#allocation3 + $0x70] sm:$0xff] %v487
        %504 = vst [vmem:[#allocation3 + $0x78] sm:$0xff] %v488
        %v505 = vld [vmem:[#allocation2] sm:$0xff]
        %v506 = vld [vmem:[#allocation2 + $0x8] sm:$0xff]
        %v507 = vld [vmem:[#allocation2 + $0x10] sm:$0xff]
        %v508 = vld [vmem:[#allocation2 + $0x20] sm:$0xff]
        %v509 = vld [vmem:[#allocation2 + $0x28] sm:$0xff]
        %v510 = vld [vmem:[#allocation2 + $0x30] sm:$0xff]
        %v511 = vld [vmem:[#allocation2 + $0x40] sm:$0xff]
        %v512 = vld [vmem:[#allocation2 + $0x48] sm:$0xff]
        %v513 = vld [vmem:[#allocation2 + $0x50] sm:$0xff]
        %v514 = vld [vmem:[#allocation2 + $0x60] sm:$0xff]
        %v515 = vld [vmem:[#allocation2 + $0x68] sm:$0xff]
        %v516 = vld [vmem:[#allocation2 + $0x70] sm:$0xff]
        %s517 = scalar_lea.vmem %s4, 2
        %v518 = vld [vmem:[%s517] sm:$0x3]
        %v520 = vlaneseq
        %v521 = vshrl.u32 %v520, 7
        %v522 = vsub.s32 0, %v521
        %v523 = vrot.slane %v518, %v522
        %v524 = vlaneseq
        %v525 = vshrl.u32 %v524, 7
        %v526 = vsub.s32 1, %v525
        %v527 = vrot.slane %v518, %v526
        %528 = vrot.lane.b32.xlu0 %v523, 113
        %v529 = vpop.permute.xlu0 %528
        %530 = vrot.lane.b32.xlu0 %v527, 113
        %v531 = vpop.permute.xlu0 %530
        %vm532 = vcmask 924672
        %v533 = vsel %vm532, %v529, %v531
        %v537 = vmul.f32 %v505, %v529
        %v538 = vmul.f32 %v506, %v533
        %v539 = vmul.f32 %v507, %v531
        %v540 = vmul.f32 %v508, %v529
        %v541 = vmul.f32 %v509, %v533
        %v542 = vmul.f32 %v510, %v531
        %v543 = vmul.f32 %v511, %v529
        %v544 = vmul.f32 %v512, %v533
        %v545 = vmul.f32 %v513, %v531
        %v546 = vmul.f32 %v514, %v529
        %v547 = vmul.f32 %v515, %v533
        %v548 = vmul.f32 %v516, %v531
        %561 = vrot.lane.b32.xlu0 %v537, 15
        %v562 = vpop.permute.xlu0 %561
        %563 = vrot.lane.b32.xlu0 %v538, 15
        %v564 = vpop.permute.xlu0 %563
        %565 = vrot.lane.b32.xlu0 %v539, 15
        %v566 = vpop.permute.xlu0 %565
        %567 = vrot.lane.b32.xlu0 %v540, 15
        %v568 = vpop.permute.xlu0 %567
        %569 = vrot.lane.b32.xlu0 %v541, 15
        %v570 = vpop.permute.xlu0 %569
        %571 = vrot.lane.b32.xlu0 %v542, 15
        %v572 = vpop.permute.xlu0 %571
        %573 = vrot.lane.b32.xlu0 %v543, 15
        %v574 = vpop.permute.xlu0 %573
        %575 = vrot.lane.b32.xlu0 %v544, 15
        %v576 = vpop.permute.xlu0 %575
        %577 = vrot.lane.b32.xlu0 %v545, 15
        %v578 = vpop.permute.xlu0 %577
        %579 = vrot.lane.b32.xlu0 %v546, 15
        %v580 = vpop.permute.xlu0 %579
        %581 = vrot.lane.b32.xlu0 %v547, 15
        %v582 = vpop.permute.xlu0 %581
        %583 = vrot.lane.b32.xlu0 %v548, 15
        %v584 = vpop.permute.xlu0 %583
        %vm585 = vcmask 121856
        %v586 = vsel %vm585, %v562, %v564
        %v587 = vsel %vm585, %v564, %v566
        %v588 = vsel %vm585, %v568, %v570
        %v589 = vsel %vm585, %v570, %v572
        %v590 = vsel %vm585, %v574, %v576
        %v591 = vsel %vm585, %v576, %v578
        %v592 = vsel %vm585, %v580, %v582
        %v593 = vsel %vm585, %v582, %v584
        %602 = vst [vmem:[#allocation3 + $0x80] sm:$0xff] %v586
        %603 = vst [vmem:[#allocation3 + $0x88] sm:$0xff] %v587
        %604 = vst [vmem:[#allocation3 + $0x90] sm:$0xff] %v588
        %605 = vst [vmem:[#allocation3 + $0x98] sm:$0xff] %v589
        %606 = vst [vmem:[#allocation3 + $0xa0] sm:$0xff] %v590
        %607 = vst [vmem:[#allocation3 + $0xa8] sm:$0xff] %v591
        %608 = vst [vmem:[#allocation3 + $0xb0] sm:$0xff] %v592
        %609 = vst [vmem:[#allocation3 + $0xb8] sm:$0xff] %v593
        %v610 = vld [vmem:[#allocation2] sm:$0xff]
        %v611 = vld [vmem:[#allocation2 + $0x8] sm:$0xff]
        %v612 = vld [vmem:[#allocation2 + $0x10] sm:$0xff]
        %v613 = vld [vmem:[#allocation2 + $0x20] sm:$0xff]
        %v614 = vld [vmem:[#allocation2 + $0x28] sm:$0xff]
        %v615 = vld [vmem:[#allocation2 + $0x30] sm:$0xff]
        %v616 = vld [vmem:[#allocation2 + $0x40] sm:$0xff]
        %v617 = vld [vmem:[#allocation2 + $0x48] sm:$0xff]
        %v618 = vld [vmem:[#allocation2 + $0x50] sm:$0xff]
        %v619 = vld [vmem:[#allocation2 + $0x60] sm:$0xff]
        %v620 = vld [vmem:[#allocation2 + $0x68] sm:$0xff]
        %v621 = vld [vmem:[#allocation2 + $0x70] sm:$0xff]
        %v622 = vld [vmem:[%s4] sm:$0x3]
        %v624 = vlaneseq
        %v625 = vshrl.u32 %v624, 7
        %v626 = vsub.s32 0, %v625
        %v627 = vrot.slane %v622, %v626
        %v628 = vlaneseq
        %v629 = vshrl.u32 %v628, 7
        %v630 = vsub.s32 1, %v629
        %v631 = vrot.slane %v622, %v630
        %632 = vrot.lane.b32.xlu0 %v627, 127
        %v633 = vpop.permute.xlu0 %632
        %634 = vrot.lane.b32.xlu0 %v631, 127
        %v635 = vpop.permute.xlu0 %634
        %vm636 = vcmask 1039360
        %v637 = vsel %vm636, %v633, %v635
        %v641 = vmul.f32 %v610, %v633
        %v642 = vmul.f32 %v611, %v637
        %v643 = vmul.f32 %v612, %v635
        %v644 = vmul.f32 %v613, %v633
        %v645 = vmul.f32 %v614, %v637
        %v646 = vmul.f32 %v615, %v635
        %v647 = vmul.f32 %v616, %v633
        %v648 = vmul.f32 %v617, %v637
        %v649 = vmul.f32 %v618, %v635
        %v650 = vmul.f32 %v619, %v633
        %v651 = vmul.f32 %v620, %v637
        %v652 = vmul.f32 %v621, %v635
        %665 = vrot.lane.b32.xlu0 %v641, 1
        %v666 = vpop.permute.xlu0 %665
        %667 = vrot.lane.b32.xlu0 %v642, 1
        %v668 = vpop.permute.xlu0 %667
        %669 = vrot.lane.b32.xlu0 %v643, 1
        %v670 = vpop.permute.xlu0 %669
        %671 = vrot.lane.b32.xlu0 %v644, 1
        %v672 = vpop.permute.xlu0 %671
        %673 = vrot.lane.b32.xlu0 %v645, 1
        %v674 = vpop.permute.xlu0 %673
        %675 = vrot.lane.b32.xlu0 %v646, 1
        %v676 = vpop.permute.xlu0 %675
        %677 = vrot.lane.b32.xlu0 %v647, 1
        %v678 = vpop.permute.xlu0 %677
        %679 = vrot.lane.b32.xlu0 %v648, 1
        %v680 = vpop.permute.xlu0 %679
        %681 = vrot.lane.b32.xlu0 %v649, 1
        %v682 = vpop.permute.xlu0 %681
        %683 = vrot.lane.b32.xlu0 %v650, 1
        %v684 = vpop.permute.xlu0 %683
        %685 = vrot.lane.b32.xlu0 %v651, 1
        %v686 = vpop.permute.xlu0 %685
        %687 = vrot.lane.b32.xlu0 %v652, 1
        %v688 = vpop.permute.xlu0 %687
        %vm689 = vcmask 7168
        %v690 = vsel %vm689, %v666, %v668
        %v691 = vsel %vm689, %v668, %v670
        %v692 = vsel %vm689, %v672, %v674
        %v693 = vsel %vm689, %v674, %v676
        %v694 = vsel %vm689, %v678, %v680
        %v695 = vsel %vm689, %v680, %v682
        %v696 = vsel %vm689, %v684, %v686
        %v697 = vsel %vm689, %v686, %v688
        %706 = vst [vmem:[#allocation3 + $0xc0] sm:$0xff] %v690
        %707 = vst [vmem:[#allocation3 + $0xc8] sm:$0xff] %v691
        %708 = vst [vmem:[#allocation3 + $0xd0] sm:$0xff] %v692
        %709 = vst [vmem:[#allocation3 + $0xd8] sm:$0xff] %v693
        %710 = vst [vmem:[#allocation3 + $0xe0] sm:$0xff] %v694
        %711 = vst [vmem:[#allocation3 + $0xe8] sm:$0xff] %v695
        %712 = vst [vmem:[#allocation3 + $0xf0] sm:$0xff] %v696
        %713 = vst [vmem:[#allocation3 + $0xf8] sm:$0xff] %v697
        %v714 = vld [vmem:[#allocation2 + $0x8] sm:$0xff]
        %v715 = vld [vmem:[#allocation2 + $0x10] sm:$0xff]
        %v716 = vld [vmem:[#allocation2 + $0x28] sm:$0xff]
        %v717 = vld [vmem:[#allocation2 + $0x30] sm:$0xff]
        %v718 = vld [vmem:[#allocation2 + $0x48] sm:$0xff]
        %v719 = vld [vmem:[#allocation2 + $0x50] sm:$0xff]
        %v720 = vld [vmem:[#allocation2 + $0x68] sm:$0xff]
        %v721 = vld [vmem:[#allocation2 + $0x70] sm:$0xff]
        %722 = vst [vmem:[#allocation3 + $0x100] sm:$0xff] %v714
        %723 = vst [vmem:[#allocation3 + $0x108] sm:$0xff] %v715
        %724 = vst [vmem:[#allocation3 + $0x110] sm:$0xff] %v716
        %725 = vst [vmem:[#allocation3 + $0x118] sm:$0xff] %v717
        %726 = vst [vmem:[#allocation3 + $0x120] sm:$0xff] %v718
        %727 = vst [vmem:[#allocation3 + $0x128] sm:$0xff] %v719
        %728 = vst [vmem:[#allocation3 + $0x130] sm:$0xff] %v720
        %729 = vst [vmem:[#allocation3 + $0x138] sm:$0xff] %v721
        %v730 = vld [vmem:[#allocation2 + $0x8] sm:$0xff]
        %v731 = vld [vmem:[#allocation2 + $0x10] sm:$0xff]
        %v732 = vld [vmem:[#allocation2 + $0x18] sm:$0xff]
        %v733 = vld [vmem:[#allocation2 + $0x28] sm:$0xff]
        %v734 = vld [vmem:[#allocation2 + $0x30] sm:$0xff]
        %v735 = vld [vmem:[#allocation2 + $0x38] sm:$0xff]
        %v736 = vld [vmem:[#allocation2 + $0x48] sm:$0xff]
        %v737 = vld [vmem:[#allocation2 + $0x50] sm:$0xff]
        %v738 = vld [vmem:[#allocation2 + $0x58] sm:$0xff]
        %v739 = vld [vmem:[#allocation2 + $0x68] sm:$0xff]
        %v740 = vld [vmem:[#allocation2 + $0x70] sm:$0xff]
        %v741 = vld [vmem:[#allocation2 + $0x78] sm:$0xff]
        %v742 = vld [vmem:[%s517] sm:$0x3]
        %v744 = vlaneseq
        %v745 = vshrl.u32 %v744, 7
        %v746 = vsub.s32 0, %v745
        %v747 = vrot.slane %v742, %v746
        %v748 = vlaneseq
        %v749 = vshrl.u32 %v748, 7
        %v750 = vsub.s32 1, %v749
        %v751 = vrot.slane %v742, %v750
        %752 = vrot.lane.b32.xlu0 %v747, 1
        %v753 = vpop.permute.xlu0 %752
        %754 = vrot.lane.b32.xlu0 %v751, 1
        %v755 = vpop.permute.xlu0 %754
        %v756 = vsel %vm689, %v753, %v755
        %v760 = vmul.f32 %v730, %v753
        %v761 = vmul.f32 %v731, %v756
        %v762 = vmul.f32 %v732, %v755
        %v763 = vmul.f32 %v733, %v753
        %v764 = vmul.f32 %v734, %v756
        %v765 = vmul.f32 %v735, %v755
        %v766 = vmul.f32 %v736, %v753
        %v767 = vmul.f32 %v737, %v756
        %v768 = vmul.f32 %v738, %v755
        %v769 = vmul.f32 %v739, %v753
        %v770 = vmul.f32 %v740, %v756
        %v771 = vmul.f32 %v741, %v755
        %784 = vrot.lane.b32.xlu0 %v760, 127
        %v785 = vpop.permute.xlu0 %784
        %786 = vrot.lane.b32.xlu0 %v761, 127
        %v787 = vpop.permute.xlu0 %786
        %788 = vrot.lane.b32.xlu0 %v762, 127
        %v789 = vpop.permute.xlu0 %788
        %790 = vrot.lane.b32.xlu0 %v763, 127
        %v791 = vpop.permute.xlu0 %790
        %792 = vrot.lane.b32.xlu0 %v764, 127
        %v793 = vpop.permute.xlu0 %792
        %794 = vrot.lane.b32.xlu0 %v765, 127
        %v795 = vpop.permute.xlu0 %794
        %796 = vrot.lane.b32.xlu0 %v766, 127
        %v797 = vpop.permute.xlu0 %796
        %798 = vrot.lane.b32.xlu0 %v767, 127
        %v799 = vpop.permute.xlu0 %798
        %800 = vrot.lane.b32.xlu0 %v768, 127
        %v801 = vpop.permute.xlu0 %800
        %802 = vrot.lane.b32.xlu0 %v769, 127
        %v803 = vpop.permute.xlu0 %802
        %804 = vrot.lane.b32.xlu0 %v770, 127
        %v805 = vpop.permute.xlu0 %804
        %806 = vrot.lane.b32.xlu0 %v771, 127
        %v807 = vpop.permute.xlu0 %806
        %v808 = vsel %vm636, %v785, %v787
        %v809 = vsel %vm636, %v787, %v789
        %v810 = vsel %vm636, %v791, %v793
        %v811 = vsel %vm636, %v793, %v795
        %v812 = vsel %vm636, %v797, %v799
        %v813 = vsel %vm636, %v799, %v801
        %v814 = vsel %vm636, %v803, %v805
        %v815 = vsel %vm636, %v805, %v807
        %824 = vst [vmem:[#allocation3 + $0x140] sm:$0xff] %v808
        %825 = vst [vmem:[#allocation3 + $0x148] sm:$0xff] %v809
        %826 = vst [vmem:[#allocation3 + $0x150] sm:$0xff] %v810
        %827 = vst [vmem:[#allocation3 + $0x158] sm:$0xff] %v811
        %828 = vst [vmem:[#allocation3 + $0x160] sm:$0xff] %v812
        %829 = vst [vmem:[#allocation3 + $0x168] sm:$0xff] %v813
        %830 = vst [vmem:[#allocation3 + $0x170] sm:$0xff] %v814
        %831 = vst [vmem:[#allocation3 + $0x178] sm:$0xff] %v815
        %v832 = vld [vmem:[#allocation2 + $0x8] sm:$0xff]
        %v833 = vld [vmem:[#allocation2 + $0x10] sm:$0xff]
        %v834 = vld [vmem:[#allocation2 + $0x18] sm:$0xff]
        %v835 = vld [vmem:[#allocation2 + $0x28] sm:$0xff]
        %v836 = vld [vmem:[#allocation2 + $0x30] sm:$0xff]
        %v837 = vld [vmem:[#allocation2 + $0x38] sm:$0xff]
        %v838 = vld [vmem:[#allocation2 + $0x48] sm:$0xff]
        %v839 = vld [vmem:[#allocation2 + $0x50] sm:$0xff]
        %v840 = vld [vmem:[#allocation2 + $0x58] sm:$0xff]
        %v841 = vld [vmem:[#allocation2 + $0x68] sm:$0xff]
        %v842 = vld [vmem:[#allocation2 + $0x70] sm:$0xff]
        %v843 = vld [vmem:[#allocation2 + $0x78] sm:$0xff]
        %v844 = vld [vmem:[%s4] sm:$0x3]
        %v846 = vlaneseq
        %v847 = vshrl.u32 %v846, 7
        %v848 = vsub.s32 0, %v847
        %v849 = vrot.slane %v844, %v848
        %v850 = vlaneseq
        %v851 = vshrl.u32 %v850, 7
        %v852 = vsub.s32 1, %v851
        %v853 = vrot.slane %v844, %v852
        %854 = vrot.lane.b32.xlu0 %v849, 15
        %v855 = vpop.permute.xlu0 %854
        %856 = vrot.lane.b32.xlu0 %v853, 15
        %v857 = vpop.permute.xlu0 %856
        %v858 = vsel %vm585, %v855, %v857
        %v862 = vmul.f32 %v832, %v855
        %v863 = vmul.f32 %v833, %v858
        %v864 = vmul.f32 %v834, %v857
        %v865 = vmul.f32 %v835, %v855
        %v866 = vmul.f32 %v836, %v858
        %v867 = vmul.f32 %v837, %v857
        %v868 = vmul.f32 %v838, %v855
        %v869 = vmul.f32 %v839, %v858
        %v870 = vmul.f32 %v840, %v857
        %v871 = vmul.f32 %v841, %v855
        %v872 = vmul.f32 %v842, %v858
        %v873 = vmul.f32 %v843, %v857
        %886 = vrot.lane.b32.xlu0 %v862, 113
        %v887 = vpop.permute.xlu0 %886
        %888 = vrot.lane.b32.xlu0 %v863, 113
        %v889 = vpop.permute.xlu0 %888
        %890 = vrot.lane.b32.xlu0 %v864, 113
        %v891 = vpop.permute.xlu0 %890
        %892 = vrot.lane.b32.xlu0 %v865, 113
        %v893 = vpop.permute.xlu0 %892
        %894 = vrot.lane.b32.xlu0 %v866, 113
        %v895 = vpop.permute.xlu0 %894
        %896 = vrot.lane.b32.xlu0 %v867, 113
        %v897 = vpop.permute.xlu0 %896
        %898 = vrot.lane.b32.xlu0 %v868, 113
        %v899 = vpop.permute.xlu0 %898
        %900 = vrot.lane.b32.xlu0 %v869, 113
        %v901 = vpop.permute.xlu0 %900
        %902 = vrot.lane.b32.xlu0 %v870, 113
        %v903 = vpop.permute.xlu0 %902
        %904 = vrot.lane.b32.xlu0 %v871, 113
        %v905 = vpop.permute.xlu0 %904
        %906 = vrot.lane.b32.xlu0 %v872, 113
        %v907 = vpop.permute.xlu0 %906
        %908 = vrot.lane.b32.xlu0 %v873, 113
        %v909 = vpop.permute.xlu0 %908
        %v910 = vsel %vm532, %v887, %v889
        %v911 = vsel %vm532, %v889, %v891
        %v912 = vsel %vm532, %v893, %v895
        %v913 = vsel %vm532, %v895, %v897
        %v914 = vsel %vm532, %v899, %v901
        %v915 = vsel %vm532, %v901, %v903
        %v916 = vsel %vm532, %v905, %v907
        %v917 = vsel %vm532, %v907, %v909
        %926 = vst [vmem:[#allocation3 + $0x180] sm:$0xff] %v910
        %927 = vst [vmem:[#allocation3 + $0x188] sm:$0xff] %v911
        %928 = vst [vmem:[#allocation3 + $0x190] sm:$0xff] %v912
        %929 = vst [vmem:[#allocation3 + $0x198] sm:$0xff] %v913
        %930 = vst [vmem:[#allocation3 + $0x1a0] sm:$0xff] %v914
        %931 = vst [vmem:[#allocation3 + $0x1a8] sm:$0xff] %v915
        %932 = vst [vmem:[#allocation3 + $0x1b0] sm:$0xff] %v916
        %933 = vst [vmem:[#allocation3 + $0x1b8] sm:$0xff] %v917
        %v934 = vld [vmem:[#allocation2 + $0x8] sm:$0xff]
        %v935 = vld [vmem:[#allocation2 + $0x10] sm:$0xff]
        %v936 = vld [vmem:[#allocation2 + $0x18] sm:$0xff]
        %v937 = vld [vmem:[#allocation2 + $0x28] sm:$0xff]
        %v938 = vld [vmem:[#allocation2 + $0x30] sm:$0xff]
        %v939 = vld [vmem:[#allocation2 + $0x38] sm:$0xff]
        %v940 = vld [vmem:[#allocation2 + $0x48] sm:$0xff]
        %v941 = vld [vmem:[#allocation2 + $0x50] sm:$0xff]
        %v942 = vld [vmem:[#allocation2 + $0x58] sm:$0xff]
        %v943 = vld [vmem:[#allocation2 + $0x68] sm:$0xff]
        %v944 = vld [vmem:[#allocation2 + $0x70] sm:$0xff]
        %v945 = vld [vmem:[#allocation2 + $0x78] sm:$0xff]
        %958 = vrot.lane.b32.xlu0 %v934, 112
        %v959 = vpop.permute.xlu0 %958
        %960 = vrot.lane.b32.xlu0 %v935, 112
        %v961 = vpop.permute.xlu0 %960
        %962 = vrot.lane.b32.xlu0 %v936, 112
        %v963 = vpop.permute.xlu0 %962
        %964 = vrot.lane.b32.xlu0 %v937, 112
        %v965 = vpop.permute.xlu0 %964
        %966 = vrot.lane.b32.xlu0 %v938, 112
        %v967 = vpop.permute.xlu0 %966
        %968 = vrot.lane.b32.xlu0 %v939, 112
        %v969 = vpop.permute.xlu0 %968
        %970 = vrot.lane.b32.xlu0 %v940, 112
        %v971 = vpop.permute.xlu0 %970
        %972 = vrot.lane.b32.xlu0 %v941, 112
        %v973 = vpop.permute.xlu0 %972
        %974 = vrot.lane.b32.xlu0 %v942, 112
        %v975 = vpop.permute.xlu0 %974
        %976 = vrot.lane.b32.xlu0 %v943, 112
        %v977 = vpop.permute.xlu0 %976
        %978 = vrot.lane.b32.xlu0 %v944, 112
        %v979 = vpop.permute.xlu0 %978
        %980 = vrot.lane.b32.xlu0 %v945, 112
        %v981 = vpop.permute.xlu0 %980
        %vm982 = vcmask 916480
        %v983 = vsel %vm982, %v959, %v961
        %v984 = vsel %vm982, %v961, %v963
        %v985 = vsel %vm982, %v965, %v967
        %v986 = vsel %vm982, %v967, %v969
        %v987 = vsel %vm982, %v971, %v973
        %v988 = vsel %vm982, %v973, %v975
        %v989 = vsel %vm982, %v977, %v979
        %v990 = vsel %vm982, %v979, %v981
        %999 = vst [vmem:[#allocation3 + $0x1c0] sm:$0xff] %v983
        %1000 = vst [vmem:[#allocation3 + $0x1c8] sm:$0xff] %v984
        %1001 = vst [vmem:[#allocation3 + $0x1d0] sm:$0xff] %v985
        %1002 = vst [vmem:[#allocation3 + $0x1d8] sm:$0xff] %v986
        %1003 = vst [vmem:[#allocation3 + $0x1e0] sm:$0xff] %v987
        %1004 = vst [vmem:[#allocation3 + $0x1e8] sm:$0xff] %v988
        %1005 = vst [vmem:[#allocation3 + $0x1f0] sm:$0xff] %v989
        %1006 = vst [vmem:[#allocation3 + $0x1f8] sm:$0xff] %v990
        %v1007 = vld [vmem:[#allocation2 + $0x8] sm:$0xff]
        %v1008 = vld [vmem:[#allocation2 + $0x10] sm:$0xff]
        %v1009 = vld [vmem:[#allocation2 + $0x18] sm:$0xff]
        %v1010 = vld [vmem:[#allocation2 + $0x28] sm:$0xff]
        %v1011 = vld [vmem:[#allocation2 + $0x30] sm:$0xff]
        %v1012 = vld [vmem:[#allocation2 + $0x38] sm:$0xff]
        %v1013 = vld [vmem:[#allocation2 + $0x48] sm:$0xff]
        %v1014 = vld [vmem:[#allocation2 + $0x50] sm:$0xff]
        %v1015 = vld [vmem:[#allocation2 + $0x58] sm:$0xff]
        %v1016 = vld [vmem:[#allocation2 + $0x68] sm:$0xff]
        %v1017 = vld [vmem:[#allocation2 + $0x70] sm:$0xff]
        %v1018 = vld [vmem:[#allocation2 + $0x78] sm:$0xff]
        %v1019 = vld [vmem:[%s517] sm:$0x3]
        %v1021 = vlaneseq
        %v1022 = vshrl.u32 %v1021, 7
        %v1023 = vsub.s32 0, %v1022
        %v1024 = vrot.slane %v1019, %v1023
        %v1025 = vlaneseq
        %v1026 = vshrl.u32 %v1025, 7
        %v1027 = vsub.s32 1, %v1026
        %v1028 = vrot.slane %v1019, %v1027
        %1029 = vrot.lane.b32.xlu0 %v1024, 17
        %v1030 = vpop.permute.xlu0 %1029
        %1031 = vrot.lane.b32.xlu0 %v1028, 17
        %v1032 = vpop.permute.xlu0 %1031
        %v1033 = vsel %vm407, %v1030, %v1032
        %v1037 = vmul.f32 %v1007, %v1030
        %v1038 = vmul.f32 %v1008, %v1033
        %v1039 = vmul.f32 %v1009, %v1032
        %v1040 = vmul.f32 %v1010, %v1030
        %v1041 = vmul.f32 %v1011, %v1033
        %v1042 = vmul.f32 %v1012, %v1032
        %v1043 = vmul.f32 %v1013, %v1030
        %v1044 = vmul.f32 %v1014, %v1033
        %v1045 = vmul.f32 %v1015, %v1032
        %v1046 = vmul.f32 %v1016, %v1030
        %v1047 = vmul.f32 %v1017, %v1033
        %v1048 = vmul.f32 %v1018, %v1032
        %1061 = vrot.lane.b32.xlu0 %v1037, 111
        %v1062 = vpop.permute.xlu0 %1061
        %1063 = vrot.lane.b32.xlu0 %v1038, 111
        %v1064 = vpop.permute.xlu0 %1063
        %1065 = vrot.lane.b32.xlu0 %v1039, 111
        %v1066 = vpop.permute.xlu0 %1065
        %1067 = vrot.lane.b32.xlu0 %v1040, 111
        %v1068 = vpop.permute.xlu0 %1067
        %1069 = vrot.lane.b32.xlu0 %v1041, 111
        %v1070 = vpop.permute.xlu0 %1069
        %1071 = vrot.lane.b32.xlu0 %v1042, 111
        %v1072 = vpop.permute.xlu0 %1071
        %1073 = vrot.lane.b32.xlu0 %v1043, 111
        %v1074 = vpop.permute.xlu0 %1073
        %1075 = vrot.lane.b32.xlu0 %v1044, 111
        %v1076 = vpop.permute.xlu0 %1075
        %1077 = vrot.lane.b32.xlu0 %v1045, 111
        %v1078 = vpop.permute.xlu0 %1077
        %1079 = vrot.lane.b32.xlu0 %v1046, 111
        %v1080 = vpop.permute.xlu0 %1079
        %1081 = vrot.lane.b32.xlu0 %v1047, 111
        %v1082 = vpop.permute.xlu0 %1081
        %1083 = vrot.lane.b32.xlu0 %v1048, 111
        %v1084 = vpop.permute.xlu0 %1083
        %v1085 = vsel %vm354, %v1062, %v1064
        %v1086 = vsel %vm354, %v1064, %v1066
        %v1087 = vsel %vm354, %v1068, %v1070
        %v1088 = vsel %vm354, %v1070, %v1072
        %v1089 = vsel %vm354, %v1074, %v1076
        %v1090 = vsel %vm354, %v1076, %v1078
        %v1091 = vsel %vm354, %v1080, %v1082
        %v1092 = vsel %vm354, %v1082, %v1084
        %1101 = vst [vmem:[#allocation3 + $0x200] sm:$0xff] %v1085
        %1102 = vst [vmem:[#allocation3 + $0x208] sm:$0xff] %v1086
        %1103 = vst [vmem:[#allocation3 + $0x210] sm:$0xff] %v1087
        %1104 = vst [vmem:[#allocation3 + $0x218] sm:$0xff] %v1088
        %1105 = vst [vmem:[#allocation3 + $0x220] sm:$0xff] %v1089
        %1106 = vst [vmem:[#allocation3 + $0x228] sm:$0xff] %v1090
        %1107 = vst [vmem:[#allocation3 + $0x230] sm:$0xff] %v1091
        %1108 = vst [vmem:[#allocation3 + $0x238] sm:$0xff] %v1092
        %v1109 = vld [vmem:[#allocation7] sm:$0xff]
        %v1110 = vld [vmem:[#allocation7 + $0x8] sm:$0xff]
        %v1111 = vld [vmem:[#allocation7 + $0x10] sm:$0xff]
        %v1112 = vld [vmem:[#allocation7 + $0x18] sm:$0xff]
        %v1113 = vld [vmem:[#allocation7 + $0x20] sm:$0xff]
        %v1114 = vld [vmem:[#allocation7 + $0x28] sm:$0xff]
        %v1115 = vld [vmem:[#allocation7 + $0x30] sm:$0xff]
        %v1116 = vld [vmem:[#allocation7 + $0x38] sm:$0xff]
        %v1117 = vld [vmem:[#allocation7 + $0x40] sm:$0xff]
        %v1118 = vld [vmem:[#allocation7 + $0x48] sm:$0xff]
        %v1119 = vld [vmem:[#allocation7 + $0x50] sm:$0xff]
        %v1120 = vld [vmem:[#allocation7 + $0x58] sm:$0xff]
        %v1121 = vld [vmem:[#allocation3] sm:$0xff]
        %v1122 = vld [vmem:[#allocation3 + $0x8] sm:$0xff]
        %v1123 = vld [vmem:[#allocation3 + $0x10] sm:$0xff]
        %v1124 = vld [vmem:[#allocation3 + $0x18] sm:$0xff]
        %v1125 = vld [vmem:[#allocation3 + $0x20] sm:$0xff]
        %v1126 = vld [vmem:[#allocation3 + $0x28] sm:$0xff]
        %v1127 = vld [vmem:[#allocation3 + $0x30] sm:$0xff]
        %v1128 = vld [vmem:[#allocation3 + $0x38] sm:$0xff]
        %v1129 = vld [vmem:[#allocation3 + $0x40] sm:$0xff]
        %v1130 = vld [vmem:[#allocation3 + $0x48] sm:$0xff]
        %v1131 = vld [vmem:[#allocation3 + $0x50] sm:$0xff]
        %v1132 = vld [vmem:[#allocation3 + $0x58] sm:$0xff]
        %v1133 = vld [vmem:[#allocation3 + $0x60] sm:$0xff]
        %v1134 = vld [vmem:[#allocation3 + $0x68] sm:$0xff]
        %v1135 = vld [vmem:[#allocation3 + $0x70] sm:$0xff]
        %v1136 = vld [vmem:[#allocation3 + $0x78] sm:$0xff]
        %v1137 = vld [vmem:[#allocation3 + $0x80] sm:$0xff]
        %v1138 = vld [vmem:[#allocation3 + $0x88] sm:$0xff]
        %v1139 = vld [vmem:[#allocation3 + $0x90] sm:$0xff]
        %v1140 = vld [vmem:[#allocation3 + $0x98] sm:$0xff]
        %v1141 = vld [vmem:[#allocation3 + $0xa0] sm:$0xff]
        %v1142 = vld [vmem:[#allocation3 + $0xa8] sm:$0xff]
        %v1143 = vld [vmem:[#allocation3 + $0xb0] sm:$0xff]
        %v1144 = vld [vmem:[#allocation3 + $0xb8] sm:$0xff]
        %v1145 = vld [vmem:[#allocation3 + $0xc0] sm:$0xff]
        %v1146 = vld [vmem:[#allocation3 + $0xc8] sm:$0xff]
        %v1147 = vld [vmem:[#allocation3 + $0xd0] sm:$0xff]
        %v1148 = vld [vmem:[#allocation3 + $0xd8] sm:$0xff]
        %v1149 = vld [vmem:[#allocation3 + $0xe0] sm:$0xff]
        %v1150 = vld [vmem:[#allocation3 + $0xe8] sm:$0xff]
        %v1151 = vld [vmem:[#allocation3 + $0xf0] sm:$0xff]
        %v1152 = vld [vmem:[#allocation3 + $0xf8] sm:$0xff]
        %v1153 = vld [vmem:[#allocation3 + $0x100] sm:$0xff]
        %v1154 = vld [vmem:[#allocation3 + $0x108] sm:$0xff]
        %v1155 = vld [vmem:[#allocation3 + $0x110] sm:$0xff]
        %v1156 = vld [vmem:[#allocation3 + $0x118] sm:$0xff]
        %v1157 = vld [vmem:[#allocation3 + $0x120] sm:$0xff]
        %v1158 = vld [vmem:[#allocation3 + $0x128] sm:$0xff]
        %v1159 = vld [vmem:[#allocation3 + $0x130] sm:$0xff]
        %v1160 = vld [vmem:[#allocation3 + $0x138] sm:$0xff]
        %v1161 = vld [vmem:[#allocation3 + $0x140] sm:$0xff]
        %v1162 = vld [vmem:[#allocation3 + $0x148] sm:$0xff]
        %v1163 = vld [vmem:[#allocation3 + $0x150] sm:$0xff]
        %v1164 = vld [vmem:[#allocation3 + $0x158] sm:$0xff]
        %v1165 = vld [vmem:[#allocation3 + $0x160] sm:$0xff]
        %v1166 = vld [vmem:[#allocation3 + $0x168] sm:$0xff]
        %v1167 = vld [vmem:[#allocation3 + $0x170] sm:$0xff]
        %v1168 = vld [vmem:[#allocation3 + $0x178] sm:$0xff]
        %v1169 = vld [vmem:[#allocation3 + $0x180] sm:$0xff]
        %v1170 = vld [vmem:[#allocation3 + $0x188] sm:$0xff]
        %v1171 = vld [vmem:[#allocation3 + $0x190] sm:$0xff]
        %v1172 = vld [vmem:[#allocation3 + $0x198] sm:$0xff]
        %v1173 = vld [vmem:[#allocation3 + $0x1a0] sm:$0xff]
        %v1174 = vld [vmem:[#allocation3 + $0x1a8] sm:$0xff]
        %v1175 = vld [vmem:[#allocation3 + $0x1b0] sm:$0xff]
        %v1176 = vld [vmem:[#allocation3 + $0x1b8] sm:$0xff]
        %v1177 = vld [vmem:[#allocation3 + $0x1c0] sm:$0xff]
        %v1178 = vld [vmem:[#allocation3 + $0x1c8] sm:$0xff]
        %v1179 = vld [vmem:[#allocation3 + $0x1d0] sm:$0xff]
        %v1180 = vld [vmem:[#allocation3 + $0x1d8] sm:$0xff]
        %v1181 = vld [vmem:[#allocation3 + $0x1e0] sm:$0xff]
        %v1182 = vld [vmem:[#allocation3 + $0x1e8] sm:$0xff]
        %v1183 = vld [vmem:[#allocation3 + $0x1f0] sm:$0xff]
        %v1184 = vld [vmem:[#allocation3 + $0x1f8] sm:$0xff]
        %v1185 = vld [vmem:[#allocation3 + $0x200] sm:$0xff]
        %v1186 = vld [vmem:[#allocation3 + $0x208] sm:$0xff]
        %v1187 = vld [vmem:[#allocation3 + $0x210] sm:$0xff]
        %v1188 = vld [vmem:[#allocation3 + $0x218] sm:$0xff]
        %v1189 = vld [vmem:[#allocation3 + $0x220] sm:$0xff]
        %v1190 = vld [vmem:[#allocation3 + $0x228] sm:$0xff]
        %v1191 = vld [vmem:[#allocation3 + $0x230] sm:$0xff]
        %v1192 = vld [vmem:[#allocation3 + $0x238] sm:$0xff]
        %v1193 = vld [vmem:[%s3] sm:$0xff]
        %v1194 = vld [vmem:[%s3 + $0x8] sm:$0xff]
        %v1195 = vld [vmem:[%s3 + $0x10] sm:$0xff]
        %v1196 = vld [vmem:[%s3 + $0x18] sm:$0xff]
        %1198 = vset.pattern.permute.xlu0 0
        %1199 = vperm.xlu0 %1198, %v1193
        %v1200 = vpop.permute.xlu0 %1199
        %1203 = vset.pattern.permute.xlu0 0
        %1204 = vperm.xlu0 %1203, %v1194
        %v1205 = vpop.permute.xlu0 %1204
        %1208 = vset.pattern.permute.xlu0 0
        %1209 = vperm.xlu0 %1208, %v1195
        %v1210 = vpop.permute.xlu0 %1209
        %1213 = vset.pattern.permute.xlu0 0
        %1214 = vperm.xlu0 %1213, %v1196
        %v1215 = vpop.permute.xlu0 %1214
        %vm1217 = vcmask 261120
        %v1219 = vsel %vm1217, %v1111, 0
        %v1222 = vsel %vm1217, %v1114, 0
        %v1225 = vsel %vm1217, %v1117, 0
        %v1228 = vsel %vm1217, %v1120, 0
        %1230 = vmatprep.subr.mxu0 %v1152
        %1231 = vmatpush1.msra.mxu0 %v1151
        %1232 = vmatprep.subr.mxu0 %v1150
        %1233 = vmatpush1.msra.mxu0 %v1149
        %1234 = vmatprep.subr.mxu0 %v1148
        %1235 = vmatpush1.msra.mxu0 %v1147
        %1236 = vmatprep.subr.mxu0 %v1146
        %1237 = vmatpush1.msra.mxu0 %v1145
        %1238 = vmatprep.subr.mxu0 %v1144
        %1239 = vmatpush1.msra.mxu0 %v1143
        %1240 = vmatprep.subr.mxu0 %v1142
        %1241 = vmatpush1.msra.mxu0 %v1141
        %1242 = vmatprep.subr.mxu0 %v1140
        %1243 = vmatpush1.msra.mxu0 %v1139
        %1244 = vmatprep.subr.mxu0 %v1138
        %1245 = vmatpush1.msra.mxu0 %v1137
        %1246 = vmatprep.subr.mxu0 %v1136
        %1247 = vmatpush1.msra.mxu0 %v1135
        %1248 = vmatprep.subr.mxu0 %v1134
        %1249 = vmatpush1.msra.mxu0 %v1133
        %1250 = vmatprep.subr.mxu0 %v1132
        %1251 = vmatpush1.msra.mxu0 %v1131
        %1252 = vmatprep.subr.mxu0 %v1130
        %1253 = vmatpush1.msra.mxu0 %v1129
        %1254 = vmatprep.subr.mxu0 %v1128
        %1255 = vmatpush1.msra.mxu0 %v1127
        %1256 = vmatprep.subr.mxu0 %v1126
        %1257 = vmatpush1.msra.mxu0 %v1125
        %1258 = vmatprep.subr.mxu0 %v1124
        %1259 = vmatpush1.msra.mxu0 %v1123
        %1260 = vmatprep.subr.mxu0 %v1122
        %1261 = vmatpush1.msra.mxu0 %v1121
        %1262 = vmatprep.subr.mxu0 %v1184
        %1263 = vmatpush2.msra.mxu0 %v1183
        %1264 = vmatprep.subr.mxu0 %v1182
        %1265 = vmatpush2.msra.mxu0 %v1181
        %1266 = vmatprep.subr.mxu0 %v1180
        %1267 = vmatpush2.msra.mxu0 %v1179
        %1268 = vmatprep.subr.mxu0 %v1178
        %1269 = vmatpush2.msra.mxu0 %v1177
        %1270 = vmatprep.subr.mxu0 %v1176
        %1271 = vmatpush2.msra.mxu0 %v1175
        %1272 = vmatprep.subr.mxu0 %v1174
        %1273 = vmatpush2.msra.mxu0 %v1173
        %1274 = vmatprep.subr.mxu0 %v1172
        %1275 = vmatpush2.msra.mxu0 %v1171
        %1276 = vmatprep.subr.mxu0 %v1170
        %1277 = vmatpush2.msra.mxu0 %v1169
        %1278 = vmatprep.subr.mxu0 %v1168
        %1279 = vmatpush2.msra.mxu0 %v1167
        %1280 = vmatprep.subr.mxu0 %v1166
        %1281 = vmatpush2.msra.mxu0 %v1165
        %1282 = vmatprep.subr.mxu0 %v1164
        %1283 = vmatpush2.msra.mxu0 %v1163
        %1284 = vmatprep.subr.mxu0 %v1162
        %1285 = vmatpush2.msra.mxu0 %v1161
        %1286 = vmatprep.subr.mxu0 %v1160
        %1287 = vmatpush2.msra.mxu0 %v1159
        %1288 = vmatprep.subr.mxu0 %v1158
        %1289 = vmatpush2.msra.mxu0 %v1157
        %1290 = vmatprep.subr.mxu0 %v1156
        %1291 = vmatpush2.msra.mxu0 %v1155
        %1292 = vmatprep.subr.mxu0 %v1154
        %1293 = vmatpush2.msra.mxu0 %v1153
        %1294 = vmatprep.mubr.f32.mxu0 %v1110
        %1295 = vmatmul.mubr.f32.gmra.mxu0 %v1109
        %v1296 = vpop.f32.mrf.mxu0
        %v1297 = vadd.f32 %v1200, %v1296
        %v1298 = vpop.f32.mrf.mxu0
        %v1299 = vadd.f32 %v1200, %v1298
        %1300 = vmatprep.mubr.f32.mxu0 %v1113
        %1301 = vmatmul.mubr.f32.gmra.mxu0 %v1112
        %v1302 = vpop.f32.mrf.mxu0
        %v1303 = vadd.f32 %v1205, %v1302
        %v1304 = vpop.f32.mrf.mxu0
        %v1305 = vadd.f32 %v1205, %v1304
        %1306 = vmatprep.mubr.f32.mxu0 %v1116
        %1307 = vmatmul.mubr.f32.gmra.mxu0 %v1115
        %v1308 = vpop.f32.mrf.mxu0
        %v1309 = vadd.f32 %v1210, %v1308
        %v1310 = vpop.f32.mrf.mxu0
        %v1311 = vadd.f32 %v1210, %v1310
        %1312 = vmatprep.mubr.f32.mxu0 %v1119
        %1313 = vmatmul.mubr.f32.gmra.mxu0 %v1118
        %v1314 = vpop.f32.mrf.mxu0
        %v1315 = vadd.f32 %v1215, %v1314
        %v1316 = vpop.f32.mrf.mxu0
        %v1317 = vadd.f32 %v1215, %v1316
        %1318 = vdwg.mxu0
        %1319 = vmatprep.subr.mxu0 0.0
        %1320 = vmatpush1.msra.mxu0 0.0
        %1321 = vmatprep.subr.mxu0 0.0
        %1322 = vmatpush1.msra.mxu0 0.0
        %1323 = vmatprep.subr.mxu0 0.0
        %1324 = vmatpush1.msra.mxu0 0.0
        %1325 = vmatprep.subr.mxu0 0.0
        %1326 = vmatpush1.msra.mxu0 0.0
        %1327 = vmatprep.subr.mxu0 0.0
        %1328 = vmatpush1.msra.mxu0 0.0
        %1329 = vmatprep.subr.mxu0 0.0
        %1330 = vmatpush1.msra.mxu0 0.0
        %1331 = vmatprep.subr.mxu0 0.0
        %1332 = vmatpush1.msra.mxu0 0.0
        %1333 = vmatprep.subr.mxu0 0.0
        %1334 = vmatpush1.msra.mxu0 0.0
        %1335 = vmatprep.subr.mxu0 0.0
        %1336 = vmatpush1.msra.mxu0 0.0
        %1337 = vmatprep.subr.mxu0 0.0
        %1338 = vmatpush1.msra.mxu0 0.0
        %1339 = vmatprep.subr.mxu0 0.0
        %1340 = vmatpush1.msra.mxu0 0.0
        %1341 = vmatprep.subr.mxu0 0.0
        %1342 = vmatpush1.msra.mxu0 0.0
        %1343 = vmatprep.subr.mxu0 %v1192
        %1344 = vmatpush1.msra.mxu0 %v1191
        %1345 = vmatprep.subr.mxu0 %v1190
        %1346 = vmatpush1.msra.mxu0 %v1189
        %1347 = vmatprep.subr.mxu0 %v1188
        %1348 = vmatpush1.msra.mxu0 %v1187
        %1349 = vmatprep.subr.mxu0 %v1186
        %1350 = vmatpush1.msra.mxu0 %v1185
        %1351 = vmatprep.subr.mxu0 0.0
        %1352 = vmatpush2.msra.mxu0 0.0
        %1353 = vmatprep.subr.mxu0 0.0
        %1354 = vmatpush2.msra.mxu0 0.0
        %1355 = vmatprep.subr.mxu0 0.0
        %1356 = vmatpush2.msra.mxu0 0.0
        %1357 = vmatprep.subr.mxu0 0.0
        %1358 = vmatpush2.msra.mxu0 0.0
        %1359 = vmatprep.subr.mxu0 0.0
        %1360 = vmatpush2.msra.mxu0 0.0
        %1361 = vmatprep.subr.mxu0 0.0
        %1362 = vmatpush2.msra.mxu0 0.0
        %1363 = vmatprep.subr.mxu0 0.0
        %1364 = vmatpush2.msra.mxu0 0.0
        %1365 = vmatprep.subr.mxu0 0.0
        %1366 = vmatpush2.msra.mxu0 0.0
        %1367 = vmatprep.subr.mxu0 0.0
        %1368 = vmatpush2.msra.mxu0 0.0
        %1369 = vmatprep.subr.mxu0 0.0
        %1370 = vmatpush2.msra.mxu0 0.0
        %1371 = vmatprep.subr.mxu0 0.0
        %1372 = vmatpush2.msra.mxu0 0.0
        %1373 = vmatprep.subr.mxu0 0.0
        %1374 = vmatpush2.msra.mxu0 0.0
        %1375 = vmatprep.subr.mxu0 0.0
        %1376 = vmatpush2.msra.mxu0 0.0
        %1377 = vmatprep.subr.mxu0 0.0
        %1378 = vmatpush2.msra.mxu0 0.0
        %1379 = vmatprep.subr.mxu0 0.0
        %1380 = vmatpush2.msra.mxu0 0.0
        %1381 = vmatprep.subr.mxu0 0.0
        %1382 = vmatpush2.msra.mxu0 0.0
        %1383 = vmatprep.mubr.f32.mxu0 0.0
        %1384 = vmatmul.mubr.f32.gmra.mxu0 %v1219
        %v1385 = vpop.f32.mrf.mxu0
        %v1386 = vadd.f32 %v1297, %v1385
        %v1387 = vpop.f32.mrf.mxu0
        %v1388 = vadd.f32 %v1299, %v1387
        %1389 = vmatprep.mubr.f32.mxu0 0.0
        %1390 = vmatmul.mubr.f32.gmra.mxu0 %v1222
        %v1391 = vpop.f32.mrf.mxu0
        %v1392 = vadd.f32 %v1303, %v1391
        %v1393 = vpop.f32.mrf.mxu0
        %v1394 = vadd.f32 %v1305, %v1393
        %1395 = vmatprep.mubr.f32.mxu0 0.0
        %1396 = vmatmul.mubr.f32.gmra.mxu0 %v1225
        %v1397 = vpop.f32.mrf.mxu0
        %v1398 = vadd.f32 %v1309, %v1397
        %v1399 = vpop.f32.mrf.mxu0
        %v1400 = vadd.f32 %v1311, %v1399
        %1401 = vmatprep.mubr.f32.mxu0 0.0
        %1402 = vmatmul.mubr.f32.gmra.mxu0 %v1228
        %v1403 = vpop.f32.mrf.mxu0
        %v1404 = vadd.f32 %v1315, %v1403
        %v1405 = vpop.f32.mrf.mxu0
        %v1406 = vadd.f32 %v1317, %v1405
        %1407 = vdwg.mxu0
        %v1408 = vmax.f32 %v1386, 0.0
        %v1409 = vmax.f32 %v1388, 0.0
        %v1410 = vmax.f32 %v1392, 0.0
        %v1411 = vmax.f32 %v1394, 0.0
        %v1412 = vmax.f32 %v1398, 0.0
        %v1413 = vmax.f32 %v1400, 0.0
        %v1414 = vmax.f32 %v1404, 0.0
        %v1415 = vmax.f32 %v1406, 0.0
        %1416 = vst [vmem:[#allocation2 + $0x8] sm:$0xff] %v1408
        %1417 = vst [vmem:[#allocation2 + $0x10] sm:$0xff] %v1409
        %1418 = vst [vmem:[#allocation2 + $0x28] sm:$0xff] %v1410
        %1419 = vst [vmem:[#allocation2 + $0x30] sm:$0xff] %v1411
        %1420 = vst [vmem:[#allocation2 + $0x48] sm:$0xff] %v1412
        %1421 = vst [vmem:[#allocation2 + $0x50] sm:$0xff] %v1413
        %1422 = vst [vmem:[#allocation2 + $0x68] sm:$0xff] %v1414
        %1423 = vst [vmem:[#allocation2 + $0x70] sm:$0xff] %v1415
        %v1424 = vld [vmem:[#allocation2] sm:$0xff]
        %v1425 = vld [vmem:[#allocation2 + $0x8] sm:$0xff]
        %v1426 = vld [vmem:[#allocation2 + $0x10] sm:$0xff]
        %v1427 = vld [vmem:[#allocation2 + $0x20] sm:$0xff]
        %v1428 = vld [vmem:[#allocation2 + $0x28] sm:$0xff]
        %v1429 = vld [vmem:[#allocation2 + $0x30] sm:$0xff]
        %v1430 = vld [vmem:[#allocation2 + $0x40] sm:$0xff]
        %v1431 = vld [vmem:[#allocation2 + $0x48] sm:$0xff]
        %v1432 = vld [vmem:[#allocation2 + $0x50] sm:$0xff]
        %v1433 = vld [vmem:[#allocation2 + $0x60] sm:$0xff]
        %v1434 = vld [vmem:[#allocation2 + $0x68] sm:$0xff]
        %v1435 = vld [vmem:[#allocation2 + $0x70] sm:$0xff]
        %v1436 = vld [vmem:[%s4] sm:$0x3]
        %v1438 = vlaneseq
        %v1439 = vshrl.u32 %v1438, 7
        %v1440 = vsub.s32 0, %v1439
        %v1441 = vrot.slane %v1436, %v1440
        %v1442 = vlaneseq
        %v1443 = vshrl.u32 %v1442, 7
        %v1444 = vsub.s32 1, %v1443
        %v1445 = vrot.slane %v1436, %v1444
        %1446 = vrot.lane.b32.xlu0 %v1441, 111
        %v1447 = vpop.permute.xlu0 %1446
        %1448 = vrot.lane.b32.xlu0 %v1445, 111
        %v1449 = vpop.permute.xlu0 %1448
        %v1450 = vsel %vm354, %v1447, %v1449
        %v1454 = vmul.f32 %v1424, %v1447
        %v1455 = vmul.f32 %v1425, %v1450
        %v1456 = vmul.f32 %v1426, %v1449
        %v1457 = vmul.f32 %v1427, %v1447
        %v1458 = vmul.f32 %v1428, %v1450
        %v1459 = vmul.f32 %v1429, %v1449
        %v1460 = vmul.f32 %v1430, %v1447
        %v1461 = vmul.f32 %v1431, %v1450
        %v1462 = vmul.f32 %v1432, %v1449
        %v1463 = vmul.f32 %v1433, %v1447
        %v1464 = vmul.f32 %v1434, %v1450
        %v1465 = vmul.f32 %v1435, %v1449
        %1478 = vrot.lane.b32.xlu0 %v1454, 17
        %v1479 = vpop.permute.xlu0 %1478
        %1480 = vrot.lane.b32.xlu0 %v1455, 17
        %v1481 = vpop.permute.xlu0 %1480
        %1482 = vrot.lane.b32.xlu0 %v1456, 17
        %v1483 = vpop.permute.xlu0 %1482
        %1484 = vrot.lane.b32.xlu0 %v1457, 17
        %v1485 = vpop.permute.xlu0 %1484
        %1486 = vrot.lane.b32.xlu0 %v1458, 17
        %v1487 = vpop.permute.xlu0 %1486
        %1488 = vrot.lane.b32.xlu0 %v1459, 17
        %v1489 = vpop.permute.xlu0 %1488
        %1490 = vrot.lane.b32.xlu0 %v1460, 17
        %v1491 = vpop.permute.xlu0 %1490
        %1492 = vrot.lane.b32.xlu0 %v1461, 17
        %v1493 = vpop.permute.xlu0 %1492
        %1494 = vrot.lane.b32.xlu0 %v1462, 17
        %v1495 = vpop.permute.xlu0 %1494
        %1496 = vrot.lane.b32.xlu0 %v1463, 17
        %v1497 = vpop.permute.xlu0 %1496
        %1498 = vrot.lane.b32.xlu0 %v1464, 17
        %v1499 = vpop.permute.xlu0 %1498
        %1500 = vrot.lane.b32.xlu0 %v1465, 17
        %v1501 = vpop.permute.xlu0 %1500
        %v1502 = vsel %vm407, %v1479, %v1481
        %v1503 = vsel %vm407, %v1481, %v1483
        %v1504 = vsel %vm407, %v1485, %v1487
        %v1505 = vsel %vm407, %v1487, %v1489
        %v1506 = vsel %vm407, %v1491, %v1493
        %v1507 = vsel %vm407, %v1493, %v1495
        %v1508 = vsel %vm407, %v1497, %v1499
        %v1509 = vsel %vm407, %v1499, %v1501
        %1518 = vst [vmem:[#allocation3] sm:$0xff] %v1502
        %1519 = vst [vmem:[#allocation3 + $0x8] sm:$0xff] %v1503
        %1520 = vst [vmem:[#allocation3 + $0x10] sm:$0xff] %v1504
        %1521 = vst [vmem:[#allocation3 + $0x18] sm:$0xff] %v1505
        %1522 = vst [vmem:[#allocation3 + $0x20] sm:$0xff] %v1506
        %1523 = vst [vmem:[#allocation3 + $0x28] sm:$0xff] %v1507
        %1524 = vst [vmem:[#allocation3 + $0x30] sm:$0xff] %v1508
        %1525 = vst [vmem:[#allocation3 + $0x38] sm:$0xff] %v1509
        %v1526 = vld [vmem:[#allocation2] sm:$0xff]
        %v1527 = vld [vmem:[#allocation2 + $0x8] sm:$0xff]
        %v1528 = vld [vmem:[#allocation2 + $0x10] sm:$0xff]
        %v1529 = vld [vmem:[#allocation2 + $0x20] sm:$0xff]
        %v1530 = vld [vmem:[#allocation2 + $0x28] sm:$0xff]
        %v1531 = vld [vmem:[#allocation2 + $0x30] sm:$0xff]
        %v1532 = vld [vmem:[#allocation2 + $0x40] sm:$0xff]
        %v1533 = vld [vmem:[#allocation2 + $0x48] sm:$0xff]
        %v1534 = vld [vmem:[#allocation2 + $0x50] sm:$0xff]
        %v1535 = vld [vmem:[#allocation2 + $0x60] sm:$0xff]
        %v1536 = vld [vmem:[#allocation2 + $0x68] sm:$0xff]
        %v1537 = vld [vmem:[#allocation2 + $0x70] sm:$0xff]
        %1550 = vrot.lane.b32.xlu0 %v1526, 16
        %v1551 = vpop.permute.xlu0 %1550
        %1552 = vrot.lane.b32.xlu0 %v1527, 16
        %v1553 = vpop.permute.xlu0 %1552
        %1554 = vrot.lane.b32.xlu0 %v1528, 16
        %v1555 = vpop.permute.xlu0 %1554
        %1556 = vrot.lane.b32.xlu0 %v1529, 16
        %v1557 = vpop.permute.xlu0 %1556
        %1558 = vrot.lane.b32.xlu0 %v1530, 16
        %v1559 = vpop.permute.xlu0 %1558
        %1560 = vrot.lane.b32.xlu0 %v1531, 16
        %v1561 = vpop.permute.xlu0 %1560
        %1562 = vrot.lane.b32.xlu0 %v1532, 16
        %v1563 = vpop.permute.xlu0 %1562
        %1564 = vrot.lane.b32.xlu0 %v1533, 16
        %v1565 = vpop.permute.xlu0 %1564
        %1566 = vrot.lane.b32.xlu0 %v1534, 16
        %v1567 = vpop.permute.xlu0 %1566
        %1568 = vrot.lane.b32.xlu0 %v1535, 16
        %v1569 = vpop.permute.xlu0 %1568
        %1570 = vrot.lane.b32.xlu0 %v1536, 16
        %v1571 = vpop.permute.xlu0 %1570
        %1572 = vrot.lane.b32.xlu0 %v1537, 16
        %v1573 = vpop.permute.xlu0 %1572
        %v1574 = vsel %vm480, %v1551, %v1553
        %v1575 = vsel %vm480, %v1553, %v1555
        %v1576 = vsel %vm480, %v1557, %v1559
        %v1577 = vsel %vm480, %v1559, %v1561
        %v1578 = vsel %vm480, %v1563, %v1565
        %v1579 = vsel %vm480, %v1565, %v1567
        %v1580 = vsel %vm480, %v1569, %v1571
        %v1581 = vsel %vm480, %v1571, %v1573
        %1590 = vst [vmem:[#allocation3 + $0x40] sm:$0xff] %v1574
        %1591 = vst [vmem:[#allocation3 + $0x48] sm:$0xff] %v1575
        %1592 = vst [vmem:[#allocation3 + $0x50] sm:$0xff] %v1576
        %1593 = vst [vmem:[#allocation3 + $0x58] sm:$0xff] %v1577
        %1594 = vst [vmem:[#allocation3 + $0x60] sm:$0xff] %v1578
        %1595 = vst [vmem:[#allocation3 + $0x68] sm:$0xff] %v1579
        %1596 = vst [vmem:[#allocation3 + $0x70] sm:$0xff] %v1580
        %1597 = vst [vmem:[#allocation3 + $0x78] sm:$0xff] %v1581
        %v1598 = vld [vmem:[#allocation2] sm:$0xff]
        %v1599 = vld [vmem:[#allocation2 + $0x8] sm:$0xff]
        %v1600 = vld [vmem:[#allocation2 + $0x10] sm:$0xff]
        %v1601 = vld [vmem:[#allocation2 + $0x20] sm:$0xff]
        %v1602 = vld [vmem:[#allocation2 + $0x28] sm:$0xff]
        %v1603 = vld [vmem:[#allocation2 + $0x30] sm:$0xff]
        %v1604 = vld [vmem:[#allocation2 + $0x40] sm:$0xff]
        %v1605 = vld [vmem:[#allocation2 + $0x48] sm:$0xff]
        %v1606 = vld [vmem:[#allocation2 + $0x50] sm:$0xff]
        %v1607 = vld [vmem:[#allocation2 + $0x60] sm:$0xff]
        %v1608 = vld [vmem:[#allocation2 + $0x68] sm:$0xff]
        %v1609 = vld [vmem:[#allocation2 + $0x70] sm:$0xff]
        %v1610 = vld [vmem:[%s517] sm:$0x3]
        %v1612 = vlaneseq
        %v1613 = vshrl.u32 %v1612, 7
        %v1614 = vsub.s32 0, %v1613
        %v1615 = vrot.slane %v1610, %v1614
        %v1616 = vlaneseq
        %v1617 = vshrl.u32 %v1616, 7
        %v1618 = vsub.s32 1, %v1617
        %v1619 = vrot.slane %v1610, %v1618
        %1620 = vrot.lane.b32.xlu0 %v1615, 113
        %v1621 = vpop.permute.xlu0 %1620
        %1622 = vrot.lane.b32.xlu0 %v1619, 113
        %v1623 = vpop.permute.xlu0 %1622
        %v1624 = vsel %vm532, %v1621, %v1623
        %v1628 = vmul.f32 %v1598, %v1621
        %v1629 = vmul.f32 %v1599, %v1624
        %v1630 = vmul.f32 %v1600, %v1623
        %v1631 = vmul.f32 %v1601, %v1621
        %v1632 = vmul.f32 %v1602, %v1624
        %v1633 = vmul.f32 %v1603, %v1623
        %v1634 = vmul.f32 %v1604, %v1621
        %v1635 = vmul.f32 %v1605, %v1624
        %v1636 = vmul.f32 %v1606, %v1623
        %v1637 = vmul.f32 %v1607, %v1621
        %v1638 = vmul.f32 %v1608, %v1624
        %v1639 = vmul.f32 %v1609, %v1623
        %1652 = vrot.lane.b32.xlu0 %v1628, 15
        %v1653 = vpop.permute.xlu0 %1652
        %1654 = vrot.lane.b32.xlu0 %v1629, 15
        %v1655 = vpop.permute.xlu0 %1654
        %1656 = vrot.lane.b32.xlu0 %v1630, 15
        %v1657 = vpop.permute.xlu0 %1656
        %1658 = vrot.lane.b32.xlu0 %v1631, 15
        %v1659 = vpop.permute.xlu0 %1658
        %1660 = vrot.lane.b32.xlu0 %v1632, 15
        %v1661 = vpop.permute.xlu0 %1660
        %1662 = vrot.lane.b32.xlu0 %v1633, 15
        %v1663 = vpop.permute.xlu0 %1662
        %1664 = vrot.lane.b32.xlu0 %v1634, 15
        %v1665 = vpop.permute.xlu0 %1664
        %1666 = vrot.lane.b32.xlu0 %v1635, 15
        %v1667 = vpop.permute.xlu0 %1666
        %1668 = vrot.lane.b32.xlu0 %v1636, 15
        %v1669 = vpop.permute.xlu0 %1668
        %1670 = vrot.lane.b32.xlu0 %v1637, 15
        %v1671 = vpop.permute.xlu0 %1670
        %1672 = vrot.lane.b32.xlu0 %v1638, 15
        %v1673 = vpop.permute.xlu0 %1672
        %1674 = vrot.lane.b32.xlu0 %v1639, 15
        %v1675 = vpop.permute.xlu0 %1674
        %v1676 = vsel %vm585, %v1653, %v1655
        %v1677 = vsel %vm585, %v1655, %v1657
        %v1678 = vsel %vm585, %v1659, %v1661
        %v1679 = vsel %vm585, %v1661, %v1663
        %v1680 = vsel %vm585, %v1665, %v1667
        %v1681 = vsel %vm585, %v1667, %v1669
        %v1682 = vsel %vm585, %v1671, %v1673
        %v1683 = vsel %vm585, %v1673, %v1675
        %1692 = vst [vmem:[#allocation3 + $0x80] sm:$0xff] %v1676
        %1693 = vst [vmem:[#allocation3 + $0x88] sm:$0xff] %v1677
        %1694 = vst [vmem:[#allocation3 + $0x90] sm:$0xff] %v1678
        %1695 = vst [vmem:[#allocation3 + $0x98] sm:$0xff] %v1679
        %1696 = vst [vmem:[#allocation3 + $0xa0] sm:$0xff] %v1680
        %1697 = vst [vmem:[#allocation3 + $0xa8] sm:$0xff] %v1681
        %1698 = vst [vmem:[#allocation3 + $0xb0] sm:$0xff] %v1682
        %1699 = vst [vmem:[#allocation3 + $0xb8] sm:$0xff] %v1683
        %v1700 = vld [vmem:[#allocation2] sm:$0xff]
        %v1701 = vld [vmem:[#allocation2 + $0x8] sm:$0xff]
        %v1702 = vld [vmem:[#allocation2 + $0x10] sm:$0xff]
        %v1703 = vld [vmem:[#allocation2 + $0x20] sm:$0xff]
        %v1704 = vld [vmem:[#allocation2 + $0x28] sm:$0xff]
        %v1705 = vld [vmem:[#allocation2 + $0x30] sm:$0xff]
        %v1706 = vld [vmem:[#allocation2 + $0x40] sm:$0xff]
        %v1707 = vld [vmem:[#allocation2 + $0x48] sm:$0xff]
        %v1708 = vld [vmem:[#allocation2 + $0x50] sm:$0xff]
        %v1709 = vld [vmem:[#allocation2 + $0x60] sm:$0xff]
        %v1710 = vld [vmem:[#allocation2 + $0x68] sm:$0xff]
        %v1711 = vld [vmem:[#allocation2 + $0x70] sm:$0xff]
        %v1712 = vld [vmem:[%s4] sm:$0x3]
        %v1714 = vlaneseq
        %v1715 = vshrl.u32 %v1714, 7
        %v1716 = vsub.s32 0, %v1715
        %v1717 = vrot.slane %v1712, %v1716
        %v1718 = vlaneseq
        %v1719 = vshrl.u32 %v1718, 7
        %v1720 = vsub.s32 1, %v1719
        %v1721 = vrot.slane %v1712, %v1720
        %1722 = vrot.lane.b32.xlu0 %v1717, 127
        %v1723 = vpop.permute.xlu0 %1722
        %1724 = vrot.lane.b32.xlu0 %v1721, 127
        %v1725 = vpop.permute.xlu0 %1724
        %v1726 = vsel %vm636, %v1723, %v1725
        %v1730 = vmul.f32 %v1700, %v1723
        %v1731 = vmul.f32 %v1701, %v1726
        %v1732 = vmul.f32 %v1702, %v1725
        %v1733 = vmul.f32 %v1703, %v1723
        %v1734 = vmul.f32 %v1704, %v1726
        %v1735 = vmul.f32 %v1705, %v1725
        %v1736 = vmul.f32 %v1706, %v1723
        %v1737 = vmul.f32 %v1707, %v1726
        %v1738 = vmul.f32 %v1708, %v1725
        %v1739 = vmul.f32 %v1709, %v1723
        %v1740 = vmul.f32 %v1710, %v1726
        %v1741 = vmul.f32 %v1711, %v1725
        %1754 = vrot.lane.b32.xlu0 %v1730, 1
        %v1755 = vpop.permute.xlu0 %1754
        %1756 = vrot.lane.b32.xlu0 %v1731, 1
        %v1757 = vpop.permute.xlu0 %1756
        %1758 = vrot.lane.b32.xlu0 %v1732, 1
        %v1759 = vpop.permute.xlu0 %1758
        %1760 = vrot.lane.b32.xlu0 %v1733, 1
        %v1761 = vpop.permute.xlu0 %1760
        %1762 = vrot.lane.b32.xlu0 %v1734, 1
        %v1763 = vpop.permute.xlu0 %1762
        %1764 = vrot.lane.b32.xlu0 %v1735, 1
        %v1765 = vpop.permute.xlu0 %1764
        %1766 = vrot.lane.b32.xlu0 %v1736, 1
        %v1767 = vpop.permute.xlu0 %1766
        %1768 = vrot.lane.b32.xlu0 %v1737, 1
        %v1769 = vpop.permute.xlu0 %1768
        %1770 = vrot.lane.b32.xlu0 %v1738, 1
        %v1771 = vpop.permute.xlu0 %1770
        %1772 = vrot.lane.b32.xlu0 %v1739, 1
        %v1773 = vpop.permute.xlu0 %1772
        %1774 = vrot.lane.b32.xlu0 %v1740, 1
        %v1775 = vpop.permute.xlu0 %1774
        %1776 = vrot.lane.b32.xlu0 %v1741, 1
        %v1777 = vpop.permute.xlu0 %1776
        %v1778 = vsel %vm689, %v1755, %v1757
        %v1779 = vsel %vm689, %v1757, %v1759
        %v1780 = vsel %vm689, %v1761, %v1763
        %v1781 = vsel %vm689, %v1763, %v1765
        %v1782 = vsel %vm689, %v1767, %v1769
        %v1783 = vsel %vm689, %v1769, %v1771
        %v1784 = vsel %vm689, %v1773, %v1775
        %v1785 = vsel %vm689, %v1775, %v1777
        %1794 = vst [vmem:[#allocation3 + $0xc0] sm:$0xff] %v1778
        %1795 = vst [vmem:[#allocation3 + $0xc8] sm:$0xff] %v1779
        %1796 = vst [vmem:[#allocation3 + $0xd0] sm:$0xff] %v1780
        %1797 = vst [vmem:[#allocation3 + $0xd8] sm:$0xff] %v1781
        %1798 = vst [vmem:[#allocation3 + $0xe0] sm:$0xff] %v1782
        %1799 = vst [vmem:[#allocation3 + $0xe8] sm:$0xff] %v1783
        %1800 = vst [vmem:[#allocation3 + $0xf0] sm:$0xff] %v1784
        %1801 = vst [vmem:[#allocation3 + $0xf8] sm:$0xff] %v1785
        %v1802 = vld [vmem:[#allocation2 + $0x8] sm:$0xff]
        %v1803 = vld [vmem:[#allocation2 + $0x10] sm:$0xff]
        %v1804 = vld [vmem:[#allocation2 + $0x28] sm:$0xff]
        %v1805 = vld [vmem:[#allocation2 + $0x30] sm:$0xff]
        %v1806 = vld [vmem:[#allocation2 + $0x48] sm:$0xff]
        %v1807 = vld [vmem:[#allocation2 + $0x50] sm:$0xff]
        %v1808 = vld [vmem:[#allocation2 + $0x68] sm:$0xff]
        %v1809 = vld [vmem:[#allocation2 + $0x70] sm:$0xff]
        %1810 = vst [vmem:[#allocation3 + $0x100] sm:$0xff] %v1802
        %1811 = vst [vmem:[#allocation3 + $0x108] sm:$0xff] %v1803
        %1812 = vst [vmem:[#allocation3 + $0x110] sm:$0xff] %v1804
        %1813 = vst [vmem:[#allocation3 + $0x118] sm:$0xff] %v1805
        %1814 = vst [vmem:[#allocation3 + $0x120] sm:$0xff] %v1806
        %1815 = vst [vmem:[#allocation3 + $0x128] sm:$0xff] %v1807
        %1816 = vst [vmem:[#allocation3 + $0x130] sm:$0xff] %v1808
        %1817 = vst [vmem:[#allocation3 + $0x138] sm:$0xff] %v1809
        %v1818 = vld [vmem:[#allocation2 + $0x8] sm:$0xff]
        %v1819 = vld [vmem:[#allocation2 + $0x10] sm:$0xff]
        %v1820 = vld [vmem:[#allocation2 + $0x18] sm:$0xff]
        %v1821 = vld [vmem:[#allocation2 + $0x28] sm:$0xff]
        %v1822 = vld [vmem:[#allocation2 + $0x30] sm:$0xff]
        %v1823 = vld [vmem:[#allocation2 + $0x38] sm:$0xff]
        %v1824 = vld [vmem:[#allocation2 + $0x48] sm:$0xff]
        %v1825 = vld [vmem:[#allocation2 + $0x50] sm:$0xff]
        %v1826 = vld [vmem:[#allocation2 + $0x58] sm:$0xff]
        %v1827 = vld [vmem:[#allocation2 + $0x68] sm:$0xff]
        %v1828 = vld [vmem:[#allocation2 + $0x70] sm:$0xff]
        %v1829 = vld [vmem:[#allocation2 + $0x78] sm:$0xff]
        %v1830 = vld [vmem:[%s517] sm:$0x3]
        %v1832 = vlaneseq
        %v1833 = vshrl.u32 %v1832, 7
        %v1834 = vsub.s32 0, %v1833
        %v1835 = vrot.slane %v1830, %v1834
        %v1836 = vlaneseq
        %v1837 = vshrl.u32 %v1836, 7
        %v1838 = vsub.s32 1, %v1837
        %v1839 = vrot.slane %v1830, %v1838
        %1840 = vrot.lane.b32.xlu0 %v1835, 1
        %v1841 = vpop.permute.xlu0 %1840
        %1842 = vrot.lane.b32.xlu0 %v1839, 1
        %v1843 = vpop.permute.xlu0 %1842
        %v1844 = vsel %vm689, %v1841, %v1843
        %v1848 = vmul.f32 %v1818, %v1841
        %v1849 = vmul.f32 %v1819, %v1844
        %v1850 = vmul.f32 %v1820, %v1843
        %v1851 = vmul.f32 %v1821, %v1841
        %v1852 = vmul.f32 %v1822, %v1844
        %v1853 = vmul.f32 %v1823, %v1843
        %v1854 = vmul.f32 %v1824, %v1841
        %v1855 = vmul.f32 %v1825, %v1844
        %v1856 = vmul.f32 %v1826, %v1843
        %v1857 = vmul.f32 %v1827, %v1841
        %v1858 = vmul.f32 %v1828, %v1844
        %v1859 = vmul.f32 %v1829, %v1843
        %1872 = vrot.lane.b32.xlu0 %v1848, 127
        %v1873 = vpop.permute.xlu0 %1872
        %1874 = vrot.lane.b32.xlu0 %v1849, 127
        %v1875 = vpop.permute.xlu0 %1874
        %1876 = vrot.lane.b32.xlu0 %v1850, 127
        %v1877 = vpop.permute.xlu0 %1876
        %1878 = vrot.lane.b32.xlu0 %v1851, 127
        %v1879 = vpop.permute.xlu0 %1878
        %1880 = vrot.lane.b32.xlu0 %v1852, 127
        %v1881 = vpop.permute.xlu0 %1880
        %1882 = vrot.lane.b32.xlu0 %v1853, 127
        %v1883 = vpop.permute.xlu0 %1882
        %1884 = vrot.lane.b32.xlu0 %v1854, 127
        %v1885 = vpop.permute.xlu0 %1884
        %1886 = vrot.lane.b32.xlu0 %v1855, 127
        %v1887 = vpop.permute.xlu0 %1886
        %1888 = vrot.lane.b32.xlu0 %v1856, 127
        %v1889 = vpop.permute.xlu0 %1888
        %1890 = vrot.lane.b32.xlu0 %v1857, 127
        %v1891 = vpop.permute.xlu0 %1890
        %1892 = vrot.lane.b32.xlu0 %v1858, 127
        %v1893 = vpop.permute.xlu0 %1892
        %1894 = vrot.lane.b32.xlu0 %v1859, 127
        %v1895 = vpop.permute.xlu0 %1894
        %v1896 = vsel %vm636, %v1873, %v1875
        %v1897 = vsel %vm636, %v1875, %v1877
        %v1898 = vsel %vm636, %v1879, %v1881
        %v1899 = vsel %vm636, %v1881, %v1883
        %v1900 = vsel %vm636, %v1885, %v1887
        %v1901 = vsel %vm636, %v1887, %v1889
        %v1902 = vsel %vm636, %v1891, %v1893
        %v1903 = vsel %vm636, %v1893, %v1895
        %1912 = vst [vmem:[#allocation3 + $0x140] sm:$0xff] %v1896
        %1913 = vst [vmem:[#allocation3 + $0x148] sm:$0xff] %v1897
        %1914 = vst [vmem:[#allocation3 + $0x150] sm:$0xff] %v1898
        %1915 = vst [vmem:[#allocation3 + $0x158] sm:$0xff] %v1899
        %1916 = vst [vmem:[#allocation3 + $0x160] sm:$0xff] %v1900
        %1917 = vst [vmem:[#allocation3 + $0x168] sm:$0xff] %v1901
        %1918 = vst [vmem:[#allocation3 + $0x170] sm:$0xff] %v1902
        %1919 = vst [vmem:[#allocation3 + $0x178] sm:$0xff] %v1903
        %v1920 = vld [vmem:[#allocation2 + $0x8] sm:$0xff]
        %v1921 = vld [vmem:[#allocation2 + $0x10] sm:$0xff]
        %v1922 = vld [vmem:[#allocation2 + $0x18] sm:$0xff]
        %v1923 = vld [vmem:[#allocation2 + $0x28] sm:$0xff]
        %v1924 = vld [vmem:[#allocation2 + $0x30] sm:$0xff]
        %v1925 = vld [vmem:[#allocation2 + $0x38] sm:$0xff]
        %v1926 = vld [vmem:[#allocation2 + $0x48] sm:$0xff]
        %v1927 = vld [vmem:[#allocation2 + $0x50] sm:$0xff]
        %v1928 = vld [vmem:[#allocation2 + $0x58] sm:$0xff]
        %v1929 = vld [vmem:[#allocation2 + $0x68] sm:$0xff]
        %v1930 = vld [vmem:[#allocation2 + $0x70] sm:$0xff]
        %v1931 = vld [vmem:[#allocation2 + $0x78] sm:$0xff]
        %v1932 = vld [vmem:[%s4] sm:$0x3]
        %v1934 = vlaneseq
        %v1935 = vshrl.u32 %v1934, 7
        %v1936 = vsub.s32 0, %v1935
        %v1937 = vrot.slane %v1932, %v1936
        %v1938 = vlaneseq
        %v1939 = vshrl.u32 %v1938, 7
        %v1940 = vsub.s32 1, %v1939
        %v1941 = vrot.slane %v1932, %v1940
        %1942 = vrot.lane.b32.xlu0 %v1937, 15
        %v1943 = vpop.permute.xlu0 %1942
        %1944 = vrot.lane.b32.xlu0 %v1941, 15
        %v1945 = vpop.permute.xlu0 %1944
        %v1946 = vsel %vm585, %v1943, %v1945
        %v1950 = vmul.f32 %v1920, %v1943
        %v1951 = vmul.f32 %v1921, %v1946
        %v1952 = vmul.f32 %v1922, %v1945
        %v1953 = vmul.f32 %v1923, %v1943
        %v1954 = vmul.f32 %v1924, %v1946
        %v1955 = vmul.f32 %v1925, %v1945
        %v1956 = vmul.f32 %v1926, %v1943
        %v1957 = vmul.f32 %v1927, %v1946
        %v1958 = vmul.f32 %v1928, %v1945
        %v1959 = vmul.f32 %v1929, %v1943
        %v1960 = vmul.f32 %v1930, %v1946
        %v1961 = vmul.f32 %v1931, %v1945
        %1974 = vrot.lane.b32.xlu0 %v1950, 113
        %v1975 = vpop.permute.xlu0 %1974
        %1976 = vrot.lane.b32.xlu0 %v1951, 113
        %v1977 = vpop.permute.xlu0 %1976
        %1978 = vrot.lane.b32.xlu0 %v1952, 113
        %v1979 = vpop.permute.xlu0 %1978
        %1980 = vrot.lane.b32.xlu0 %v1953, 113
        %v1981 = vpop.permute.xlu0 %1980
        %1982 = vrot.lane.b32.xlu0 %v1954, 113
        %v1983 = vpop.permute.xlu0 %1982
        %1984 = vrot.lane.b32.xlu0 %v1955, 113
        %v1985 = vpop.permute.xlu0 %1984
        %1986 = vrot.lane.b32.xlu0 %v1956, 113
        %v1987 = vpop.permute.xlu0 %1986
        %1988 = vrot.lane.b32.xlu0 %v1957, 113
        %v1989 = vpop.permute.xlu0 %1988
        %1990 = vrot.lane.b32.xlu0 %v1958, 113
        %v1991 = vpop.permute.xlu0 %1990
        %1992 = vrot.lane.b32.xlu0 %v1959, 113
        %v1993 = vpop.permute.xlu0 %1992
        %1994 = vrot.lane.b32.xlu0 %v1960, 113
        %v1995 = vpop.permute.xlu0 %1994
        %1996 = vrot.lane.b32.xlu0 %v1961, 113
        %v1997 = vpop.permute.xlu0 %1996
        %v1998 = vsel %vm532, %v1975, %v1977
        %v1999 = vsel %vm532, %v1977, %v1979
        %v2000 = vsel %vm532, %v1981, %v1983
        %v2001 = vsel %vm532, %v1983, %v1985
        %v2002 = vsel %vm532, %v1987, %v1989
        %v2003 = vsel %vm532, %v1989, %v1991
        %v2004 = vsel %vm532, %v1993, %v1995
        %v2005 = vsel %vm532, %v1995, %v1997
        %2014 = vst [vmem:[#allocation3 + $0x180] sm:$0xff] %v1998
        %2015 = vst [vmem:[#allocation3 + $0x188] sm:$0xff] %v1999
        %2016 = vst [vmem:[#allocation3 + $0x190] sm:$0xff] %v2000
        %2017 = vst [vmem:[#allocation3 + $0x198] sm:$0xff] %v2001
        %2018 = vst [vmem:[#allocation3 + $0x1a0] sm:$0xff] %v2002
        %2019 = vst [vmem:[#allocation3 + $0x1a8] sm:$0xff] %v2003
        %2020 = vst [vmem:[#allocation3 + $0x1b0] sm:$0xff] %v2004
        %2021 = vst [vmem:[#allocation3 + $0x1b8] sm:$0xff] %v2005
        %v2022 = vld [vmem:[#allocation2 + $0x8] sm:$0xff]
        %v2023 = vld [vmem:[#allocation2 + $0x10] sm:$0xff]
        %v2024 = vld [vmem:[#allocation2 + $0x18] sm:$0xff]
        %v2025 = vld [vmem:[#allocation2 + $0x28] sm:$0xff]
        %v2026 = vld [vmem:[#allocation2 + $0x30] sm:$0xff]
        %v2027 = vld [vmem:[#allocation2 + $0x38] sm:$0xff]
        %v2028 = vld [vmem:[#allocation2 + $0x48] sm:$0xff]
        %v2029 = vld [vmem:[#allocation2 + $0x50] sm:$0xff]
        %v2030 = vld [vmem:[#allocation2 + $0x58] sm:$0xff]
        %v2031 = vld [vmem:[#allocation2 + $0x68] sm:$0xff]
        %v2032 = vld [vmem:[#allocation2 + $0x70] sm:$0xff]
        %v2033 = vld [vmem:[#allocation2 + $0x78] sm:$0xff]
        %2046 = vrot.lane.b32.xlu0 %v2022, 112
        %v2047 = vpop.permute.xlu0 %2046
        %2048 = vrot.lane.b32.xlu0 %v2023, 112
        %v2049 = vpop.permute.xlu0 %2048
        %2050 = vrot.lane.b32.xlu0 %v2024, 112
        %v2051 = vpop.permute.xlu0 %2050
        %2052 = vrot.lane.b32.xlu0 %v2025, 112
        %v2053 = vpop.permute.xlu0 %2052
        %2054 = vrot.lane.b32.xlu0 %v2026, 112
        %v2055 = vpop.permute.xlu0 %2054
        %2056 = vrot.lane.b32.xlu0 %v2027, 112
        %v2057 = vpop.permute.xlu0 %2056
        %2058 = vrot.lane.b32.xlu0 %v2028, 112
        %v2059 = vpop.permute.xlu0 %2058
        %2060 = vrot.lane.b32.xlu0 %v2029, 112
        %v2061 = vpop.permute.xlu0 %2060
        %2062 = vrot.lane.b32.xlu0 %v2030, 112
        %v2063 = vpop.permute.xlu0 %2062
        %2064 = vrot.lane.b32.xlu0 %v2031, 112
        %v2065 = vpop.permute.xlu0 %2064
        %2066 = vrot.lane.b32.xlu0 %v2032, 112
        %v2067 = vpop.permute.xlu0 %2066
        %2068 = vrot.lane.b32.xlu0 %v2033, 112
        %v2069 = vpop.permute.xlu0 %2068
        %v2070 = vsel %vm982, %v2047, %v2049
        %v2071 = vsel %vm982, %v2049, %v2051
        %v2072 = vsel %vm982, %v2053, %v2055
        %v2073 = vsel %vm982, %v2055, %v2057
        %v2074 = vsel %vm982, %v2059, %v2061
        %v2075 = vsel %vm982, %v2061, %v2063
        %v2076 = vsel %vm982, %v2065, %v2067
        %v2077 = vsel %vm982, %v2067, %v2069
        %2086 = vst [vmem:[#allocation3 + $0x1c0] sm:$0xff] %v2070
        %2087 = vst [vmem:[#allocation3 + $0x1c8] sm:$0xff] %v2071
        %2088 = vst [vmem:[#allocation3 + $0x1d0] sm:$0xff] %v2072
        %2089 = vst [vmem:[#allocation3 + $0x1d8] sm:$0xff] %v2073
        %2090 = vst [vmem:[#allocation3 + $0x1e0] sm:$0xff] %v2074
        %2091 = vst [vmem:[#allocation3 + $0x1e8] sm:$0xff] %v2075
        %2092 = vst [vmem:[#allocation3 + $0x1f0] sm:$0xff] %v2076
        %2093 = vst [vmem:[#allocation3 + $0x1f8] sm:$0xff] %v2077
        %v2094 = vld [vmem:[#allocation2 + $0x8] sm:$0xff]
        %v2095 = vld [vmem:[#allocation2 + $0x10] sm:$0xff]
        %v2096 = vld [vmem:[#allocation2 + $0x18] sm:$0xff]
        %v2097 = vld [vmem:[#allocation2 + $0x28] sm:$0xff]
        %v2098 = vld [vmem:[#allocation2 + $0x30] sm:$0xff]
        %v2099 = vld [vmem:[#allocation2 + $0x38] sm:$0xff]
        %v2100 = vld [vmem:[#allocation2 + $0x48] sm:$0xff]
        %v2101 = vld [vmem:[#allocation2 + $0x50] sm:$0xff]
        %v2102 = vld [vmem:[#allocation2 + $0x58] sm:$0xff]
        %v2103 = vld [vmem:[#allocation2 + $0x68] sm:$0xff]
        %v2104 = vld [vmem:[#allocation2 + $0x70] sm:$0xff]
        %v2105 = vld [vmem:[#allocation2 + $0x78] sm:$0xff]
        %v2106 = vld [vmem:[%s517] sm:$0x3]
        %v2108 = vlaneseq
        %v2109 = vshrl.u32 %v2108, 7
        %v2110 = vsub.s32 0, %v2109
        %v2111 = vrot.slane %v2106, %v2110
        %v2112 = vlaneseq
        %v2113 = vshrl.u32 %v2112, 7
        %v2114 = vsub.s32 1, %v2113
        %v2115 = vrot.slane %v2106, %v2114
        %2116 = vrot.lane.b32.xlu0 %v2111, 17
        %v2117 = vpop.permute.xlu0 %2116
        %2118 = vrot.lane.b32.xlu0 %v2115, 17
        %v2119 = vpop.permute.xlu0 %2118
        %v2120 = vsel %vm407, %v2117, %v2119
        %v2124 = vmul.f32 %v2094, %v2117
        %v2125 = vmul.f32 %v2095, %v2120
        %v2126 = vmul.f32 %v2096, %v2119
        %v2127 = vmul.f32 %v2097, %v2117
        %v2128 = vmul.f32 %v2098, %v2120
        %v2129 = vmul.f32 %v2099, %v2119
        %v2130 = vmul.f32 %v2100, %v2117
        %v2131 = vmul.f32 %v2101, %v2120
        %v2132 = vmul.f32 %v2102, %v2119
        %v2133 = vmul.f32 %v2103, %v2117
        %v2134 = vmul.f32 %v2104, %v2120
        %v2135 = vmul.f32 %v2105, %v2119
        %2148 = vrot.lane.b32.xlu0 %v2124, 111
        %v2149 = vpop.permute.xlu0 %2148
        %2150 = vrot.lane.b32.xlu0 %v2125, 111
        %v2151 = vpop.permute.xlu0 %2150
        %2152 = vrot.lane.b32.xlu0 %v2126, 111
        %v2153 = vpop.permute.xlu0 %2152
        %2154 = vrot.lane.b32.xlu0 %v2127, 111
        %v2155 = vpop.permute.xlu0 %2154
        %2156 = vrot.lane.b32.xlu0 %v2128, 111
        %v2157 = vpop.permute.xlu0 %2156
        %2158 = vrot.lane.b32.xlu0 %v2129, 111
        %v2159 = vpop.permute.xlu0 %2158
        %2160 = vrot.lane.b32.xlu0 %v2130, 111
        %v2161 = vpop.permute.xlu0 %2160
        %2162 = vrot.lane.b32.xlu0 %v2131, 111
        %v2163 = vpop.permute.xlu0 %2162
        %2164 = vrot.lane.b32.xlu0 %v2132, 111
        %v2165 = vpop.permute.xlu0 %2164
        %2166 = vrot.lane.b32.xlu0 %v2133, 111
        %v2167 = vpop.permute.xlu0 %2166
        %2168 = vrot.lane.b32.xlu0 %v2134, 111
        %v2169 = vpop.permute.xlu0 %2168
        %2170 = vrot.lane.b32.xlu0 %v2135, 111
        %v2171 = vpop.permute.xlu0 %2170
        %v2172 = vsel %vm354, %v2149, %v2151
        %v2173 = vsel %vm354, %v2151, %v2153
        %v2174 = vsel %vm354, %v2155, %v2157
        %v2175 = vsel %vm354, %v2157, %v2159
        %v2176 = vsel %vm354, %v2161, %v2163
        %v2177 = vsel %vm354, %v2163, %v2165
        %v2178 = vsel %vm354, %v2167, %v2169
        %v2179 = vsel %vm354, %v2169, %v2171
        %2188 = vst [vmem:[#allocation3 + $0x200] sm:$0xff] %v2172
        %2189 = vst [vmem:[#allocation3 + $0x208] sm:$0xff] %v2173
        %2190 = vst [vmem:[#allocation3 + $0x210] sm:$0xff] %v2174
        %2191 = vst [vmem:[#allocation3 + $0x218] sm:$0xff] %v2175
        %2192 = vst [vmem:[#allocation3 + $0x220] sm:$0xff] %v2176
        %2193 = vst [vmem:[#allocation3 + $0x228] sm:$0xff] %v2177
        %2194 = vst [vmem:[#allocation3 + $0x230] sm:$0xff] %v2178
        %2195 = vst [vmem:[#allocation3 + $0x238] sm:$0xff] %v2179
        %s2196 = scalar_lea.vmem [#allocation7], 96
        %v2197 = vld [vmem:[%s2196] sm:$0xff]
        %v2198 = vld [vmem:[%s2196 + $0x8] sm:$0xff]
        %v2199 = vld [vmem:[%s2196 + $0x10] sm:$0xff]
        %v2200 = vld [vmem:[%s2196 + $0x18] sm:$0xff]
        %v2201 = vld [vmem:[%s2196 + $0x20] sm:$0xff]
        %v2202 = vld [vmem:[%s2196 + $0x28] sm:$0xff]
        %v2203 = vld [vmem:[%s2196 + $0x30] sm:$0xff]
        %v2204 = vld [vmem:[%s2196 + $0x38] sm:$0xff]
        %v2205 = vld [vmem:[%s2196 + $0x40] sm:$0xff]
        %v2206 = vld [vmem:[%s2196 + $0x48] sm:$0xff]
        %v2207 = vld [vmem:[%s2196 + $0x50] sm:$0xff]
        %v2208 = vld [vmem:[%s2196 + $0x58] sm:$0xff]
        %v2209 = vld [vmem:[#allocation3] sm:$0xff]
        %v2210 = vld [vmem:[#allocation3 + $0x8] sm:$0xff]
        %v2211 = vld [vmem:[#allocation3 + $0x10] sm:$0xff]
        %v2212 = vld [vmem:[#allocation3 + $0x18] sm:$0xff]
        %v2213 = vld [vmem:[#allocation3 + $0x20] sm:$0xff]
        %v2214 = vld [vmem:[#allocation3 + $0x28] sm:$0xff]
        %v2215 = vld [vmem:[#allocation3 + $0x30] sm:$0xff]
        %v2216 = vld [vmem:[#allocation3 + $0x38] sm:$0xff]
        %v2217 = vld [vmem:[#allocation3 + $0x40] sm:$0xff]
        %v2218 = vld [vmem:[#allocation3 + $0x48] sm:$0xff]
        %v2219 = vld [vmem:[#allocation3 + $0x50] sm:$0xff]
        %v2220 = vld [vmem:[#allocation3 + $0x58] sm:$0xff]
        %v2221 = vld [vmem:[#allocation3 + $0x60] sm:$0xff]
        %v2222 = vld [vmem:[#allocation3 + $0x68] sm:$0xff]
        %v2223 = vld [vmem:[#allocation3 + $0x70] sm:$0xff]
        %v2224 = vld [vmem:[#allocation3 + $0x78] sm:$0xff]
        %v2225 = vld [vmem:[#allocation3 + $0x80] sm:$0xff]
        %v2226 = vld [vmem:[#allocation3 + $0x88] sm:$0xff]
        %v2227 = vld [vmem:[#allocation3 + $0x90] sm:$0xff]
        %v2228 = vld [vmem:[#allocation3 + $0x98] sm:$0xff]
        %v2229 = vld [vmem:[#allocation3 + $0xa0] sm:$0xff]
        %v2230 = vld [vmem:[#allocation3 + $0xa8] sm:$0xff]
        %v2231 = vld [vmem:[#allocation3 + $0xb0] sm:$0xff]
        %v2232 = vld [vmem:[#allocation3 + $0xb8] sm:$0xff]
        %v2233 = vld [vmem:[#allocation3 + $0xc0] sm:$0xff]
        %v2234 = vld [vmem:[#allocation3 + $0xc8] sm:$0xff]
        %v2235 = vld [vmem:[#allocation3 + $0xd0] sm:$0xff]
        %v2236 = vld [vmem:[#allocation3 + $0xd8] sm:$0xff]
        %v2237 = vld [vmem:[#allocation3 + $0xe0] sm:$0xff]
        %v2238 = vld [vmem:[#allocation3 + $0xe8] sm:$0xff]
        %v2239 = vld [vmem:[#allocation3 + $0xf0] sm:$0xff]
        %v2240 = vld [vmem:[#allocation3 + $0xf8] sm:$0xff]
        %v2241 = vld [vmem:[#allocation3 + $0x100] sm:$0xff]
        %v2242 = vld [vmem:[#allocation3 + $0x108] sm:$0xff]
        %v2243 = vld [vmem:[#allocation3 + $0x110] sm:$0xff]
        %v2244 = vld [vmem:[#allocation3 + $0x118] sm:$0xff]
        %v2245 = vld [vmem:[#allocation3 + $0x120] sm:$0xff]
        %v2246 = vld [vmem:[#allocation3 + $0x128] sm:$0xff]
        %v2247 = vld [vmem:[#allocation3 + $0x130] sm:$0xff]
        %v2248 = vld [vmem:[#allocation3 + $0x138] sm:$0xff]
        %v2249 = vld [vmem:[#allocation3 + $0x140] sm:$0xff]
        %v2250 = vld [vmem:[#allocation3 + $0x148] sm:$0xff]
        %v2251 = vld [vmem:[#allocation3 + $0x150] sm:$0xff]
        %v2252 = vld [vmem:[#allocation3 + $0x158] sm:$0xff]
        %v2253 = vld [vmem:[#allocation3 + $0x160] sm:$0xff]
        %v2254 = vld [vmem:[#allocation3 + $0x168] sm:$0xff]
        %v2255 = vld [vmem:[#allocation3 + $0x170] sm:$0xff]
        %v2256 = vld [vmem:[#allocation3 + $0x178] sm:$0xff]
        %v2257 = vld [vmem:[#allocation3 + $0x180] sm:$0xff]
        %v2258 = vld [vmem:[#allocation3 + $0x188] sm:$0xff]
        %v2259 = vld [vmem:[#allocation3 + $0x190] sm:$0xff]
        %v2260 = vld [vmem:[#allocation3 + $0x198] sm:$0xff]
        %v2261 = vld [vmem:[#allocation3 + $0x1a0] sm:$0xff]
        %v2262 = vld [vmem:[#allocation3 + $0x1a8] sm:$0xff]
        %v2263 = vld [vmem:[#allocation3 + $0x1b0] sm:$0xff]
        %v2264 = vld [vmem:[#allocation3 + $0x1b8] sm:$0xff]
        %v2265 = vld [vmem:[#allocation3 + $0x1c0] sm:$0xff]
        %v2266 = vld [vmem:[#allocation3 + $0x1c8] sm:$0xff]
        %v2267 = vld [vmem:[#allocation3 + $0x1d0] sm:$0xff]
        %v2268 = vld [vmem:[#allocation3 + $0x1d8] sm:$0xff]
        %v2269 = vld [vmem:[#allocation3 + $0x1e0] sm:$0xff]
        %v2270 = vld [vmem:[#allocation3 + $0x1e8] sm:$0xff]
        %v2271 = vld [vmem:[#allocation3 + $0x1f0] sm:$0xff]
        %v2272 = vld [vmem:[#allocation3 + $0x1f8] sm:$0xff]
        %v2273 = vld [vmem:[#allocation3 + $0x200] sm:$0xff]
        %v2274 = vld [vmem:[#allocation3 + $0x208] sm:$0xff]
        %v2275 = vld [vmem:[#allocation3 + $0x210] sm:$0xff]
        %v2276 = vld [vmem:[#allocation3 + $0x218] sm:$0xff]
        %v2277 = vld [vmem:[#allocation3 + $0x220] sm:$0xff]
        %v2278 = vld [vmem:[#allocation3 + $0x228] sm:$0xff]
        %v2279 = vld [vmem:[#allocation3 + $0x230] sm:$0xff]
        %v2280 = vld [vmem:[#allocation3 + $0x238] sm:$0xff]
        %s2281 = scalar_lea.vmem %s3, 32
        %v2282 = vld [vmem:[%s2281] sm:$0xff]
        %v2283 = vld [vmem:[%s2281 + $0x8] sm:$0xff]
        %v2284 = vld [vmem:[%s2281 + $0x10] sm:$0xff]
        %v2285 = vld [vmem:[%s2281 + $0x18] sm:$0xff]
        %2287 = vset.pattern.permute.xlu0 0
        %2288 = vperm.xlu0 %2287, %v2282
        %v2289 = vpop.permute.xlu0 %2288
        %2292 = vset.pattern.permute.xlu0 0
        %2293 = vperm.xlu0 %2292, %v2283
        %v2294 = vpop.permute.xlu0 %2293
        %2297 = vset.pattern.permute.xlu0 0
        %2298 = vperm.xlu0 %2297, %v2284
        %v2299 = vpop.permute.xlu0 %2298
        %2302 = vset.pattern.permute.xlu0 0
        %2303 = vperm.xlu0 %2302, %v2285
        %v2304 = vpop.permute.xlu0 %2303
        %v2307 = vsel %vm1217, %v2199, 0
        %v2310 = vsel %vm1217, %v2202, 0
        %v2313 = vsel %vm1217, %v2205, 0
        %v2316 = vsel %vm1217, %v2208, 0
        %2318 = vmatprep.subr.mxu0 %v2240
        %2319 = vmatpush1.msra.mxu0 %v2239
        %2320 = vmatprep.subr.mxu0 %v2238
        %2321 = vmatpush1.msra.mxu0 %v2237
        %2322 = vmatprep.subr.mxu0 %v2236
        %2323 = vmatpush1.msra.mxu0 %v2235
        %2324 = vmatprep.subr.mxu0 %v2234
        %2325 = vmatpush1.msra.mxu0 %v2233
        %2326 = vmatprep.subr.mxu0 %v2232
        %2327 = vmatpush1.msra.mxu0 %v2231
        %2328 = vmatprep.subr.mxu0 %v2230
        %2329 = vmatpush1.msra.mxu0 %v2229
        %2330 = vmatprep.subr.mxu0 %v2228
        %2331 = vmatpush1.msra.mxu0 %v2227
        %2332 = vmatprep.subr.mxu0 %v2226
        %2333 = vmatpush1.msra.mxu0 %v2225
        %2334 = vmatprep.subr.mxu0 %v2224
        %2335 = vmatpush1.msra.mxu0 %v2223
        %2336 = vmatprep.subr.mxu0 %v2222
        %2337 = vmatpush1.msra.mxu0 %v2221
        %2338 = vmatprep.subr.mxu0 %v2220
        %2339 = vmatpush1.msra.mxu0 %v2219
        %2340 = vmatprep.subr.mxu0 %v2218
        %2341 = vmatpush1.msra.mxu0 %v2217
        %2342 = vmatprep.subr.mxu0 %v2216
        %2343 = vmatpush1.msra.mxu0 %v2215
        %2344 = vmatprep.subr.mxu0 %v2214
        %2345 = vmatpush1.msra.mxu0 %v2213
        %2346 = vmatprep.subr.mxu0 %v2212
        %2347 = vmatpush1.msra.mxu0 %v2211
        %2348 = vmatprep.subr.mxu0 %v2210
        %2349 = vmatpush1.msra.mxu0 %v2209
        %2350 = vmatprep.subr.mxu0 %v2272
        %2351 = vmatpush2.msra.mxu0 %v2271
        %2352 = vmatprep.subr.mxu0 %v2270
        %2353 = vmatpush2.msra.mxu0 %v2269
        %2354 = vmatprep.subr.mxu0 %v2268
        %2355 = vmatpush2.msra.mxu0 %v2267
        %2356 = vmatprep.subr.mxu0 %v2266
        %2357 = vmatpush2.msra.mxu0 %v2265
        %2358 = vmatprep.subr.mxu0 %v2264
        %2359 = vmatpush2.msra.mxu0 %v2263
        %2360 = vmatprep.subr.mxu0 %v2262
        %2361 = vmatpush2.msra.mxu0 %v2261
        %2362 = vmatprep.subr.mxu0 %v2260
        %2363 = vmatpush2.msra.mxu0 %v2259
        %2364 = vmatprep.subr.mxu0 %v2258
        %2365 = vmatpush2.msra.mxu0 %v2257
        %2366 = vmatprep.subr.mxu0 %v2256
        %2367 = vmatpush2.msra.mxu0 %v2255
        %2368 = vmatprep.subr.mxu0 %v2254
        %2369 = vmatpush2.msra.mxu0 %v2253
        %2370 = vmatprep.subr.mxu0 %v2252
        %2371 = vmatpush2.msra.mxu0 %v2251
        %2372 = vmatprep.subr.mxu0 %v2250
        %2373 = vmatpush2.msra.mxu0 %v2249
        %2374 = vmatprep.subr.mxu0 %v2248
        %2375 = vmatpush2.msra.mxu0 %v2247
        %2376 = vmatprep.subr.mxu0 %v2246
        %2377 = vmatpush2.msra.mxu0 %v2245
        %2378 = vmatprep.subr.mxu0 %v2244
        %2379 = vmatpush2.msra.mxu0 %v2243
        %2380 = vmatprep.subr.mxu0 %v2242
        %2381 = vmatpush2.msra.mxu0 %v2241
        %2382 = vmatprep.mubr.f32.mxu0 %v2198
        %2383 = vmatmul.mubr.f32.gmra.mxu0 %v2197
        %v2384 = vpop.f32.mrf.mxu0
        %v2385 = vadd.f32 %v2289, %v2384
        %v2386 = vpop.f32.mrf.mxu0
        %v2387 = vadd.f32 %v2289, %v2386
        %2388 = vmatprep.mubr.f32.mxu0 %v2201
        %2389 = vmatmul.mubr.f32.gmra.mxu0 %v2200
        %v2390 = vpop.f32.mrf.mxu0
        %v2391 = vadd.f32 %v2294, %v2390
        %v2392 = vpop.f32.mrf.mxu0
        %v2393 = vadd.f32 %v2294, %v2392
        %2394 = vmatprep.mubr.f32.mxu0 %v2204
        %2395 = vmatmul.mubr.f32.gmra.mxu0 %v2203
        %v2396 = vpop.f32.mrf.mxu0
        %v2397 = vadd.f32 %v2299, %v2396
        %v2398 = vpop.f32.mrf.mxu0
        %v2399 = vadd.f32 %v2299, %v2398
        %2400 = vmatprep.mubr.f32.mxu0 %v2207
        %2401 = vmatmul.mubr.f32.gmra.mxu0 %v2206
        %v2402 = vpop.f32.mrf.mxu0
        %v2403 = vadd.f32 %v2304, %v2402
        %v2404 = vpop.f32.mrf.mxu0
        %v2405 = vadd.f32 %v2304, %v2404
        %2406 = vdwg.mxu0
        %2407 = vmatprep.subr.mxu0 0.0
        %2408 = vmatpush1.msra.mxu0 0.0
        %2409 = vmatprep.subr.mxu0 0.0
        %2410 = vmatpush1.msra.mxu0 0.0
        %2411 = vmatprep.subr.mxu0 0.0
        %2412 = vmatpush1.msra.mxu0 0.0
        %2413 = vmatprep.subr.mxu0 0.0
        %2414 = vmatpush1.msra.mxu0 0.0
        %2415 = vmatprep.subr.mxu0 0.0
        %2416 = vmatpush1.msra.mxu0 0.0
        %2417 = vmatprep.subr.mxu0 0.0
        %2418 = vmatpush1.msra.mxu0 0.0
        %2419 = vmatprep.subr.mxu0 0.0
        %2420 = vmatpush1.msra.mxu0 0.0
        %2421 = vmatprep.subr.mxu0 0.0
        %2422 = vmatpush1.msra.mxu0 0.0
        %2423 = vmatprep.subr.mxu0 0.0
        %2424 = vmatpush1.msra.mxu0 0.0
        %2425 = vmatprep.subr.mxu0 0.0
        %2426 = vmatpush1.msra.mxu0 0.0
        %2427 = vmatprep.subr.mxu0 0.0
        %2428 = vmatpush1.msra.mxu0 0.0
        %2429 = vmatprep.subr.mxu0 0.0
        %2430 = vmatpush1.msra.mxu0 0.0
        %2431 = vmatprep.subr.mxu0 %v2280
        %2432 = vmatpush1.msra.mxu0 %v2279
        %2433 = vmatprep.subr.mxu0 %v2278
        %2434 = vmatpush1.msra.mxu0 %v2277
        %2435 = vmatprep.subr.mxu0 %v2276
        %2436 = vmatpush1.msra.mxu0 %v2275
        %2437 = vmatprep.subr.mxu0 %v2274
        %2438 = vmatpush1.msra.mxu0 %v2273
        %2439 = vmatprep.subr.mxu0 0.0
        %2440 = vmatpush2.msra.mxu0 0.0
        %2441 = vmatprep.subr.mxu0 0.0
        %2442 = vmatpush2.msra.mxu0 0.0
        %2443 = vmatprep.subr.mxu0 0.0
        %2444 = vmatpush2.msra.mxu0 0.0
        %2445 = vmatprep.subr.mxu0 0.0
        %2446 = vmatpush2.msra.mxu0 0.0
        %2447 = vmatprep.subr.mxu0 0.0
        %2448 = vmatpush2.msra.mxu0 0.0
        %2449 = vmatprep.subr.mxu0 0.0
        %2450 = vmatpush2.msra.mxu0 0.0
        %2451 = vmatprep.subr.mxu0 0.0
        %2452 = vmatpush2.msra.mxu0 0.0
        %2453 = vmatprep.subr.mxu0 0.0
        %2454 = vmatpush2.msra.mxu0 0.0
        %2455 = vmatprep.subr.mxu0 0.0
        %2456 = vmatpush2.msra.mxu0 0.0
        %2457 = vmatprep.subr.mxu0 0.0
        %2458 = vmatpush2.msra.mxu0 0.0
        %2459 = vmatprep.subr.mxu0 0.0
        %2460 = vmatpush2.msra.mxu0 0.0
        %2461 = vmatprep.subr.mxu0 0.0
        %2462 = vmatpush2.msra.mxu0 0.0
        %2463 = vmatprep.subr.mxu0 0.0
        %2464 = vmatpush2.msra.mxu0 0.0
        %2465 = vmatprep.subr.mxu0 0.0
        %2466 = vmatpush2.msra.mxu0 0.0
        %2467 = vmatprep.subr.mxu0 0.0
        %2468 = vmatpush2.msra.mxu0 0.0
        %2469 = vmatprep.subr.mxu0 0.0
        %2470 = vmatpush2.msra.mxu0 0.0
        %2471 = vmatprep.mubr.f32.mxu0 0.0
        %2472 = vmatmul.mubr.f32.gmra.mxu0 %v2307
        %v2473 = vpop.f32.mrf.mxu0
        %v2474 = vadd.f32 %v2385, %v2473
        %v2475 = vpop.f32.mrf.mxu0
        %v2476 = vadd.f32 %v2387, %v2475
        %2477 = vmatprep.mubr.f32.mxu0 0.0
        %2478 = vmatmul.mubr.f32.gmra.mxu0 %v2310
        %v2479 = vpop.f32.mrf.mxu0
        %v2480 = vadd.f32 %v2391, %v2479
        %v2481 = vpop.f32.mrf.mxu0
        %v2482 = vadd.f32 %v2393, %v2481
        %2483 = vmatprep.mubr.f32.mxu0 0.0
        %2484 = vmatmul.mubr.f32.gmra.mxu0 %v2313
        %v2485 = vpop.f32.mrf.mxu0
        %v2486 = vadd.f32 %v2397, %v2485
        %v2487 = vpop.f32.mrf.mxu0
        %v2488 = vadd.f32 %v2399, %v2487
        %2489 = vmatprep.mubr.f32.mxu0 0.0
        %2490 = vmatmul.mubr.f32.gmra.mxu0 %v2316
        %v2491 = vpop.f32.mrf.mxu0
        %v2492 = vadd.f32 %v2403, %v2491
        %v2493 = vpop.f32.mrf.mxu0
        %v2494 = vadd.f32 %v2405, %v2493
        %2495 = vdwg.mxu0
        %v2496 = vmax.f32 %v2474, 0.0
        %v2497 = vmax.f32 %v2476, 0.0
        %v2498 = vmax.f32 %v2480, 0.0
        %v2499 = vmax.f32 %v2482, 0.0
        %v2500 = vmax.f32 %v2486, 0.0
        %v2501 = vmax.f32 %v2488, 0.0
        %v2502 = vmax.f32 %v2492, 0.0
        %v2503 = vmax.f32 %v2494, 0.0
        %2504 = vst [vmem:[#allocation2 + $0x8] sm:$0xff] %v2496
        %2505 = vst [vmem:[#allocation2 + $0x10] sm:$0xff] %v2497
        %2506 = vst [vmem:[#allocation2 + $0x28] sm:$0xff] %v2498
        %2507 = vst [vmem:[#allocation2 + $0x30] sm:$0xff] %v2499
        %2508 = vst [vmem:[#allocation2 + $0x48] sm:$0xff] %v2500
        %2509 = vst [vmem:[#allocation2 + $0x50] sm:$0xff] %v2501
        %2510 = vst [vmem:[#allocation2 + $0x68] sm:$0xff] %v2502
        %2511 = vst [vmem:[#allocation2 + $0x70] sm:$0xff] %v2503
        %v2512 = vld [vmem:[#allocation2] sm:$0xff]
        %v2513 = vld [vmem:[#allocation2 + $0x8] sm:$0xff]
        %v2514 = vld [vmem:[#allocation2 + $0x10] sm:$0xff]
        %v2515 = vld [vmem:[#allocation2 + $0x20] sm:$0xff]
        %v2516 = vld [vmem:[#allocation2 + $0x28] sm:$0xff]
        %v2517 = vld [vmem:[#allocation2 + $0x30] sm:$0xff]
        %v2518 = vld [vmem:[#allocation2 + $0x40] sm:$0xff]
        %v2519 = vld [vmem:[#allocation2 + $0x48] sm:$0xff]
        %v2520 = vld [vmem:[#allocation2 + $0x50] sm:$0xff]
        %v2521 = vld [vmem:[#allocation2 + $0x60] sm:$0xff]
        %v2522 = vld [vmem:[#allocation2 + $0x68] sm:$0xff]
        %v2523 = vld [vmem:[#allocation2 + $0x70] sm:$0xff]
        %v2524 = vld [vmem:[%s4] sm:$0x3]
        %v2526 = vlaneseq
        %v2527 = vshrl.u32 %v2526, 7
        %v2528 = vsub.s32 0, %v2527
        %v2529 = vrot.slane %v2524, %v2528
        %v2530 = vlaneseq
        %v2531 = vshrl.u32 %v2530, 7
        %v2532 = vsub.s32 1, %v2531
        %v2533 = vrot.slane %v2524, %v2532
        %2534 = vrot.lane.b32.xlu0 %v2529, 111
        %v2535 = vpop.permute.xlu0 %2534
        %2536 = vrot.lane.b32.xlu0 %v2533, 111
        %v2537 = vpop.permute.xlu0 %2536
        %v2538 = vsel %vm354, %v2535, %v2537
        %v2542 = vmul.f32 %v2512, %v2535
        %v2543 = vmul.f32 %v2513, %v2538
        %v2544 = vmul.f32 %v2514, %v2537
        %v2545 = vmul.f32 %v2515, %v2535
        %v2546 = vmul.f32 %v2516, %v2538
        %v2547 = vmul.f32 %v2517, %v2537
        %v2548 = vmul.f32 %v2518, %v2535
        %v2549 = vmul.f32 %v2519, %v2538
        %v2550 = vmul.f32 %v2520, %v2537
        %v2551 = vmul.f32 %v2521, %v2535
        %v2552 = vmul.f32 %v2522, %v2538
        %v2553 = vmul.f32 %v2523, %v2537
        %2566 = vrot.lane.b32.xlu0 %v2542, 17
        %v2567 = vpop.permute.xlu0 %2566
        %2568 = vrot.lane.b32.xlu0 %v2543, 17
        %v2569 = vpop.permute.xlu0 %2568
        %2570 = vrot.lane.b32.xlu0 %v2544, 17
        %v2571 = vpop.permute.xlu0 %2570
        %2572 = vrot.lane.b32.xlu0 %v2545, 17
        %v2573 = vpop.permute.xlu0 %2572
        %2574 = vrot.lane.b32.xlu0 %v2546, 17
        %v2575 = vpop.permute.xlu0 %2574
        %2576 = vrot.lane.b32.xlu0 %v2547, 17
        %v2577 = vpop.permute.xlu0 %2576
        %2578 = vrot.lane.b32.xlu0 %v2548, 17
        %v2579 = vpop.permute.xlu0 %2578
        %2580 = vrot.lane.b32.xlu0 %v2549, 17
        %v2581 = vpop.permute.xlu0 %2580
        %2582 = vrot.lane.b32.xlu0 %v2550, 17
        %v2583 = vpop.permute.xlu0 %2582
        %2584 = vrot.lane.b32.xlu0 %v2551, 17
        %v2585 = vpop.permute.xlu0 %2584
        %2586 = vrot.lane.b32.xlu0 %v2552, 17
        %v2587 = vpop.permute.xlu0 %2586
        %2588 = vrot.lane.b32.xlu0 %v2553, 17
        %v2589 = vpop.permute.xlu0 %2588
        %v2590 = vsel %vm407, %v2567, %v2569
        %v2591 = vsel %vm407, %v2569, %v2571
        %v2592 = vsel %vm407, %v2573, %v2575
        %v2593 = vsel %vm407, %v2575, %v2577
        %v2594 = vsel %vm407, %v2579, %v2581
        %v2595 = vsel %vm407, %v2581, %v2583
        %v2596 = vsel %vm407, %v2585, %v2587
        %v2597 = vsel %vm407, %v2587, %v2589
        %2606 = vst [vmem:[#allocation3] sm:$0xff] %v2590
        %2607 = vst [vmem:[#allocation3 + $0x8] sm:$0xff] %v2591
        %2608 = vst [vmem:[#allocation3 + $0x10] sm:$0xff] %v2592
        %2609 = vst [vmem:[#allocation3 + $0x18] sm:$0xff] %v2593
        %2610 = vst [vmem:[#allocation3 + $0x20] sm:$0xff] %v2594
        %2611 = vst [vmem:[#allocation3 + $0x28] sm:$0xff] %v2595
        %2612 = vst [vmem:[#allocation3 + $0x30] sm:$0xff] %v2596
        %2613 = vst [vmem:[#allocation3 + $0x38] sm:$0xff] %v2597
        %v2614 = vld [vmem:[#allocation2] sm:$0xff]
        %v2615 = vld [vmem:[#allocation2 + $0x8] sm:$0xff]
        %v2616 = vld [vmem:[#allocation2 + $0x10] sm:$0xff]
        %v2617 = vld [vmem:[#allocation2 + $0x20] sm:$0xff]
        %v2618 = vld [vmem:[#allocation2 + $0x28] sm:$0xff]
        %v2619 = vld [vmem:[#allocation2 + $0x30] sm:$0xff]
        %v2620 = vld [vmem:[#allocation2 + $0x40] sm:$0xff]
        %v2621 = vld [vmem:[#allocation2 + $0x48] sm:$0xff]
        %v2622 = vld [vmem:[#allocation2 + $0x50] sm:$0xff]
        %v2623 = vld [vmem:[#allocation2 + $0x60] sm:$0xff]
        %v2624 = vld [vmem:[#allocation2 + $0x68] sm:$0xff]
        %v2625 = vld [vmem:[#allocation2 + $0x70] sm:$0xff]
        %2638 = vrot.lane.b32.xlu0 %v2614, 16
        %v2639 = vpop.permute.xlu0 %2638
        %2640 = vrot.lane.b32.xlu0 %v2615, 16
        %v2641 = vpop.permute.xlu0 %2640
        %2642 = vrot.lane.b32.xlu0 %v2616, 16
        %v2643 = vpop.permute.xlu0 %2642
        %2644 = vrot.lane.b32.xlu0 %v2617, 16
        %v2645 = vpop.permute.xlu0 %2644
        %2646 = vrot.lane.b32.xlu0 %v2618, 16
        %v2647 = vpop.permute.xlu0 %2646
        %2648 = vrot.lane.b32.xlu0 %v2619, 16
        %v2649 = vpop.permute.xlu0 %2648
        %2650 = vrot.lane.b32.xlu0 %v2620, 16
        %v2651 = vpop.permute.xlu0 %2650
        %2652 = vrot.lane.b32.xlu0 %v2621, 16
        %v2653 = vpop.permute.xlu0 %2652
        %2654 = vrot.lane.b32.xlu0 %v2622, 16
        %v2655 = vpop.permute.xlu0 %2654
        %2656 = vrot.lane.b32.xlu0 %v2623, 16
        %v2657 = vpop.permute.xlu0 %2656
        %2658 = vrot.lane.b32.xlu0 %v2624, 16
        %v2659 = vpop.permute.xlu0 %2658
        %2660 = vrot.lane.b32.xlu0 %v2625, 16
        %v2661 = vpop.permute.xlu0 %2660
        %v2662 = vsel %vm480, %v2639, %v2641
        %v2663 = vsel %vm480, %v2641, %v2643
        %v2664 = vsel %vm480, %v2645, %v2647
        %v2665 = vsel %vm480, %v2647, %v2649
        %v2666 = vsel %vm480, %v2651, %v2653
        %v2667 = vsel %vm480, %v2653, %v2655
        %v2668 = vsel %vm480, %v2657, %v2659
        %v2669 = vsel %vm480, %v2659, %v2661
        %2678 = vst [vmem:[#allocation3 + $0x40] sm:$0xff] %v2662
        %2679 = vst [vmem:[#allocation3 + $0x48] sm:$0xff] %v2663
        %2680 = vst [vmem:[#allocation3 + $0x50] sm:$0xff] %v2664
        %2681 = vst [vmem:[#allocation3 + $0x58] sm:$0xff] %v2665
        %2682 = vst [vmem:[#allocation3 + $0x60] sm:$0xff] %v2666
        %2683 = vst [vmem:[#allocation3 + $0x68] sm:$0xff] %v2667
        %2684 = vst [vmem:[#allocation3 + $0x70] sm:$0xff] %v2668
        %2685 = vst [vmem:[#allocation3 + $0x78] sm:$0xff] %v2669
        %v2686 = vld [vmem:[#allocation2] sm:$0xff]
        %v2687 = vld [vmem:[#allocation2 + $0x8] sm:$0xff]
        %v2688 = vld [vmem:[#allocation2 + $0x10] sm:$0xff]
        %v2689 = vld [vmem:[#allocation2 + $0x20] sm:$0xff]
        %v2690 = vld [vmem:[#allocation2 + $0x28] sm:$0xff]
        %v2691 = vld [vmem:[#allocation2 + $0x30] sm:$0xff]
        %v2692 = vld [vmem:[#allocation2 + $0x40] sm:$0xff]
        %v2693 = vld [vmem:[#allocation2 + $0x48] sm:$0xff]
        %v2694 = vld [vmem:[#allocation2 + $0x50] sm:$0xff]
        %v2695 = vld [vmem:[#allocation2 + $0x60] sm:$0xff]
        %v2696 = vld [vmem:[#allocation2 + $0x68] sm:$0xff]
        %v2697 = vld [vmem:[#allocation2 + $0x70] sm:$0xff]
        %v2698 = vld [vmem:[%s517] sm:$0x3]
        %v2700 = vlaneseq
        %v2701 = vshrl.u32 %v2700, 7
        %v2702 = vsub.s32 0, %v2701
        %v2703 = vrot.slane %v2698, %v2702
        %v2704 = vlaneseq
        %v2705 = vshrl.u32 %v2704, 7
        %v2706 = vsub.s32 1, %v2705
        %v2707 = vrot.slane %v2698, %v2706
        %2708 = vrot.lane.b32.xlu0 %v2703, 113
        %v2709 = vpop.permute.xlu0 %2708
        %2710 = vrot.lane.b32.xlu0 %v2707, 113
        %v2711 = vpop.permute.xlu0 %2710
        %v2712 = vsel %vm532, %v2709, %v2711
        %v2716 = vmul.f32 %v2686, %v2709
        %v2717 = vmul.f32 %v2687, %v2712
        %v2718 = vmul.f32 %v2688, %v2711
        %v2719 = vmul.f32 %v2689, %v2709
        %v2720 = vmul.f32 %v2690, %v2712
        %v2721 = vmul.f32 %v2691, %v2711
        %v2722 = vmul.f32 %v2692, %v2709
        %v2723 = vmul.f32 %v2693, %v2712
        %v2724 = vmul.f32 %v2694, %v2711
        %v2725 = vmul.f32 %v2695, %v2709
        %v2726 = vmul.f32 %v2696, %v2712
        %v2727 = vmul.f32 %v2697, %v2711
        %2740 = vrot.lane.b32.xlu0 %v2716, 15
        %v2741 = vpop.permute.xlu0 %2740
        %2742 = vrot.lane.b32.xlu0 %v2717, 15
        %v2743 = vpop.permute.xlu0 %2742
        %2744 = vrot.lane.b32.xlu0 %v2718, 15
        %v2745 = vpop.permute.xlu0 %2744
        %2746 = vrot.lane.b32.xlu0 %v2719, 15
        %v2747 = vpop.permute.xlu0 %2746
        %2748 = vrot.lane.b32.xlu0 %v2720, 15
        %v2749 = vpop.permute.xlu0 %2748
        %2750 = vrot.lane.b32.xlu0 %v2721, 15
        %v2751 = vpop.permute.xlu0 %2750
        %2752 = vrot.lane.b32.xlu0 %v2722, 15
        %v2753 = vpop.permute.xlu0 %2752
        %2754 = vrot.lane.b32.xlu0 %v2723, 15
        %v2755 = vpop.permute.xlu0 %2754
        %2756 = vrot.lane.b32.xlu0 %v2724, 15
        %v2757 = vpop.permute.xlu0 %2756
        %2758 = vrot.lane.b32.xlu0 %v2725, 15
        %v2759 = vpop.permute.xlu0 %2758
        %2760 = vrot.lane.b32.xlu0 %v2726, 15
        %v2761 = vpop.permute.xlu0 %2760
        %2762 = vrot.lane.b32.xlu0 %v2727, 15
        %v2763 = vpop.permute.xlu0 %2762
        %v2764 = vsel %vm585, %v2741, %v2743
        %v2765 = vsel %vm585, %v2743, %v2745
        %v2766 = vsel %vm585, %v2747, %v2749
        %v2767 = vsel %vm585, %v2749, %v2751
        %v2768 = vsel %vm585, %v2753, %v2755
        %v2769 = vsel %vm585, %v2755, %v2757
        %v2770 = vsel %vm585, %v2759, %v2761
        %v2771 = vsel %vm585, %v2761, %v2763
        %2780 = vst [vmem:[#allocation3 + $0x80] sm:$0xff] %v2764
        %2781 = vst [vmem:[#allocation3 + $0x88] sm:$0xff] %v2765
        %2782 = vst [vmem:[#allocation3 + $0x90] sm:$0xff] %v2766
        %2783 = vst [vmem:[#allocation3 + $0x98] sm:$0xff] %v2767
        %2784 = vst [vmem:[#allocation3 + $0xa0] sm:$0xff] %v2768
        %2785 = vst [vmem:[#allocation3 + $0xa8] sm:$0xff] %v2769
        %2786 = vst [vmem:[#allocation3 + $0xb0] sm:$0xff] %v2770
        %2787 = vst [vmem:[#allocation3 + $0xb8] sm:$0xff] %v2771
        %v2788 = vld [vmem:[#allocation2] sm:$0xff]
        %v2789 = vld [vmem:[#allocation2 + $0x8] sm:$0xff]
        %v2790 = vld [vmem:[#allocation2 + $0x10] sm:$0xff]
        %v2791 = vld [vmem:[#allocation2 + $0x20] sm:$0xff]
        %v2792 = vld [vmem:[#allocation2 + $0x28] sm:$0xff]
        %v2793 = vld [vmem:[#allocation2 + $0x30] sm:$0xff]
        %v2794 = vld [vmem:[#allocation2 + $0x40] sm:$0xff]
        %v2795 = vld [vmem:[#allocation2 + $0x48] sm:$0xff]
        %v2796 = vld [vmem:[#allocation2 + $0x50] sm:$0xff]
        %v2797 = vld [vmem:[#allocation2 + $0x60] sm:$0xff]
        %v2798 = vld [vmem:[#allocation2 + $0x68] sm:$0xff]
        %v2799 = vld [vmem:[#allocation2 + $0x70] sm:$0xff]
        %v2800 = vld [vmem:[%s4] sm:$0x3]
        %v2802 = vlaneseq
        %v2803 = vshrl.u32 %v2802, 7
        %v2804 = vsub.s32 0, %v2803
        %v2805 = vrot.slane %v2800, %v2804
        %v2806 = vlaneseq
        %v2807 = vshrl.u32 %v2806, 7
        %v2808 = vsub.s32 1, %v2807
        %v2809 = vrot.slane %v2800, %v2808
        %2810 = vrot.lane.b32.xlu0 %v2805, 127
        %v2811 = vpop.permute.xlu0 %2810
        %2812 = vrot.lane.b32.xlu0 %v2809, 127
        %v2813 = vpop.permute.xlu0 %2812
        %v2814 = vsel %vm636, %v2811, %v2813
        %v2818 = vmul.f32 %v2788, %v2811
        %v2819 = vmul.f32 %v2789, %v2814
        %v2820 = vmul.f32 %v2790, %v2813
        %v2821 = vmul.f32 %v2791, %v2811
        %v2822 = vmul.f32 %v2792, %v2814
        %v2823 = vmul.f32 %v2793, %v2813
        %v2824 = vmul.f32 %v2794, %v2811
        %v2825 = vmul.f32 %v2795, %v2814
        %v2826 = vmul.f32 %v2796, %v2813
        %v2827 = vmul.f32 %v2797, %v2811
        %v2828 = vmul.f32 %v2798, %v2814
        %v2829 = vmul.f32 %v2799, %v2813
        %2842 = vrot.lane.b32.xlu0 %v2818, 1
        %v2843 = vpop.permute.xlu0 %2842
        %2844 = vrot.lane.b32.xlu0 %v2819, 1
        %v2845 = vpop.permute.xlu0 %2844
        %2846 = vrot.lane.b32.xlu0 %v2820, 1
        %v2847 = vpop.permute.xlu0 %2846
        %2848 = vrot.lane.b32.xlu0 %v2821, 1
        %v2849 = vpop.permute.xlu0 %2848
        %2850 = vrot.lane.b32.xlu0 %v2822, 1
        %v2851 = vpop.permute.xlu0 %2850
        %2852 = vrot.lane.b32.xlu0 %v2823, 1
        %v2853 = vpop.permute.xlu0 %2852
        %2854 = vrot.lane.b32.xlu0 %v2824, 1
        %v2855 = vpop.permute.xlu0 %2854
        %2856 = vrot.lane.b32.xlu0 %v2825, 1
        %v2857 = vpop.permute.xlu0 %2856
        %2858 = vrot.lane.b32.xlu0 %v2826, 1
        %v2859 = vpop.permute.xlu0 %2858
        %2860 = vrot.lane.b32.xlu0 %v2827, 1
        %v2861 = vpop.permute.xlu0 %2860
        %2862 = vrot.lane.b32.xlu0 %v2828, 1
        %v2863 = vpop.permute.xlu0 %2862
        %2864 = vrot.lane.b32.xlu0 %v2829, 1
        %v2865 = vpop.permute.xlu0 %2864
        %v2866 = vsel %vm689, %v2843, %v2845
        %v2867 = vsel %vm689, %v2845, %v2847
        %v2868 = vsel %vm689, %v2849, %v2851
        %v2869 = vsel %vm689, %v2851, %v2853
        %v2870 = vsel %vm689, %v2855, %v2857
        %v2871 = vsel %vm689, %v2857, %v2859
        %v2872 = vsel %vm689, %v2861, %v2863
        %v2873 = vsel %vm689, %v2863, %v2865
        %2882 = vst [vmem:[#allocation3 + $0xc0] sm:$0xff] %v2866
        %2883 = vst [vmem:[#allocation3 + $0xc8] sm:$0xff] %v2867
        %2884 = vst [vmem:[#allocation3 + $0xd0] sm:$0xff] %v2868
        %2885 = vst [vmem:[#allocation3 + $0xd8] sm:$0xff] %v2869
        %2886 = vst [vmem:[#allocation3 + $0xe0] sm:$0xff] %v2870
        %2887 = vst [vmem:[#allocation3 + $0xe8] sm:$0xff] %v2871
        %2888 = vst [vmem:[#allocation3 + $0xf0] sm:$0xff] %v2872
        %2889 = vst [vmem:[#allocation3 + $0xf8] sm:$0xff] %v2873
        %v2890 = vld [vmem:[#allocation2 + $0x8] sm:$0xff]
        %v2891 = vld [vmem:[#allocation2 + $0x10] sm:$0xff]
        %v2892 = vld [vmem:[#allocation2 + $0x28] sm:$0xff]
        %v2893 = vld [vmem:[#allocation2 + $0x30] sm:$0xff]
        %v2894 = vld [vmem:[#allocation2 + $0x48] sm:$0xff]
        %v2895 = vld [vmem:[#allocation2 + $0x50] sm:$0xff]
        %v2896 = vld [vmem:[#allocation2 + $0x68] sm:$0xff]
        %v2897 = vld [vmem:[#allocation2 + $0x70] sm:$0xff]
        %2898 = vst [vmem:[#allocation3 + $0x100] sm:$0xff] %v2890
        %2899 = vst [vmem:[#allocation3 + $0x108] sm:$0xff] %v2891
        %2900 = vst [vmem:[#allocation3 + $0x110] sm:$0xff] %v2892
        %2901 = vst [vmem:[#allocation3 + $0x118] sm:$0xff] %v2893
        %2902 = vst [vmem:[#allocation3 + $0x120] sm:$0xff] %v2894
        %2903 = vst [vmem:[#allocation3 + $0x128] sm:$0xff] %v2895
        %2904 = vst [vmem:[#allocation3 + $0x130] sm:$0xff] %v2896
        %2905 = vst [vmem:[#allocation3 + $0x138] sm:$0xff] %v2897
        %v2906 = vld [vmem:[#allocation2 + $0x8] sm:$0xff]
        %v2907 = vld [vmem:[#allocation2 + $0x10] sm:$0xff]
        %v2908 = vld [vmem:[#allocation2 + $0x18] sm:$0xff]
        %v2909 = vld [vmem:[#allocation2 + $0x28] sm:$0xff]
        %v2910 = vld [vmem:[#allocation2 + $0x30] sm:$0xff]
        %v2911 = vld [vmem:[#allocation2 + $0x38] sm:$0xff]
        %v2912 = vld [vmem:[#allocation2 + $0x48] sm:$0xff]
        %v2913 = vld [vmem:[#allocation2 + $0x50] sm:$0xff]
        %v2914 = vld [vmem:[#allocation2 + $0x58] sm:$0xff]
        %v2915 = vld [vmem:[#allocation2 + $0x68] sm:$0xff]
        %v2916 = vld [vmem:[#allocation2 + $0x70] sm:$0xff]
        %v2917 = vld [vmem:[#allocation2 + $0x78] sm:$0xff]
        %v2918 = vld [vmem:[%s517] sm:$0x3]
        %v2920 = vlaneseq
        %v2921 = vshrl.u32 %v2920, 7
        %v2922 = vsub.s32 0, %v2921
        %v2923 = vrot.slane %v2918, %v2922
        %v2924 = vlaneseq
        %v2925 = vshrl.u32 %v2924, 7
        %v2926 = vsub.s32 1, %v2925
        %v2927 = vrot.slane %v2918, %v2926
        %2928 = vrot.lane.b32.xlu0 %v2923, 1
        %v2929 = vpop.permute.xlu0 %2928
        %2930 = vrot.lane.b32.xlu0 %v2927, 1
        %v2931 = vpop.permute.xlu0 %2930
        %v2932 = vsel %vm689, %v2929, %v2931
        %v2936 = vmul.f32 %v2906, %v2929
        %v2937 = vmul.f32 %v2907, %v2932
        %v2938 = vmul.f32 %v2908, %v2931
        %v2939 = vmul.f32 %v2909, %v2929
        %v2940 = vmul.f32 %v2910, %v2932
        %v2941 = vmul.f32 %v2911, %v2931
        %v2942 = vmul.f32 %v2912, %v2929
        %v2943 = vmul.f32 %v2913, %v2932
        %v2944 = vmul.f32 %v2914, %v2931
        %v2945 = vmul.f32 %v2915, %v2929
        %v2946 = vmul.f32 %v2916, %v2932
        %v2947 = vmul.f32 %v2917, %v2931
        %2960 = vrot.lane.b32.xlu0 %v2936, 127
        %v2961 = vpop.permute.xlu0 %2960
        %2962 = vrot.lane.b32.xlu0 %v2937, 127
        %v2963 = vpop.permute.xlu0 %2962
        %2964 = vrot.lane.b32.xlu0 %v2938, 127
        %v2965 = vpop.permute.xlu0 %2964
        %2966 = vrot.lane.b32.xlu0 %v2939, 127
        %v2967 = vpop.permute.xlu0 %2966
        %2968 = vrot.lane.b32.xlu0 %v2940, 127
        %v2969 = vpop.permute.xlu0 %2968
        %2970 = vrot.lane.b32.xlu0 %v2941, 127
        %v2971 = vpop.permute.xlu0 %2970
        %2972 = vrot.lane.b32.xlu0 %v2942, 127
        %v2973 = vpop.permute.xlu0 %2972
        %2974 = vrot.lane.b32.xlu0 %v2943, 127
        %v2975 = vpop.permute.xlu0 %2974
        %2976 = vrot.lane.b32.xlu0 %v2944, 127
        %v2977 = vpop.permute.xlu0 %2976
        %2978 = vrot.lane.b32.xlu0 %v2945, 127
        %v2979 = vpop.permute.xlu0 %2978
        %2980 = vrot.lane.b32.xlu0 %v2946, 127
        %v2981 = vpop.permute.xlu0 %2980
        %2982 = vrot.lane.b32.xlu0 %v2947, 127
        %v2983 = vpop.permute.xlu0 %2982
        %v2984 = vsel %vm636, %v2961, %v2963
        %v2985 = vsel %vm636, %v2963, %v2965
        %v2986 = vsel %vm636, %v2967, %v2969
        %v2987 = vsel %vm636, %v2969, %v2971
        %v2988 = vsel %vm636, %v2973, %v2975
        %v2989 = vsel %vm636, %v2975, %v2977
        %v2990 = vsel %vm636, %v2979, %v2981
        %v2991 = vsel %vm636, %v2981, %v2983
        %3000 = vst [vmem:[#allocation3 + $0x140] sm:$0xff] %v2984
        %3001 = vst [vmem:[#allocation3 + $0x148] sm:$0xff] %v2985
        %3002 = vst [vmem:[#allocation3 + $0x150] sm:$0xff] %v2986
        %3003 = vst [vmem:[#allocation3 + $0x158] sm:$0xff] %v2987
        %3004 = vst [vmem:[#allocation3 + $0x160] sm:$0xff] %v2988
        %3005 = vst [vmem:[#allocation3 + $0x168] sm:$0xff] %v2989
        %3006 = vst [vmem:[#allocation3 + $0x170] sm:$0xff] %v2990
        %3007 = vst [vmem:[#allocation3 + $0x178] sm:$0xff] %v2991
        %v3008 = vld [vmem:[#allocation2 + $0x8] sm:$0xff]
        %v3009 = vld [vmem:[#allocation2 + $0x10] sm:$0xff]
        %v3010 = vld [vmem:[#allocation2 + $0x18] sm:$0xff]
        %v3011 = vld [vmem:[#allocation2 + $0x28] sm:$0xff]
        %v3012 = vld [vmem:[#allocation2 + $0x30] sm:$0xff]
        %v3013 = vld [vmem:[#allocation2 + $0x38] sm:$0xff]
        %v3014 = vld [vmem:[#allocation2 + $0x48] sm:$0xff]
        %v3015 = vld [vmem:[#allocation2 + $0x50] sm:$0xff]
        %v3016 = vld [vmem:[#allocation2 + $0x58] sm:$0xff]
        %v3017 = vld [vmem:[#allocation2 + $0x68] sm:$0xff]
        %v3018 = vld [vmem:[#allocation2 + $0x70] sm:$0xff]
        %v3019 = vld [vmem:[#allocation2 + $0x78] sm:$0xff]
        %v3020 = vld [vmem:[%s4] sm:$0x3]
        %v3022 = vlaneseq
        %v3023 = vshrl.u32 %v3022, 7
        %v3024 = vsub.s32 0, %v3023
        %v3025 = vrot.slane %v3020, %v3024
        %v3026 = vlaneseq
        %v3027 = vshrl.u32 %v3026, 7
        %v3028 = vsub.s32 1, %v3027
        %v3029 = vrot.slane %v3020, %v3028
        %3030 = vrot.lane.b32.xlu0 %v3025, 15
        %v3031 = vpop.permute.xlu0 %3030
        %3032 = vrot.lane.b32.xlu0 %v3029, 15
        %v3033 = vpop.permute.xlu0 %3032
        %v3034 = vsel %vm585, %v3031, %v3033
        %v3038 = vmul.f32 %v3008, %v3031
        %v3039 = vmul.f32 %v3009, %v3034
        %v3040 = vmul.f32 %v3010, %v3033
        %v3041 = vmul.f32 %v3011, %v3031
        %v3042 = vmul.f32 %v3012, %v3034
        %v3043 = vmul.f32 %v3013, %v3033
        %v3044 = vmul.f32 %v3014, %v3031
        %v3045 = vmul.f32 %v3015, %v3034
        %v3046 = vmul.f32 %v3016, %v3033
        %v3047 = vmul.f32 %v3017, %v3031
        %v3048 = vmul.f32 %v3018, %v3034
        %v3049 = vmul.f32 %v3019, %v3033
        %3062 = vrot.lane.b32.xlu0 %v3038, 113
        %v3063 = vpop.permute.xlu0 %3062
        %3064 = vrot.lane.b32.xlu0 %v3039, 113
        %v3065 = vpop.permute.xlu0 %3064
        %3066 = vrot.lane.b32.xlu0 %v3040, 113
        %v3067 = vpop.permute.xlu0 %3066
        %3068 = vrot.lane.b32.xlu0 %v3041, 113
        %v3069 = vpop.permute.xlu0 %3068
        %3070 = vrot.lane.b32.xlu0 %v3042, 113
        %v3071 = vpop.permute.xlu0 %3070
        %3072 = vrot.lane.b32.xlu0 %v3043, 113
        %v3073 = vpop.permute.xlu0 %3072
        %3074 = vrot.lane.b32.xlu0 %v3044, 113
        %v3075 = vpop.permute.xlu0 %3074
        %3076 = vrot.lane.b32.xlu0 %v3045, 113
        %v3077 = vpop.permute.xlu0 %3076
        %3078 = vrot.lane.b32.xlu0 %v3046, 113
        %v3079 = vpop.permute.xlu0 %3078
        %3080 = vrot.lane.b32.xlu0 %v3047, 113
        %v3081 = vpop.permute.xlu0 %3080
        %3082 = vrot.lane.b32.xlu0 %v3048, 113
        %v3083 = vpop.permute.xlu0 %3082
        %3084 = vrot.lane.b32.xlu0 %v3049, 113
        %v3085 = vpop.permute.xlu0 %3084
        %v3086 = vsel %vm532, %v3063, %v3065
        %v3087 = vsel %vm532, %v3065, %v3067
        %v3088 = vsel %vm532, %v3069, %v3071
        %v3089 = vsel %vm532, %v3071, %v3073
        %v3090 = vsel %vm532, %v3075, %v3077
        %v3091 = vsel %vm532, %v3077, %v3079
        %v3092 = vsel %vm532, %v3081, %v3083
        %v3093 = vsel %vm532, %v3083, %v3085
        %3102 = vst [vmem:[#allocation3 + $0x180] sm:$0xff] %v3086
        %3103 = vst [vmem:[#allocation3 + $0x188] sm:$0xff] %v3087
        %3104 = vst [vmem:[#allocation3 + $0x190] sm:$0xff] %v3088
        %3105 = vst [vmem:[#allocation3 + $0x198] sm:$0xff] %v3089
        %3106 = vst [vmem:[#allocation3 + $0x1a0] sm:$0xff] %v3090
        %3107 = vst [vmem:[#allocation3 + $0x1a8] sm:$0xff] %v3091
        %3108 = vst [vmem:[#allocation3 + $0x1b0] sm:$0xff] %v3092
        %3109 = vst [vmem:[#allocation3 + $0x1b8] sm:$0xff] %v3093
        %v3110 = vld [vmem:[#allocation2 + $0x8] sm:$0xff]
        %v3111 = vld [vmem:[#allocation2 + $0x10] sm:$0xff]
        %v3112 = vld [vmem:[#allocation2 + $0x18] sm:$0xff]
        %v3113 = vld [vmem:[#allocation2 + $0x28] sm:$0xff]
        %v3114 = vld [vmem:[#allocation2 + $0x30] sm:$0xff]
        %v3115 = vld [vmem:[#allocation2 + $0x38] sm:$0xff]
        %v3116 = vld [vmem:[#allocation2 + $0x48] sm:$0xff]
        %v3117 = vld [vmem:[#allocation2 + $0x50] sm:$0xff]
        %v3118 = vld [vmem:[#allocation2 + $0x58] sm:$0xff]
        %v3119 = vld [vmem:[#allocation2 + $0x68] sm:$0xff]
        %v3120 = vld [vmem:[#allocation2 + $0x70] sm:$0xff]
        %v3121 = vld [vmem:[#allocation2 + $0x78] sm:$0xff]
        %3134 = vrot.lane.b32.xlu0 %v3110, 112
        %v3135 = vpop.permute.xlu0 %3134
        %3136 = vrot.lane.b32.xlu0 %v3111, 112
        %v3137 = vpop.permute.xlu0 %3136
        %3138 = vrot.lane.b32.xlu0 %v3112, 112
        %v3139 = vpop.permute.xlu0 %3138
        %3140 = vrot.lane.b32.xlu0 %v3113, 112
        %v3141 = vpop.permute.xlu0 %3140
        %3142 = vrot.lane.b32.xlu0 %v3114, 112
        %v3143 = vpop.permute.xlu0 %3142
        %3144 = vrot.lane.b32.xlu0 %v3115, 112
        %v3145 = vpop.permute.xlu0 %3144
        %3146 = vrot.lane.b32.xlu0 %v3116, 112
        %v3147 = vpop.permute.xlu0 %3146
        %3148 = vrot.lane.b32.xlu0 %v3117, 112
        %v3149 = vpop.permute.xlu0 %3148
        %3150 = vrot.lane.b32.xlu0 %v3118, 112
        %v3151 = vpop.permute.xlu0 %3150
        %3152 = vrot.lane.b32.xlu0 %v3119, 112
        %v3153 = vpop.permute.xlu0 %3152
        %3154 = vrot.lane.b32.xlu0 %v3120, 112
        %v3155 = vpop.permute.xlu0 %3154
        %3156 = vrot.lane.b32.xlu0 %v3121, 112
        %v3157 = vpop.permute.xlu0 %3156
        %v3158 = vsel %vm982, %v3135, %v3137
        %v3159 = vsel %vm982, %v3137, %v3139
        %v3160 = vsel %vm982, %v3141, %v3143
        %v3161 = vsel %vm982, %v3143, %v3145
        %v3162 = vsel %vm982, %v3147, %v3149
        %v3163 = vsel %vm982, %v3149, %v3151
        %v3164 = vsel %vm982, %v3153, %v3155
        %v3165 = vsel %vm982, %v3155, %v3157
        %3174 = vst [vmem:[#allocation3 + $0x1c0] sm:$0xff] %v3158
        %3175 = vst [vmem:[#allocation3 + $0x1c8] sm:$0xff] %v3159
        %3176 = vst [vmem:[#allocation3 + $0x1d0] sm:$0xff] %v3160
        %3177 = vst [vmem:[#allocation3 + $0x1d8] sm:$0xff] %v3161
        %3178 = vst [vmem:[#allocation3 + $0x1e0] sm:$0xff] %v3162
        %3179 = vst [vmem:[#allocation3 + $0x1e8] sm:$0xff] %v3163
        %3180 = vst [vmem:[#allocation3 + $0x1f0] sm:$0xff] %v3164
        %3181 = vst [vmem:[#allocation3 + $0x1f8] sm:$0xff] %v3165
        %v3182 = vld [vmem:[#allocation2 + $0x8] sm:$0xff]
        %v3183 = vld [vmem:[#allocation2 + $0x10] sm:$0xff]
        %v3184 = vld [vmem:[#allocation2 + $0x18] sm:$0xff]
        %v3185 = vld [vmem:[#allocation2 + $0x28] sm:$0xff]
        %v3186 = vld [vmem:[#allocation2 + $0x30] sm:$0xff]
        %v3187 = vld [vmem:[#allocation2 + $0x38] sm:$0xff]
        %v3188 = vld [vmem:[#allocation2 + $0x48] sm:$0xff]
        %v3189 = vld [vmem:[#allocation2 + $0x50] sm:$0xff]
        %v3190 = vld [vmem:[#allocation2 + $0x58] sm:$0xff]
        %v3191 = vld [vmem:[#allocation2 + $0x68] sm:$0xff]
        %v3192 = vld [vmem:[#allocation2 + $0x70] sm:$0xff]
        %v3193 = vld [vmem:[#allocation2 + $0x78] sm:$0xff]
        %v3194 = vld [vmem:[%s517] sm:$0x3]
        %v3196 = vlaneseq
        %v3197 = vshrl.u32 %v3196, 7
        %v3198 = vsub.s32 0, %v3197
        %v3199 = vrot.slane %v3194, %v3198
        %v3200 = vlaneseq
        %v3201 = vshrl.u32 %v3200, 7
        %v3202 = vsub.s32 1, %v3201
        %v3203 = vrot.slane %v3194, %v3202
        %3204 = vrot.lane.b32.xlu0 %v3199, 17
        %v3205 = vpop.permute.xlu0 %3204
        %3206 = vrot.lane.b32.xlu0 %v3203, 17
        %v3207 = vpop.permute.xlu0 %3206
        %v3208 = vsel %vm407, %v3205, %v3207
        %v3212 = vmul.f32 %v3182, %v3205
        %v3213 = vmul.f32 %v3183, %v3208
        %v3214 = vmul.f32 %v3184, %v3207
        %v3215 = vmul.f32 %v3185, %v3205
        %v3216 = vmul.f32 %v3186, %v3208
        %v3217 = vmul.f32 %v3187, %v3207
        %v3218 = vmul.f32 %v3188, %v3205
        %v3219 = vmul.f32 %v3189, %v3208
        %v3220 = vmul.f32 %v3190, %v3207
        %v3221 = vmul.f32 %v3191, %v3205
        %v3222 = vmul.f32 %v3192, %v3208
        %v3223 = vmul.f32 %v3193, %v3207
        %3236 = vrot.lane.b32.xlu0 %v3212, 111
        %v3237 = vpop.permute.xlu0 %3236
        %3238 = vrot.lane.b32.xlu0 %v3213, 111
        %v3239 = vpop.permute.xlu0 %3238
        %3240 = vrot.lane.b32.xlu0 %v3214, 111
        %v3241 = vpop.permute.xlu0 %3240
        %3242 = vrot.lane.b32.xlu0 %v3215, 111
        %v3243 = vpop.permute.xlu0 %3242
        %3244 = vrot.lane.b32.xlu0 %v3216, 111
        %v3245 = vpop.permute.xlu0 %3244
        %3246 = vrot.lane.b32.xlu0 %v3217, 111
        %v3247 = vpop.permute.xlu0 %3246
        %3248 = vrot.lane.b32.xlu0 %v3218, 111
        %v3249 = vpop.permute.xlu0 %3248
        %3250 = vrot.lane.b32.xlu0 %v3219, 111
        %v3251 = vpop.permute.xlu0 %3250
        %3252 = vrot.lane.b32.xlu0 %v3220, 111
        %v3253 = vpop.permute.xlu0 %3252
        %3254 = vrot.lane.b32.xlu0 %v3221, 111
        %v3255 = vpop.permute.xlu0 %3254
        %3256 = vrot.lane.b32.xlu0 %v3222, 111
        %v3257 = vpop.permute.xlu0 %3256
        %3258 = vrot.lane.b32.xlu0 %v3223, 111
        %v3259 = vpop.permute.xlu0 %3258
        %v3260 = vsel %vm354, %v3237, %v3239
        %v3261 = vsel %vm354, %v3239, %v3241
        %v3262 = vsel %vm354, %v3243, %v3245
        %v3263 = vsel %vm354, %v3245, %v3247
        %v3264 = vsel %vm354, %v3249, %v3251
        %v3265 = vsel %vm354, %v3251, %v3253
        %v3266 = vsel %vm354, %v3255, %v3257
        %v3267 = vsel %vm354, %v3257, %v3259
        %3276 = vst [vmem:[#allocation3 + $0x200] sm:$0xff] %v3260
        %3277 = vst [vmem:[#allocation3 + $0x208] sm:$0xff] %v3261
        %3278 = vst [vmem:[#allocation3 + $0x210] sm:$0xff] %v3262
        %3279 = vst [vmem:[#allocation3 + $0x218] sm:$0xff] %v3263
        %3280 = vst [vmem:[#allocation3 + $0x220] sm:$0xff] %v3264
        %3281 = vst [vmem:[#allocation3 + $0x228] sm:$0xff] %v3265
        %3282 = vst [vmem:[#allocation3 + $0x230] sm:$0xff] %v3266
        %3283 = vst [vmem:[#allocation3 + $0x238] sm:$0xff] %v3267
        %s3284 = scalar_lea.vmem [#allocation7], 192
        %v3285 = vld [vmem:[%s3284] sm:$0xff]
        %v3286 = vld [vmem:[%s3284 + $0x8] sm:$0xff]
        %v3287 = vld [vmem:[%s3284 + $0x10] sm:$0xff]
        %v3288 = vld [vmem:[%s3284 + $0x18] sm:$0xff]
        %v3289 = vld [vmem:[%s3284 + $0x20] sm:$0xff]
        %v3290 = vld [vmem:[%s3284 + $0x28] sm:$0xff]
        %v3291 = vld [vmem:[%s3284 + $0x30] sm:$0xff]
        %v3292 = vld [vmem:[%s3284 + $0x38] sm:$0xff]
        %v3293 = vld [vmem:[%s3284 + $0x40] sm:$0xff]
        %v3294 = vld [vmem:[%s3284 + $0x48] sm:$0xff]
        %v3295 = vld [vmem:[%s3284 + $0x50] sm:$0xff]
        %v3296 = vld [vmem:[%s3284 + $0x58] sm:$0xff]
        %v3297 = vld [vmem:[#allocation3] sm:$0xff]
        %v3298 = vld [vmem:[#allocation3 + $0x8] sm:$0xff]
        %v3299 = vld [vmem:[#allocation3 + $0x10] sm:$0xff]
        %v3300 = vld [vmem:[#allocation3 + $0x18] sm:$0xff]
        %v3301 = vld [vmem:[#allocation3 + $0x20] sm:$0xff]
        %v3302 = vld [vmem:[#allocation3 + $0x28] sm:$0xff]
        %v3303 = vld [vmem:[#allocation3 + $0x30] sm:$0xff]
        %v3304 = vld [vmem:[#allocation3 + $0x38] sm:$0xff]
        %v3305 = vld [vmem:[#allocation3 + $0x40] sm:$0xff]
        %v3306 = vld [vmem:[#allocation3 + $0x48] sm:$0xff]
        %v3307 = vld [vmem:[#allocation3 + $0x50] sm:$0xff]
        %v3308 = vld [vmem:[#allocation3 + $0x58] sm:$0xff]
        %v3309 = vld [vmem:[#allocation3 + $0x60] sm:$0xff]
        %v3310 = vld [vmem:[#allocation3 + $0x68] sm:$0xff]
        %v3311 = vld [vmem:[#allocation3 + $0x70] sm:$0xff]
        %v3312 = vld [vmem:[#allocation3 + $0x78] sm:$0xff]
        %v3313 = vld [vmem:[#allocation3 + $0x80] sm:$0xff]
        %v3314 = vld [vmem:[#allocation3 + $0x88] sm:$0xff]
        %v3315 = vld [vmem:[#allocation3 + $0x90] sm:$0xff]
        %v3316 = vld [vmem:[#allocation3 + $0x98] sm:$0xff]
        %v3317 = vld [vmem:[#allocation3 + $0xa0] sm:$0xff]
        %v3318 = vld [vmem:[#allocation3 + $0xa8] sm:$0xff]
        %v3319 = vld [vmem:[#allocation3 + $0xb0] sm:$0xff]
        %v3320 = vld [vmem:[#allocation3 + $0xb8] sm:$0xff]
        %v3321 = vld [vmem:[#allocation3 + $0xc0] sm:$0xff]
        %v3322 = vld [vmem:[#allocation3 + $0xc8] sm:$0xff]
        %v3323 = vld [vmem:[#allocation3 + $0xd0] sm:$0xff]
        %v3324 = vld [vmem:[#allocation3 + $0xd8] sm:$0xff]
        %v3325 = vld [vmem:[#allocation3 + $0xe0] sm:$0xff]
        %v3326 = vld [vmem:[#allocation3 + $0xe8] sm:$0xff]
        %v3327 = vld [vmem:[#allocation3 + $0xf0] sm:$0xff]
        %v3328 = vld [vmem:[#allocation3 + $0xf8] sm:$0xff]
        %v3329 = vld [vmem:[#allocation3 + $0x100] sm:$0xff]
        %v3330 = vld [vmem:[#allocation3 + $0x108] sm:$0xff]
        %v3331 = vld [vmem:[#allocation3 + $0x110] sm:$0xff]
        %v3332 = vld [vmem:[#allocation3 + $0x118] sm:$0xff]
        %v3333 = vld [vmem:[#allocation3 + $0x120] sm:$0xff]
        %v3334 = vld [vmem:[#allocation3 + $0x128] sm:$0xff]
        %v3335 = vld [vmem:[#allocation3 + $0x130] sm:$0xff]
        %v3336 = vld [vmem:[#allocation3 + $0x138] sm:$0xff]
        %v3337 = vld [vmem:[#allocation3 + $0x140] sm:$0xff]
        %v3338 = vld [vmem:[#allocation3 + $0x148] sm:$0xff]
        %v3339 = vld [vmem:[#allocation3 + $0x150] sm:$0xff]
        %v3340 = vld [vmem:[#allocation3 + $0x158] sm:$0xff]
        %v3341 = vld [vmem:[#allocation3 + $0x160] sm:$0xff]
        %v3342 = vld [vmem:[#allocation3 + $0x168] sm:$0xff]
        %v3343 = vld [vmem:[#allocation3 + $0x170] sm:$0xff]
        %v3344 = vld [vmem:[#allocation3 + $0x178] sm:$0xff]
        %v3345 = vld [vmem:[#allocation3 + $0x180] sm:$0xff]
        %v3346 = vld [vmem:[#allocation3 + $0x188] sm:$0xff]
        %v3347 = vld [vmem:[#allocation3 + $0x190] sm:$0xff]
        %v3348 = vld [vmem:[#allocation3 + $0x198] sm:$0xff]
        %v3349 = vld [vmem:[#allocation3 + $0x1a0] sm:$0xff]
        %v3350 = vld [vmem:[#allocation3 + $0x1a8] sm:$0xff]
        %v3351 = vld [vmem:[#allocation3 + $0x1b0] sm:$0xff]
        %v3352 = vld [vmem:[#allocation3 + $0x1b8] sm:$0xff]
        %v3353 = vld [vmem:[#allocation3 + $0x1c0] sm:$0xff]
        %v3354 = vld [vmem:[#allocation3 + $0x1c8] sm:$0xff]
        %v3355 = vld [vmem:[#allocation3 + $0x1d0] sm:$0xff]
        %v3356 = vld [vmem:[#allocation3 + $0x1d8] sm:$0xff]
        %v3357 = vld [vmem:[#allocation3 + $0x1e0] sm:$0xff]
        %v3358 = vld [vmem:[#allocation3 + $0x1e8] sm:$0xff]
        %v3359 = vld [vmem:[#allocation3 + $0x1f0] sm:$0xff]
        %v3360 = vld [vmem:[#allocation3 + $0x1f8] sm:$0xff]
        %v3361 = vld [vmem:[#allocation3 + $0x200] sm:$0xff]
        %v3362 = vld [vmem:[#allocation3 + $0x208] sm:$0xff]
        %v3363 = vld [vmem:[#allocation3 + $0x210] sm:$0xff]
        %v3364 = vld [vmem:[#allocation3 + $0x218] sm:$0xff]
        %v3365 = vld [vmem:[#allocation3 + $0x220] sm:$0xff]
        %v3366 = vld [vmem:[#allocation3 + $0x228] sm:$0xff]
        %v3367 = vld [vmem:[#allocation3 + $0x230] sm:$0xff]
        %v3368 = vld [vmem:[#allocation3 + $0x238] sm:$0xff]
        %s3369 = scalar_lea.vmem %s3, 64
        %v3370 = vld [vmem:[%s3369] sm:$0xff]
        %v3371 = vld [vmem:[%s3369 + $0x8] sm:$0xff]
        %v3372 = vld [vmem:[%s3369 + $0x10] sm:$0xff]
        %v3373 = vld [vmem:[%s3369 + $0x18] sm:$0xff]
        %3375 = vset.pattern.permute.xlu0 0
        %3376 = vperm.xlu0 %3375, %v3370
        %v3377 = vpop.permute.xlu0 %3376
        %3380 = vset.pattern.permute.xlu0 0
        %3381 = vperm.xlu0 %3380, %v3371
        %v3382 = vpop.permute.xlu0 %3381
        %3385 = vset.pattern.permute.xlu0 0
        %3386 = vperm.xlu0 %3385, %v3372
        %v3387 = vpop.permute.xlu0 %3386
        %3390 = vset.pattern.permute.xlu0 0
        %3391 = vperm.xlu0 %3390, %v3373
        %v3392 = vpop.permute.xlu0 %3391
        %v3395 = vsel %vm1217, %v3287, 0
        %v3398 = vsel %vm1217, %v3290, 0
        %v3401 = vsel %vm1217, %v3293, 0
        %v3404 = vsel %vm1217, %v3296, 0
        %3406 = vmatprep.subr.mxu0 %v3328
        %3407 = vmatpush1.msra.mxu0 %v3327
        %3408 = vmatprep.subr.mxu0 %v3326
        %3409 = vmatpush1.msra.mxu0 %v3325
        %3410 = vmatprep.subr.mxu0 %v3324
        %3411 = vmatpush1.msra.mxu0 %v3323
        %3412 = vmatprep.subr.mxu0 %v3322
        %3413 = vmatpush1.msra.mxu0 %v3321
        %3414 = vmatprep.subr.mxu0 %v3320
        %3415 = vmatpush1.msra.mxu0 %v3319
        %3416 = vmatprep.subr.mxu0 %v3318
        %3417 = vmatpush1.msra.mxu0 %v3317
        %3418 = vmatprep.subr.mxu0 %v3316
        %3419 = vmatpush1.msra.mxu0 %v3315
        %3420 = vmatprep.subr.mxu0 %v3314
        %3421 = vmatpush1.msra.mxu0 %v3313
        %3422 = vmatprep.subr.mxu0 %v3312
        %3423 = vmatpush1.msra.mxu0 %v3311
        %3424 = vmatprep.subr.mxu0 %v3310
        %3425 = vmatpush1.msra.mxu0 %v3309
        %3426 = vmatprep.subr.mxu0 %v3308
        %3427 = vmatpush1.msra.mxu0 %v3307
        %3428 = vmatprep.subr.mxu0 %v3306
        %3429 = vmatpush1.msra.mxu0 %v3305
        %3430 = vmatprep.subr.mxu0 %v3304
        %3431 = vmatpush1.msra.mxu0 %v3303
        %3432 = vmatprep.subr.mxu0 %v3302
        %3433 = vmatpush1.msra.mxu0 %v3301
        %3434 = vmatprep.subr.mxu0 %v3300
        %3435 = vmatpush1.msra.mxu0 %v3299
        %3436 = vmatprep.subr.mxu0 %v3298
        %3437 = vmatpush1.msra.mxu0 %v3297
        %3438 = vmatprep.subr.mxu0 %v3360
        %3439 = vmatpush2.msra.mxu0 %v3359
        %3440 = vmatprep.subr.mxu0 %v3358
        %3441 = vmatpush2.msra.mxu0 %v3357
        %3442 = vmatprep.subr.mxu0 %v3356
        %3443 = vmatpush2.msra.mxu0 %v3355
        %3444 = vmatprep.subr.mxu0 %v3354
        %3445 = vmatpush2.msra.mxu0 %v3353
        %3446 = vmatprep.subr.mxu0 %v3352
        %3447 = vmatpush2.msra.mxu0 %v3351
        %3448 = vmatprep.subr.mxu0 %v3350
        %3449 = vmatpush2.msra.mxu0 %v3349
        %3450 = vmatprep.subr.mxu0 %v3348
        %3451 = vmatpush2.msra.mxu0 %v3347
        %3452 = vmatprep.subr.mxu0 %v3346
        %3453 = vmatpush2.msra.mxu0 %v3345
        %3454 = vmatprep.subr.mxu0 %v3344
        %3455 = vmatpush2.msra.mxu0 %v3343
        %3456 = vmatprep.subr.mxu0 %v3342
        %3457 = vmatpush2.msra.mxu0 %v3341
        %3458 = vmatprep.subr.mxu0 %v3340
        %3459 = vmatpush2.msra.mxu0 %v3339
        %3460 = vmatprep.subr.mxu0 %v3338
        %3461 = vmatpush2.msra.mxu0 %v3337
        %3462 = vmatprep.subr.mxu0 %v3336
        %3463 = vmatpush2.msra.mxu0 %v3335
        %3464 = vmatprep.subr.mxu0 %v3334
        %3465 = vmatpush2.msra.mxu0 %v3333
        %3466 = vmatprep.subr.mxu0 %v3332
        %3467 = vmatpush2.msra.mxu0 %v3331
        %3468 = vmatprep.subr.mxu0 %v3330
        %3469 = vmatpush2.msra.mxu0 %v3329
        %3470 = vmatprep.mubr.f32.mxu0 %v3286
        %3471 = vmatmul.mubr.f32.gmra.mxu0 %v3285
        %v3472 = vpop.f32.mrf.mxu0
        %v3473 = vadd.f32 %v3377, %v3472
        %v3474 = vpop.f32.mrf.mxu0
        %v3475 = vadd.f32 %v3377, %v3474
        %3476 = vmatprep.mubr.f32.mxu0 %v3289
        %3477 = vmatmul.mubr.f32.gmra.mxu0 %v3288
        %v3478 = vpop.f32.mrf.mxu0
        %v3479 = vadd.f32 %v3382, %v3478
        %v3480 = vpop.f32.mrf.mxu0
        %v3481 = vadd.f32 %v3382, %v3480
        %3482 = vmatprep.mubr.f32.mxu0 %v3292
        %3483 = vmatmul.mubr.f32.gmra.mxu0 %v3291
        %v3484 = vpop.f32.mrf.mxu0
        %v3485 = vadd.f32 %v3387, %v3484
        %v3486 = vpop.f32.mrf.mxu0
        %v3487 = vadd.f32 %v3387, %v3486
        %3488 = vmatprep.mubr.f32.mxu0 %v3295
        %3489 = vmatmul.mubr.f32.gmra.mxu0 %v3294
        %v3490 = vpop.f32.mrf.mxu0
        %v3491 = vadd.f32 %v3392, %v3490
        %v3492 = vpop.f32.mrf.mxu0
        %v3493 = vadd.f32 %v3392, %v3492
        %3494 = vdwg.mxu0
        %3495 = vmatprep.subr.mxu0 0.0
        %3496 = vmatpush1.msra.mxu0 0.0
        %3497 = vmatprep.subr.mxu0 0.0
        %3498 = vmatpush1.msra.mxu0 0.0
        %3499 = vmatprep.subr.mxu0 0.0
        %3500 = vmatpush1.msra.mxu0 0.0
        %3501 = vmatprep.subr.mxu0 0.0
        %3502 = vmatpush1.msra.mxu0 0.0
        %3503 = vmatprep.subr.mxu0 0.0
        %3504 = vmatpush1.msra.mxu0 0.0
        %3505 = vmatprep.subr.mxu0 0.0
        %3506 = vmatpush1.msra.mxu0 0.0
        %3507 = vmatprep.subr.mxu0 0.0
        %3508 = vmatpush1.msra.mxu0 0.0
        %3509 = vmatprep.subr.mxu0 0.0
        %3510 = vmatpush1.msra.mxu0 0.0
        %3511 = vmatprep.subr.mxu0 0.0
        %3512 = vmatpush1.msra.mxu0 0.0
        %3513 = vmatprep.subr.mxu0 0.0
        %3514 = vmatpush1.msra.mxu0 0.0
        %3515 = vmatprep.subr.mxu0 0.0
        %3516 = vmatpush1.msra.mxu0 0.0
        %3517 = vmatprep.subr.mxu0 0.0
        %3518 = vmatpush1.msra.mxu0 0.0
        %3519 = vmatprep.subr.mxu0 %v3368
        %3520 = vmatpush1.msra.mxu0 %v3367
        %3521 = vmatprep.subr.mxu0 %v3366
        %3522 = vmatpush1.msra.mxu0 %v3365
        %3523 = vmatprep.subr.mxu0 %v3364
        %3524 = vmatpush1.msra.mxu0 %v3363
        %3525 = vmatprep.subr.mxu0 %v3362
        %3526 = vmatpush1.msra.mxu0 %v3361
        %3527 = vmatprep.subr.mxu0 0.0
        %3528 = vmatpush2.msra.mxu0 0.0
        %3529 = vmatprep.subr.mxu0 0.0
        %3530 = vmatpush2.msra.mxu0 0.0
        %3531 = vmatprep.subr.mxu0 0.0
        %3532 = vmatpush2.msra.mxu0 0.0
        %3533 = vmatprep.subr.mxu0 0.0
        %3534 = vmatpush2.msra.mxu0 0.0
        %3535 = vmatprep.subr.mxu0 0.0
        %3536 = vmatpush2.msra.mxu0 0.0
        %3537 = vmatprep.subr.mxu0 0.0
        %3538 = vmatpush2.msra.mxu0 0.0
        %3539 = vmatprep.subr.mxu0 0.0
        %3540 = vmatpush2.msra.mxu0 0.0
        %3541 = vmatprep.subr.mxu0 0.0
        %3542 = vmatpush2.msra.mxu0 0.0
        %3543 = vmatprep.subr.mxu0 0.0
        %3544 = vmatpush2.msra.mxu0 0.0
        %3545 = vmatprep.subr.mxu0 0.0
        %3546 = vmatpush2.msra.mxu0 0.0
        %3547 = vmatprep.subr.mxu0 0.0
        %3548 = vmatpush2.msra.mxu0 0.0
        %3549 = vmatprep.subr.mxu0 0.0
        %3550 = vmatpush2.msra.mxu0 0.0
        %3551 = vmatprep.subr.mxu0 0.0
        %3552 = vmatpush2.msra.mxu0 0.0
        %3553 = vmatprep.subr.mxu0 0.0
        %3554 = vmatpush2.msra.mxu0 0.0
        %3555 = vmatprep.subr.mxu0 0.0
        %3556 = vmatpush2.msra.mxu0 0.0
        %3557 = vmatprep.subr.mxu0 0.0
        %3558 = vmatpush2.msra.mxu0 0.0
        %3559 = vmatprep.mubr.f32.mxu0 0.0
        %3560 = vmatmul.mubr.f32.gmra.mxu0 %v3395
        %v3561 = vpop.f32.mrf.mxu0
        %v3562 = vadd.f32 %v3473, %v3561
        %v3563 = vpop.f32.mrf.mxu0
        %v3564 = vadd.f32 %v3475, %v3563
        %3565 = vmatprep.mubr.f32.mxu0 0.0
        %3566 = vmatmul.mubr.f32.gmra.mxu0 %v3398
        %v3567 = vpop.f32.mrf.mxu0
        %v3568 = vadd.f32 %v3479, %v3567
        %v3569 = vpop.f32.mrf.mxu0
        %v3570 = vadd.f32 %v3481, %v3569
        %3571 = vmatprep.mubr.f32.mxu0 0.0
        %3572 = vmatmul.mubr.f32.gmra.mxu0 %v3401
        %v3573 = vpop.f32.mrf.mxu0
        %v3574 = vadd.f32 %v3485, %v3573
        %v3575 = vpop.f32.mrf.mxu0
        %v3576 = vadd.f32 %v3487, %v3575
        %3577 = vmatprep.mubr.f32.mxu0 0.0
        %3578 = vmatmul.mubr.f32.gmra.mxu0 %v3404
        %v3579 = vpop.f32.mrf.mxu0
        %v3580 = vadd.f32 %v3491, %v3579
        %v3581 = vpop.f32.mrf.mxu0
        %v3582 = vadd.f32 %v3493, %v3581
        %3583 = vdwg.mxu0
        %v3584 = vmax.f32 %v3562, 0.0
        %v3585 = vmax.f32 %v3564, 0.0
        %v3586 = vmax.f32 %v3568, 0.0
        %v3587 = vmax.f32 %v3570, 0.0
        %v3588 = vmax.f32 %v3574, 0.0
        %v3589 = vmax.f32 %v3576, 0.0
        %v3590 = vmax.f32 %v3580, 0.0
        %v3591 = vmax.f32 %v3582, 0.0
        %s3592 = sld [smem:[#allocation4]]
        %s3593 = smul.u32 %s3592, 16
        %s3594 = sld [smem:[#allocation4 + $0x1]]
        %s3595 = sadd.s32 %s3593, %s3594
        %v3596 = vlaneseq
        %v3597 = vand.u32 %v3596, 127
        %v3598 = vadd.s32 %v3597, 128
        %v3599 = vstv %s3595
        %vm3600 = vcmp.eq.s32.totalorder %v3597, %v3599
        %vm3601 = vcmp.eq.s32.totalorder %v3598, %v3599
        %v3602 = vsel %vm3600, 1, 0
        %v3603 = vsel %vm3601, 1, 0
        %v3604 = vcvt.s32.f32 %v3602
        %v3605 = vcvt.s32.f32 %v3603
        %v3606 = vld [vmem:[%s5] sm:$0xff]
        %v3608 = vsel %vm1217, %v3606, 0
        %3610 = vmatprep.subr.mxu0 0.0
        %3611 = vmatpush1.msra.mxu0 0.0
        %3612 = vmatprep.subr.mxu0 0.0
        %3613 = vmatpush1.msra.mxu0 0.0
        %3614 = vmatprep.subr.mxu0 0.0
        %3615 = vmatpush1.msra.mxu0 0.0
        %3616 = vmatprep.subr.mxu0 0.0
        %3617 = vmatpush1.msra.mxu0 0.0
        %3618 = vmatprep.subr.mxu0 0.0
        %3619 = vmatpush1.msra.mxu0 0.0
        %3620 = vmatprep.subr.mxu0 0.0
        %3621 = vmatpush1.msra.mxu0 0.0
        %3622 = vmatprep.subr.mxu0 0.0
        %3623 = vmatpush1.msra.mxu0 0.0
        %3624 = vmatprep.subr.mxu0 0.0
        %3625 = vmatpush1.msra.mxu0 0.0
        %3626 = vmatprep.subr.mxu0 0.0
        %3627 = vmatpush1.msra.mxu0 0.0
        %3628 = vmatprep.subr.mxu0 0.0
        %3629 = vmatpush1.msra.mxu0 0.0
        %3630 = vmatprep.subr.mxu0 0.0
        %3631 = vmatpush1.msra.mxu0 0.0
        %3632 = vmatprep.subr.mxu0 0.0
        %3633 = vmatpush1.msra.mxu0 0.0
        %3634 = vmatprep.subr.mxu0 %v3591
        %3635 = vmatpush1.msra.mxu0 %v3590
        %3636 = vmatprep.subr.mxu0 %v3589
        %3637 = vmatpush1.msra.mxu0 %v3588
        %3638 = vmatprep.subr.mxu0 %v3587
        %3639 = vmatpush1.msra.mxu0 %v3586
        %3640 = vmatprep.subr.mxu0 %v3585
        %3641 = vmatpush1.msra.mxu0 %v3584
        %3642 = vmatprep.subr.mxu0 0.0
        %3643 = vmatpush2.msra.mxu0 0.0
        %3644 = vmatprep.subr.mxu0 0.0
        %3645 = vmatpush2.msra.mxu0 0.0
        %3646 = vmatprep.subr.mxu0 0.0
        %3647 = vmatpush2.msra.mxu0 0.0
        %3648 = vmatprep.subr.mxu0 0.0
        %3649 = vmatpush2.msra.mxu0 0.0
        %3650 = vmatprep.subr.mxu0 0.0
        %3651 = vmatpush2.msra.mxu0 0.0
        %3652 = vmatprep.subr.mxu0 0.0
        %3653 = vmatpush2.msra.mxu0 0.0
        %3654 = vmatprep.subr.mxu0 0.0
        %3655 = vmatpush2.msra.mxu0 0.0
        %3656 = vmatprep.subr.mxu0 0.0
        %3657 = vmatpush2.msra.mxu0 0.0
        %3658 = vmatprep.subr.mxu0 0.0
        %3659 = vmatpush2.msra.mxu0 0.0
        %3660 = vmatprep.subr.mxu0 0.0
        %3661 = vmatpush2.msra.mxu0 0.0
        %3662 = vmatprep.subr.mxu0 0.0
        %3663 = vmatpush2.msra.mxu0 0.0
        %3664 = vmatprep.subr.mxu0 0.0
        %3665 = vmatpush2.msra.mxu0 0.0
        %3666 = vmatprep.subr.mxu0 0.0
        %3667 = vmatpush2.msra.mxu0 0.0
        %3668 = vmatprep.subr.mxu0 0.0
        %3669 = vmatpush2.msra.mxu0 0.0
        %3670 = vmatprep.subr.mxu0 0.0
        %3671 = vmatpush2.msra.mxu0 0.0
        %3672 = vmatprep.subr.mxu0 0.0
        %3673 = vmatpush2.msra.mxu0 0.0
        %3674 = vmatprep.mubr.f32.mxu0 0.0
        %3675 = vmatmul.mubr.f32.gmra.mxu0 %v3608
        %v3676 = vpop.f32.mrf.mxu0
        %v3677 = vadd.f32 0.0, %v3676
        %v3678 = vpop.f32.mrf.mxu0
        %v3679 = vadd.f32 0.0, %v3678
        %3680 = vdwg.mxu0
        %v3681 = vmul.f32 %v3677, %v3604
        %v3682 = vmul.f32 %v3679, %v3605
        %v3683 = vadd.f32 %v3681, %v3682
        %3684 = vadd.xlane.f32.xlu0 %v3683
        %v3685 = vpop.xlane.xlu0 %3684
        %v3686 = vld [vmem:[%s6] sm:$0xff]
        %v3687 = vadd.f32 %v3685, %v3686
        %3688 = vst.msk [vmem:[%s305] sm:$0xff] %vm689, %v3687
        %p3689 = scmp.lt.s32.totalorder %s20, 1
        %s3690 = scalar_select %p3689, %s20, 1
        %s3691 = smul.addr %s3690, 8
        %s3692 = scalar_lea.vmem %s7, %s3691
        // Predicated region
        $region57: #{cnn_solver_policy_forward.1} parent=47 // pred_check
          %p3693 = pneg %p190
        $region58: #{cnn_solver_policy_forward.1} parent=47 // pred_check_branch
          %3695 = sbr.rel (%p3693) target = $region60
        $region59: #{cnn_solver_policy_forward.1} parent=47 // pred_region
          _
        $region60: #{cnn_solver_policy_forward.1} parent=47 // pred_fallthru
          _
      $region48: #{cnn_solver_policy_forward.1} parent=5 // pred_fallthru
        _
      %p3696 = scmp.le.s32.totalorder 2, %s15
      // Predicated region
      $region61: #{cnn_solver_policy_forward.1} parent=5 // pred_check
        %p3697 = pneg %p3696
      $region62: #{cnn_solver_policy_forward.1} parent=5 // pred_check_branch
        %3699 = sbr.rel (%p3697) target = $region64
      $region63: #{cnn_solver_policy_forward.1} parent=5 // pred_region
        %s3700 = ssub.s32 %s15, 2
        // Predicated region
        $region65: #{cnn_solver_policy_forward.1} parent=63 // pred_check
          %p3701 = pneg %p196
        $region66: #{cnn_solver_policy_forward.1} parent=63 // pred_check_branch
          %3703 = sbr.rel (%p3701) target = $region68
        $region67: #{cnn_solver_policy_forward.1} parent=63 // pred_region
          %p3704 = scmp.lt.s32.totalorder %s21, 1
          %s3705 = scalar_select %p3704, %s21, 1
          %s3706 = smul.addr %s3705, 8
          %s3707 = scalar_lea.vmem %s7, %s3706
        $region68: #{cnn_solver_policy_forward.1} parent=63 // pred_fallthru
          _
      $region64: #{cnn_solver_policy_forward.1} parent=5 // pred_fallthru
        _
    $region6: #{cnn_solver_policy_forward.1} parent=1 // loop_footer
      %s19 = sadd.s32 1, %s15
    $region7: #{cnn_solver_policy_forward.1} parent=1 // loop_footer_branch
      %14 = sbr.rel target = $region3
    $region8: #{cnn_solver_policy_forward.1} parent=1 // loop_exit
      _
    %3708 = vsyncpa [#allocation5], 1
    %s3709 = scalar_lea.sflag [#allocation5], 1
    %3710 = vsyncpa %s3709, 1
    %3711 = vsyncpa [#allocation6], 1
    %s3712 = scalar_lea.sflag [#allocation6], 1
    %3713 = vsyncpa %s3712, 1

</llo_original>
